<compile_context>
chip_gen: v5e
topology: v5e:2x2
jax: 0.10.0
libtpu: 0.0.40
codegen_flags: <defaults>
</compile_context>

<pallas_src>
import jax
import jax.numpy as jnp
from jax import lax
from jax.experimental import pallas as pl
from jax.experimental.pallas import tpu as pltpu

PAD_ID = 1  # attention_mask = inputs.ne(1) in the original module


# ---------------------------------------------------------------------------
# Kernel 1: fused embedding-gather + masked mean-pool + pooler (tanh)
#   grid = (N // tn  [parallel],  S // ts  [arbitrary / reduction])
# ---------------------------------------------------------------------------
def encoder_pool_kernel(ids_ref, table_ref, w_ref, b_ref, out_ref,
                        sum_acc, cnt_acc):
    si = pl.program_id(1)

    @pl.when(si == 0)
    def _init():
        sum_acc[...] = jnp.zeros_like(sum_acc)
        cnt_acc[...] = jnp.zeros_like(cnt_acc)

    ids = ids_ref[...]                       # (tn, ts) int32
    tn, ts = ids.shape
    V, H = table_ref.shape

    # Flat one-hot in bf16 (exact for 0/1 values).  PAD masking is already
    # handled by the zeroed table row, so no logical_and here.  The vocab iota
    # is minimal-rank (lane axis only); broadcasting happens in the compare.
    viota = lax.broadcasted_iota(jnp.int32, (1, 1, V), 2)            # (1,1,V)
    onehot = (ids[:, :, None] == viota).astype(table_ref.dtype)      # (tn,ts,V) bf16

    # Fused gather + sequence-chunk sum on the MXU with M = tn*ts rows.
    # Both reshapes are tile-preserving (lane dim unchanged, ts % 16 == 0).
    emb = jnp.dot(onehot.reshape(tn * ts, V), table_ref[...],
                  preferred_element_type=jnp.float32)                # (tn*ts, H)
    sum_acc[...] += jnp.sum(emb.reshape(tn, ts, H), axis=1)          # (tn, H)

    # Non-pad token count for the masked mean (tiny; kept as (tn,1) scratch).
    mask = (ids != PAD_ID).astype(jnp.float32)                       # (tn, ts)
    cnt_acc[...] += jnp.sum(mask, axis=-1, keepdims=True)            # (tn, 1)

    @pl.when(si == pl.num_programs(1) - 1)
    def _finalize():
        denom = jnp.maximum(cnt_acc[...], 1.0)   # guard all-pad rows
        pooled = sum_acc[...] / denom            # masked mean      (tn, H)
        proj = jnp.dot(pooled, w_ref[...],
                       preferred_element_type=jnp.float32) + b_ref[...]
        out_ref[...] = jnp.tanh(proj)


def run_encoder_pool(ids, table, w, b, *, tn=8, ts=128):
    # tn note: on single-TC v5e/v6e a larger tn (fewer, fatter steps) is fine;
    # on dual-TC v7x keep N // tn >= 2 (and a multiple of 2) so the "parallel"
    # grid axis feeds both cores.  tn=8 with N=16 satisfies all three.
    N, S = ids.shape
    V, H = table.shape
    tn = min(tn, N)
    ts = min(ts, S)
    assert N % tn == 0 and S % ts == 0, "demo shapes must tile evenly"
    grid = (N // tn, S // ts)

    # Zero the PAD row once so masking is free inside the kernel
    # (attention_mask = ids.ne(PAD_ID) semantics for the masked sum).
    table = table.at[PAD_ID, :].set(0)

    return pl.pallas_call(
        encoder_pool_kernel,
        out_shape=jax.ShapeDtypeStruct((N, H), jnp.float32),
        grid=grid,
        in_specs=[
            pl.BlockSpec((tn, ts), lambda ni, si: (ni, si)),   # token ids
            pl.BlockSpec((V, H), lambda ni, si: (0, 0)),       # emb table (resident, bf16)
            pl.BlockSpec((H, H), lambda ni, si: (0, 0)),       # pooler W (resident)
            pl.BlockSpec((1, H), lambda ni, si: (0, 0)),       # pooler b (resident)
        ],
        out_specs=pl.BlockSpec((tn, H), lambda ni, si: (ni, 0)),  # lane-dense out
        scratch_shapes=[
            pltpu.VMEM((tn, H), jnp.float32),   # masked-sum accumulator
            pltpu.VMEM((tn, 1), jnp.float32),   # token-count accumulator
        ],
        compiler_params=pltpu.CompilerParams(
            dimension_semantics=("parallel", "arbitrary"),
            # Safe on all gens (== default on v6e/v7x, raises v5e's 16 MiB);
            # re-derive from (tn*ts, V) one-hot + resident table when shapes grow.
            vmem_limit_bytes=32 * 1024 * 1024),
    )(ids, table, w, b)


# ---------------------------------------------------------------------------
# Kernel 2: similarity scores + CrossEntropyLoss(labels = arange(bs))
#   scores[i, j] = <nl[i], code[j]> ;  loss = mean_i(LSE_j scores[i,:] - scores[i,i])
# ---------------------------------------------------------------------------
def score_loss_kernel(nl_ref, code_ref, loss_ref):
    nl = nl_ref[...]                                        # (B, H) f32
    code = code_ref[...]                                    # (B, H) f32
    scores = pl.dot(nl, code, trans_b=True)                 # (B, B), MXU native trans
    B = scores.shape[0]
    # Take the diagonal from `scores` itself so numerator and LSE use the
    # identical (MXU-precision) values.
    ridx = lax.broadcasted_iota(jnp.int32, (B, B), 0)
    cidx = lax.broadcasted_iota(jnp.int32, (B, B), 1)
    diag = jnp.sum(jnp.where(ridx == cidx, scores, 0.0),
                   axis=-1, keepdims=True)                  # (B, 1) = scores[i,i]
    m = jnp.max(scores, axis=-1, keepdims=True)
    lse = m + jnp.log(jnp.sum(jnp.exp(scores - m), axis=-1, keepdims=True))
    loss_ref[0, 0] = jnp.sum(lse - diag) / B


def run_score_loss(nl_vec, code_vec):
    loss = pl.pallas_call(
        score_loss_kernel,
        out_shape=jax.ShapeDtypeStruct((1, 1), jnp.float32),
        in_specs=[
            pl.BlockSpec(memory_space=pltpu.MemorySpace.VMEM),
            pl.BlockSpec(memory_space=pltpu.MemorySpace.VMEM),
        ],
        out_specs=pl.BlockSpec(memory_space=pltpu.MemorySpace.SMEM),
    )(nl_vec, code_vec)
    return loss[0, 0]


# ---------------------------------------------------------------------------
# SearchModel.forward
# ---------------------------------------------------------------------------
def search_model_forward(params, code_inputs, nl_inputs, return_vec=False):
    bs = code_inputs.shape[0]
    inputs = jnp.concatenate([code_inputs, nl_inputs], axis=0)      # (2B, S) int32
    outputs = run_encoder_pool(inputs, params["embedding"],
                               params["w_pool"], params["b_pool"])  # (2B, H)
    code_vec = outputs[:bs]
    nl_vec = outputs[bs:]
    if return_vec:
        return code_vec, nl_vec
    loss = run_score_loss(nl_vec, code_vec)
    return loss, code_vec, nl_vec


# ---------------------------------------------------------------------------
# Pure-JAX reference (same synthetic encoder), for a sanity check.
# ---------------------------------------------------------------------------
def reference_forward(params, code_inputs, nl_inputs):
    bs = code_inputs.shape[0]
    inputs = jnp.concatenate([code_inputs, nl_inputs], axis=0)
    mask = (inputs != PAD_ID).astype(jnp.float32)                   # (2B, S)
    emb = params["embedding"].astype(jnp.float32)[inputs]           # (2B, S, H)
    masked_sum = jnp.einsum("ns,nsh->nh", mask, emb)
    denom = jnp.maximum(mask.sum(-1, keepdims=True), 1.0)
    pooled = masked_sum / denom
    out = jnp.tanh(pooled @ params["w_pool"] + params["b_pool"])
    code_vec, nl_vec = out[:bs], out[bs:]
    scores = nl_vec @ code_vec.T
    lse = jax.scipy.special.logsumexp(scores, axis=-1)
    loss = jnp.mean(lse - jnp.diagonal(scores))
    return loss, code_vec, nl_vec


if __name__ == "__main__":
    # Small but tile-able shapes: 2B=16 rows (2 n-tiles of 8 -> keeps both v7x
    # cores busy), S=256 (2 s-tiles of 128), H=128 (lane-dense, MXU-aligned),
    # vocab V=512.
    B, S, H, V = 8, 256, 128, 512

    key = jax.random.PRNGKey(0)
    k_emb, k_w, k_code, k_nl = jax.random.split(key, 4)

    params = {
        "embedding": (0.02 * jax.random.normal(k_emb, (V, H), jnp.float32)
                      ).astype(jnp.bfloat16),                      # bf16 storage / MXU feed
        "w_pool":    0.02 * jax.random.normal(k_w, (H, H), jnp.float32),
        "b_pool":    jnp.zeros((1, H), jnp.float32),
    }

    code_inputs = jax.random.randint(k_code, (B, S), 0, V).astype(jnp.int32)
    nl_inputs = jax.random.randint(k_nl, (B, S), 0, V).astype(jnp.int32)
    # Introduce pad tokens (id == 1) so attention_mask = inputs.ne(1) is exercised.
    code_inputs = code_inputs.at[1, -37:].set(PAD_ID)
    nl_inputs = nl_inputs.at[0, -19:].set(PAD_ID)

    loss, code_vec, nl_vec = search_model_forward(params, code_inputs, nl_inputs)
    jax.block_until_ready((loss, code_vec, nl_vec))

    assert loss.shape == ()
    assert code_vec.shape == (B, H) and nl_vec.shape == (B, H)

    ref_loss, ref_code, ref_nl = reference_forward(params, code_inputs, nl_inputs)
    assert bool(jnp.isfinite(loss))
    assert bool(jnp.allclose(code_vec, ref_code, atol=5e-2, rtol=5e-2))
    assert bool(jnp.allclose(nl_vec, ref_nl, atol=5e-2, rtol=5e-2))
    assert bool(jnp.allclose(loss, ref_loss, atol=5e-2, rtol=5e-2))

    print("KERNEL_OK")
</pallas_src>

<mosaic_0001>
module attributes {stable_mosaic.version = 11 : i64} {
  func.func @encoder_pool_kernel(%arg0: i32, %arg1: i32, %arg2: memref<8x128xi32, #tpu.memory_space<vmem>>, %arg3: memref<512x128xbf16, #tpu.memory_space<vmem>>, %arg4: memref<128x128xf32, #tpu.memory_space<vmem>>, %arg5: memref<1x128xf32, #tpu.memory_space<vmem>>, %arg6: memref<8x128xf32, #tpu.memory_space<vmem>>, %arg7: memref<8x128xf32, #tpu.memory_space<vmem>>, %arg8: memref<8x1xf32, #tpu.memory_space<vmem>>) attributes {dimension_semantics = [#tpu.dimension_semantics<parallel>, #tpu.dimension_semantics<arbitrary>], iteration_bounds = array<i64: 2, 2>, scalar_prefetch = 0 : i64, scratch_operands = 2 : i64, tpu.core_type = #tpu.core_type<tc>, window_params = [{transform_indices = @transform_0, window_bounds = array<i64: 8, 128>}, {pipeline_mode = #tpu.pipeline_mode<synchronous>, transform_indices = @transform_1, window_bounds = array<i64: 512, 128>}, {pipeline_mode = #tpu.pipeline_mode<synchronous>, transform_indices = @transform_2, window_bounds = array<i64: 128, 128>}, {pipeline_mode = #tpu.pipeline_mode<synchronous>, transform_indices = @transform_3, window_bounds = array<i64: 1, 128>}, {transform_indices = @transform_4, window_bounds = array<i64: 8, 128>}]} {
    %c0_i32 = arith.constant 0 : i32
    %0 = arith.cmpi eq, %arg1, %c0_i32 : i32
    %1 = arith.extui %0 : i1 to i32
    %c0_i32_0 = arith.constant 0 : i32
    %2 = arith.cmpi ne, %1, %c0_i32_0 : i32
    scf.if %2 {
      %cst_16 = arith.constant 0.000000e+00 : f32
      %32 = vector.broadcast %cst_16 : f32 to vector<8x128xf32>
      %c0_17 = arith.constant 0 : index
      %c0_18 = arith.constant 0 : index
      %33 = vector.load %arg7[%c0_17, %c0_18] : memref<8x128xf32, #tpu.memory_space<vmem>>, vector<8x128xf32>
      tpu.vector_store %arg7[%c0_17, %c0_18], %32 {strides = array<i32>} : memref<8x128xf32, #tpu.memory_space<vmem>>, vector<8x128xf32>,
      %cst_19 = arith.constant 0.000000e+00 : f32
      %34 = vector.broadcast %cst_19 : f32 to vector<8x1xf32>
      %c0_20 = arith.constant 0 : index
      %c0_21 = arith.constant 0 : index
      %35 = vector.load %arg8[%c0_20, %c0_21] : memref<8x1xf32, #tpu.memory_space<vmem>>, vector<8x1xf32>
      tpu.vector_store %arg8[%c0_20, %c0_21], %34 {strides = array<i32>} : memref<8x1xf32, #tpu.memory_space<vmem>>, vector<8x1xf32>,
    } else {
    }
    %c0 = arith.constant 0 : index
    %c0_1 = arith.constant 0 : index
    %3 = vector.load %arg2[%c0, %c0_1] : memref<8x128xi32, #tpu.memory_space<vmem>>, vector<8x128xi32>
    %4 = tpu.iota {dimensions = array<i32: 2>} : vector<1x1x512xi32>
    %5 = vector.shape_cast %3 : vector<8x128xi32> to vector<8x128x1xi32>
    %6 = vector.broadcast %5 : vector<8x128x1xi32> to vector<8x128x512xi32>
    %7 = vector.broadcast %4 : vector<1x1x512xi32> to vector<8x128x512xi32>
    %8 = arith.cmpi eq, %6, %7 : vector<8x128x512xi32>
    %9 = arith.extui %8 : vector<8x128x512xi1> to vector<8x128x512xi32>
    %10 = arith.sitofp %9 : vector<8x128x512xi32> to vector<8x128x512xf32>
    %11 = arith.truncf %10 : vector<8x128x512xf32> to vector<8x128x512xbf16>
    %12 = vector.shape_cast %11 : vector<8x128x512xbf16> to vector<1024x512xbf16>
    %c0_2 = arith.constant 0 : index
    %c0_3 = arith.constant 0 : index
    %13 = vector.load %arg3[%c0_2, %c0_3] : memref<512x128xbf16, #tpu.memory_space<vmem>>, vector<512x128xbf16>
    %cst = arith.constant dense<0.000000e+00> : vector<1024x128xf32>
    %14 = tpu.matmul %12, %13, %cst {dimension_numbers = #tpu.dot_dimension_numbers<[1], [0], [0], [1], [0, 0, 1, 1], [], []>} : vector<1024x512xbf16>, vector<512x128xbf16>, vector<1024x128xf32> -> vector<1024x128xf32>
    %c0_4 = arith.constant 0 : index
    %c0_5 = arith.constant 0 : index
    %15 = vector.load %arg7[%c0_4, %c0_5] : memref<8x128xf32, #tpu.memory_space<vmem>>, vector<8x128xf32>
    %16 = vector.shape_cast %14 : vector<1024x128xf32> to vector<8x128x128xf32>
    %cst_6 = arith.constant dense<0.000000e+00> : vector<8x128xf32>
    %17 = vector.multi_reduction <add>, %16, %cst_6 [1] : vector<8x128x128xf32> to vector<8x128xf32>
    %18 = arith.addf %15, %17 : vector<8x128xf32>
    %c0_7 = arith.constant 0 : index
    %c0_8 = arith.constant 0 : index
    %19 = vector.load %arg7[%c0_7, %c0_8] : memref<8x128xf32, #tpu.memory_space<vmem>>, vector<8x128xf32>
    tpu.vector_store %arg7[%c0_7, %c0_8], %18 {strides = array<i32>} : memref<8x128xf32, #tpu.memory_space<vmem>>, vector<8x128xf32>,
    %c1_i32 = arith.constant 1 : i32
    %20 = vector.broadcast %c1_i32 : i32 to vector<8x128xi32>
    %21 = arith.cmpi ne, %3, %20 : vector<8x128xi32>
    %22 = arith.extui %21 : vector<8x128xi1> to vector<8x128xi32>
    %23 = arith.sitofp %22 : vector<8x128xi32> to vector<8x128xf32>
    %c0_9 = arith.constant 0 : index
    %c0_10 = arith.constant 0 : index
    %24 = vector.load %arg8[%c0_9, %c0_10] : memref<8x1xf32, #tpu.memory_space<vmem>>, vector<8x1xf32>
    %cst_11 = arith.constant dense<0.000000e+00> : vector<8xf32>
    %25 = vector.multi_reduction <add>, %23, %cst_11 [1] : vector<8x128xf32> to vector<8xf32>
    %26 = vector.shape_cast %25 : vector<8xf32> to vector<8x1xf32>
    %27 = arith.addf %24, %26 : vector<8x1xf32>
    %c0_12 = arith.constant 0 : index
    %c0_13 = arith.constant 0 : index
    %28 = vector.load %arg8[%c0_12, %c0_13] : memref<8x1xf32, #tpu.memory_space<vmem>>, vector<8x1xf32>
    tpu.vector_store %arg8[%c0_12, %c0_13], %27 {strides = array<i32>} : memref<8x1xf32, #tpu.memory_space<vmem>>, vector<8x1xf32>,
    %c1_i32_14 = arith.constant 1 : i32
    %29 = arith.cmpi eq, %arg1, %c1_i32_14 : i32
    %30 = arith.extui %29 : i1 to i32
    %c0_i32_15 = arith.constant 0 : i32
    %31 = arith.cmpi ne, %30, %c0_i32_15 : i32
    scf.if %31 {
      %c0_16 = arith.constant 0 : index
      %c0_17 = arith.constant 0 : index
      %32 = vector.load %arg8[%c0_16, %c0_17] : memref<8x1xf32, #tpu.memory_space<vmem>>, vector<8x1xf32>
      %cst_18 = arith.constant 1.000000e+00 : f32
      %33 = vector.broadcast %cst_18 : f32 to vector<8x1xf32>
      %34 = arith.maximumf %32, %33 : vector<8x1xf32>
      %c0_19 = arith.constant 0 : index
      %c0_20 = arith.constant 0 : index
      %35 = vector.load %arg7[%c0_19, %c0_20] : memref<8x128xf32, #tpu.memory_space<vmem>>, vector<8x128xf32>
      %36 = vector.broadcast %34 : vector<8x1xf32> to vector<8x128xf32>
      %37 = arith.divf %35, %36 : vector<8x128xf32>
      %c0_21 = arith.constant 0 : index
      %c0_22 = arith.constant 0 : index
      %38 = vector.load %arg4[%c0_21, %c0_22] : memref<128x128xf32, #tpu.memory_space<vmem>>, vector<128x128xf32>
      %cst_23 = arith.constant dense<0.000000e+00> : vector<8x128xf32>
      %39 = tpu.matmul %37, %38, %cst_23 {dimension_numbers = #tpu.dot_dimension_numbers<[1], [0], [0], [1], [0, 0, 1, 1], [], []>} : vector<8x128xf32>, vector<128x128xf32>, vector<8x128xf32> -> vector<8x128xf32>
      %c0_24 = arith.constant 0 : index
      %c0_25 = arith.constant 0 : index
      %40 = vector.load %arg5[%c0_24, %c0_25] : memref<1x128xf32, #tpu.memory_space<vmem>>, vector<1x128xf32>
      %41 = vector.broadcast %40 : vector<1x128xf32> to vector<8x128xf32>
      %42 = arith.addf %39, %41 : vector<8x128xf32>
      %43 = math.tanh %42 : vector<8x128xf32>
      %c0_26 = arith.constant 0 : index
      %c0_27 = arith.constant 0 : index
      %44 = vector.load %arg6[%c0_26, %c0_27] : memref<8x128xf32, #tpu.memory_space<vmem>>, vector<8x128xf32>
      tpu.vector_store %arg6[%c0_26, %c0_27], %43 {strides = array<i32>} : memref<8x128xf32, #tpu.memory_space<vmem>>, vector<8x128xf32>,
    } else {
    }
    return
  }
  func.func @transform_0(%arg0: i32, %arg1: i32) -> (i32, i32) {
    %c0_i32 = arith.constant 0 : i32
    return %arg0, %arg1 : i32, i32
  }
  func.func @transform_1(%arg0: i32, %arg1: i32) -> (i32, i32) {
    %c0_i32 = arith.constant 0 : i32
    %c0_i32_0 = arith.constant 0 : i32
    %c0_i32_1 = arith.constant 0 : i32
    return %c0_i32, %c0_i32_0 : i32, i32
  }
  func.func @transform_2(%arg0: i32, %arg1: i32) -> (i32, i32) {
    %c0_i32 = arith.constant 0 : i32
    %c0_i32_0 = arith.constant 0 : i32
    %c0_i32_1 = arith.constant 0 : i32
    return %c0_i32, %c0_i32_0 : i32, i32
  }
  func.func @transform_3(%arg0: i32, %arg1: i32) -> (i32, i32) {
    %c0_i32 = arith.constant 0 : i32
    %c0_i32_0 = arith.constant 0 : i32
    %c0_i32_1 = arith.constant 0 : i32
    return %c0_i32, %c0_i32_0 : i32, i32
  }
  func.func @transform_4(%arg0: i32, %arg1: i32) -> (i32, i32) {
    %c0_i32 = arith.constant 0 : i32
    %c0_i32_0 = arith.constant 0 : i32
    return %arg0, %c0_i32 : i32, i32
  }
}

</mosaic_0001>

<llo_original>
// kernel: tpu_custom_call.1
$region0: #{tpu_custom_call.1}
  #allocation0 [shape = 'u32[]', space=smem, size = 0x4, offset = 0x4, fixed_abs, tag = 'smem constant byte address 0x4 - core index']
  #allocation1 [shape = 'u32[72,128]{1,0:T(1,128)}', space=vmem, size = 0x9000, scoped, tag = 'internal scratch']
  #allocation2 [shape = 'f32[8,128]{1,0:T(8,128)}', space=vmem, size = 0x1000, scoped, tag = 'scratch operand']
  #allocation3 [shape = 'f32[8,1]{1,0:T(8,128)}', space=vmem, size = 0x1000, scoped, tag = 'scratch operand']
  %s0 = inlined_call_operand.hbm [shape: s32[16,256], index: 0, kind: input, shape index: {}]
  %s1 = inlined_call_operand.hbm [shape: bf16[512,128], index: 1, kind: input, shape index: {}]
  %s2 = inlined_call_operand.hbm [shape: f32[128,128], index: 2, kind: input, shape index: {}]
  %s3 = inlined_call_operand.vmem [shape: f32[1,128], index: 3, kind: input, shape index: {}]
  %s4 = inlined_call_operand.hbm [shape: f32[16,128], index: 4, kind: output, shape index: {}]
  %s5 = sld [smem:[#allocation0]]
  $region69: #{tpu_custom_call.1} parent=0
    _
  %s7 = ssub.s32 1, %s5
  %s8 = scalar_select 0, %s7, %s5
  $region1: #{tpu_custom_call.1} parent=0
    #allocation4 [shape = 'u8[8192]{0}', space=vmem, size = 0x2000, scoped, tag = 'input window, operand 0']
    #allocation5 [shape = 's32[2]{0}', space=sflag, size = 0x8, scoped, tag = 'scoped memory for tpu_custom_call.1']
    #allocation6 [shape = 's32[2]{0}', space=sflag, size = 0x8, scoped, tag = 'scoped memory for tpu_custom_call.1']
    #allocation7 [shape = 'u8[131072]{0}', space=vmem, size = 0x20000, scoped, tag = 'input window, operand 1, single buffered']
    #allocation8 [shape = 's32[1]{0}', space=sflag, size = 0x4, scoped, tag = 'scoped memory for tpu_custom_call.1']
    #allocation9 [shape = 'u8[65536]{0}', space=vmem, size = 0x10000, scoped, tag = 'input window, operand 2, single buffered']
    #allocation10 [shape = 'u8[8192]{0}', space=vmem, size = 0x2000, scoped, tag = 'output window, operand 0']
    %9 = vsyncpa [#allocation5], 0
    %s10 = scalar_lea.sflag [#allocation5], 1
    %11 = vsyncpa %s10, 0
    %12 = vsyncpa [#allocation8], 0
    %13 = vsyncpa [#allocation6], 0
    %s14 = scalar_lea.sflag [#allocation6], 1
    %15 = vsyncpa %s14, 0
    loop: start=0, step=1, limit=6
    $region2: #{tpu_custom_call.1} parent=1 // loop_pre_header
      _
    $region3: #{tpu_custom_call.1} parent=1 // loop_header
      %s17 = sphi 0, %s21
      %p18 = scmp.ge.s32.totalorder %s17, 6
      %s24 = sphi 0, %s36
      %s25 = sphi 0, %s32
      %s26 = sphi 0, %s24
      %s27 = sphi 0, %s25
      %s28 = sphi 0, %s26
      %s29 = sphi 0, %s27
      %s41 = sphi 0, %s43
      %s44 = sphi 0, %s41
      %s45 = sphi 0, %s44
      %s61 = sphi 0, %s45
      %s65 = sphi 0, %s65
      %s67 = sphi 0, %s65
      %s68 = sphi 0, %s67
      %s82 = sphi 0, %s68
      %s86 = sphi 0, %s86
      %s88 = sphi 0, %s86
      %s89 = sphi 0, %s88
      %s103 = sphi 0, %s89
      %s107 = sphi 0, %s107
      %s109 = sphi 0, %s107
      %s110 = sphi 0, %s109
      %s124 = sphi 0, %s110
      %s130 = sphi 0, %s132
      %s133 = sphi 0, %s130
      %s134 = sphi 0, %s133
      %s150 = sphi 0, %s134
    $region4: #{tpu_custom_call.1} parent=1 // loop_header_branch
      %20 = sbr.rel (%p18) target = $region8
    $region5: #{tpu_custom_call.1} parent=1 // loop_body
      %s22 = ssub.s32 %s17, 1
      %s23 = ssub.s32 %s17, 2
      %s30 = sadd.s32 1, %s25
      %p31 = scmp.ge.s32.totalorder %s30, 2
      %s32 = scalar_select %p31, 0, %s30
      %s33 = sadd.s32 1, %s24
      %s34 = scalar_select %p31, %s33, %s24
      %p35 = scmp.ge.s32.totalorder %s34, 2
      %s36 = scalar_select %p35, 0, %s34
      %s37 = ssub.s32 %s24, %s36
      %s38 = ssub.s32 %s25, %s32
      %s39 = sor.u32 %s37, %s38
      %p40 = scmp.eq.s32.totalorder %s39, 0
      %s42 = sadd.s32 %s41, 1
      %s43 = scalar_select %p40, %s41, %s42
      %p46 = pneg %p40
      %p47 = scmp.eq.s32.totalorder %s17, 3
      %p48 = por %p46, %p47
      %p49 = scmp.ne.s32.totalorder %s41, %s44
      %p50 = scmp.eq.s32.totalorder %s17, 0
      %p51 = por %p49, %p50
      %p52 = scmp.ne.s32.totalorder %s41, %s44
      %p53 = scmp.eq.s32.totalorder %s22, 3
      %p54 = por %p52, %p53
      %p55 = scmp.ne.s32.totalorder %s44, %s45
      %p56 = scmp.eq.s32.totalorder %s22, 0
      %p57 = por %p55, %p56
      %p58 = scmp.ne.s32.totalorder %s44, %s45
      %p59 = scmp.eq.s32.totalorder %s23, 3
      %p60 = por %p58, %p59
      %p62 = scmp.ne.s32.totalorder %s45, %s61
      %p63 = scmp.eq.s32.totalorder %s23, 0
      %p64 = por %p62, %p63
      %s66 = sadd.s32 %s65, 1
      %p69 = scmp.eq.s32.totalorder %s17, 3
      %p70 = scmp.ne.s32.totalorder %s65, %s67
      %p71 = scmp.eq.s32.totalorder %s17, 0
      %p72 = por %p70, %p71
      %p73 = scmp.ne.s32.totalorder %s65, %s67
      %p74 = scmp.eq.s32.totalorder %s22, 3
      %p75 = por %p73, %p74
      %p76 = scmp.ne.s32.totalorder %s67, %s68
      %p77 = scmp.eq.s32.totalorder %s22, 0
      %p78 = por %p76, %p77
      %p79 = scmp.ne.s32.totalorder %s67, %s68
      %p80 = scmp.eq.s32.totalorder %s23, 3
      %p81 = por %p79, %p80
      %p83 = scmp.ne.s32.totalorder %s68, %s82
      %p84 = scmp.eq.s32.totalorder %s23, 0
      %p85 = por %p83, %p84
      %s87 = sadd.s32 %s86, 1
      %p90 = scmp.eq.s32.totalorder %s17, 3
      %p91 = scmp.ne.s32.totalorder %s86, %s88
      %p92 = scmp.eq.s32.totalorder %s17, 0
      %p93 = por %p91, %p92
      %p94 = scmp.ne.s32.totalorder %s86, %s88
      %p95 = scmp.eq.s32.totalorder %s22, 3
      %p96 = por %p94, %p95
      %p97 = scmp.ne.s32.totalorder %s88, %s89
      %p98 = scmp.eq.s32.totalorder %s22, 0
      %p99 = por %p97, %p98
      %p100 = scmp.ne.s32.totalorder %s88, %s89
      %p101 = scmp.eq.s32.totalorder %s23, 3
      %p102 = por %p100, %p101
      %p104 = scmp.ne.s32.totalorder %s89, %s103
      %p105 = scmp.eq.s32.totalorder %s23, 0
      %p106 = por %p104, %p105
      %s108 = sadd.s32 %s107, 1
      %p111 = scmp.eq.s32.totalorder %s17, 3
      %p112 = scmp.ne.s32.totalorder %s107, %s109
      %p113 = scmp.eq.s32.totalorder %s17, 0
      %p114 = por %p112, %p113
      %p115 = scmp.ne.s32.totalorder %s107, %s109
      %p116 = scmp.eq.s32.totalorder %s22, 3
      %p117 = por %p115, %p116
      %p118 = scmp.ne.s32.totalorder %s109, %s110
      %p119 = scmp.eq.s32.totalorder %s22, 0
      %p120 = por %p118, %p119
      %p121 = scmp.ne.s32.totalorder %s109, %s110
      %p122 = scmp.eq.s32.totalorder %s23, 3
      %p123 = por %p121, %p122
      %p125 = scmp.ne.s32.totalorder %s110, %s124
      %p126 = scmp.eq.s32.totalorder %s23, 0
      %p127 = por %p125, %p126
      %s128 = ssub.s32 %s24, %s36
      %p129 = scmp.eq.s32.totalorder %s128, 0
      %s131 = sadd.s32 %s130, 1
      %s132 = scalar_select %p129, %s130, %s131
      %p135 = pneg %p129
      %p136 = scmp.eq.s32.totalorder %s17, 3
      %p137 = por %p135, %p136
      %p138 = scmp.ne.s32.totalorder %s130, %s133
      %p139 = scmp.eq.s32.totalorder %s17, 0
      %p140 = por %p138, %p139
      %p141 = scmp.ne.s32.totalorder %s130, %s133
      %p142 = scmp.eq.s32.totalorder %s22, 3
      %p143 = por %p141, %p142
      %p144 = scmp.ne.s32.totalorder %s133, %s134
      %p145 = scmp.eq.s32.totalorder %s22, 0
      %p146 = por %p144, %p145
      %p147 = scmp.ne.s32.totalorder %s133, %s134
      %p148 = scmp.eq.s32.totalorder %s23, 3
      %p149 = por %p147, %p148
      %p151 = scmp.ne.s32.totalorder %s134, %s150
      %p152 = scmp.eq.s32.totalorder %s23, 0
      %p153 = por %p151, %p152
      %p154 = scmp.le.s32.totalorder 1, %s17
      %p155 = scmp.lt.s32.totalorder %s17, 5
      %p156 = pnand %p154, %p155
      %p157 = pneg %p156
      // Predicated region
      $region9: #{tpu_custom_call.1} parent=5 // pred_check
        _
      $region10: #{tpu_custom_call.1} parent=5 // pred_check_branch
        %159 = sbr.rel (%p156) target = $region12
      $region11: #{tpu_custom_call.1} parent=5 // pred_region
        %s160 = ssub.s32 %s17, 1
        // Predicated region
        $region13: #{tpu_custom_call.1} parent=11 // pred_check
          %p161 = pneg %p78
        $region14: #{tpu_custom_call.1} parent=11 // pred_check_branch
          %163 = sbr.rel (%p161) target = $region16
        $region15: #{tpu_custom_call.1} parent=11 // pred_region
          %165 = vsyncadd [#allocation8], 0
          %s166 = sshll.u32 %s1, 4
          %s167 = int_to_ptr.hbm [resolvable:$true] %s166
          %s168 = sshll.u32 [#allocation7], 4
          %s169 = int_to_ptr.vmem [resolvable:$true] %s168
          %174 = dma.hbm_to_vmem [thread:$0]  %s167, 4096, %s169, [#allocation8], 64, 64, 4
        $region16: #{tpu_custom_call.1} parent=11 // pred_fallthru
          _
        // Predicated region
        $region17: #{tpu_custom_call.1} parent=11 // pred_check
          %p175 = pneg %p99
        $region18: #{tpu_custom_call.1} parent=11 // pred_check_branch
          %177 = sbr.rel (%p175) target = $region20
        $region19: #{tpu_custom_call.1} parent=11 // pred_region
          %179 = vsyncadd [#allocation8], 0
          %s180 = sshll.u32 %s2, 4
          %s181 = int_to_ptr.hbm [resolvable:$true] %s180
          %s182 = sshll.u32 [#allocation9], 4
          %s183 = int_to_ptr.vmem [resolvable:$true] %s182
          %188 = dma.hbm_to_vmem [thread:$0]  %s181, 2048, %s183, [#allocation8], 128, 128, 8
        $region20: #{tpu_custom_call.1} parent=11 // pred_fallthru
          _
        // Predicated region
        $region21: #{tpu_custom_call.1} parent=11 // pred_check
          %p189 = pneg %p120
        $region22: #{tpu_custom_call.1} parent=11 // pred_check_branch
          %191 = sbr.rel (%p189) target = $region24
        $region23: #{tpu_custom_call.1} parent=11 // pred_region
          _
        $region24: #{tpu_custom_call.1} parent=11 // pred_fallthru
          _
      $region12: #{tpu_custom_call.1} parent=5 // pred_fallthru
        _
      %p192 = scmp.lt.s32.totalorder %s17, 4
      // Predicated region
      $region25: #{tpu_custom_call.1} parent=5 // pred_check
        %p193 = pneg %p192
      $region26: #{tpu_custom_call.1} parent=5 // pred_check_branch
        %195 = sbr.rel (%p193) target = $region28
      $region27: #{tpu_custom_call.1} parent=5 // pred_region
        // Predicated region
        $region29: #{tpu_custom_call.1} parent=27 // pred_check
          %p196 = pneg %p51
        $region30: #{tpu_custom_call.1} parent=27 // pred_check_branch
          %198 = sbr.rel (%p196) target = $region32
        $region31: #{tpu_custom_call.1} parent=27 // pred_region
          %s199 = sand.u32 %s41, 1
          %s200 = scalar_lea.sflag [#allocation5], %s199
          %s201 = sand.u32 %s41, 1
          %s202 = smul.addr %s201, 8
          %s203 = scalar_lea.vmem [#allocation4], %s202
          %205 = vsyncadd %s200, 0
          %s206 = smul.addr %s24, 2
          %s207 = sadd.s32 %s25, %s206
          %s208 = smul.addr %s207, 8
          %s209 = scalar_lea.hbm %s0, %s208
          %s211 = sshll.u32 %s209, 4
          %s212 = int_to_ptr.hbm [resolvable:$true] %s211
          %s213 = sshll.u32 %s203, 4
          %s214 = int_to_ptr.vmem [resolvable:$true] %s213
          %216 = dma.hbm_to_vmem [thread:$0]  %s212, 128, %s214, %s200
        $region32: #{tpu_custom_call.1} parent=27 // pred_fallthru
          _
      $region28: #{tpu_custom_call.1} parent=5 // pred_fallthru
        _
      %p217 = scmp.le.s32.totalorder 1, %s17
      %p218 = scmp.lt.s32.totalorder %s17, 5
      %p219 = pnand %p217, %p218
      %p220 = pneg %p219
      // Predicated region
      $region33: #{tpu_custom_call.1} parent=5 // pred_check
        _
      $region34: #{tpu_custom_call.1} parent=5 // pred_check_branch
        %222 = sbr.rel (%p219) target = $region36
      $region35: #{tpu_custom_call.1} parent=5 // pred_region
        %s223 = ssub.s32 %s17, 1
        %s224 = sand.u32 %s44, 1
        %s225 = scalar_lea.sflag [#allocation5], %s224
        %s226 = sand.u32 %s44, 1
        %s227 = smul.addr %s226, 8
        %s228 = scalar_lea.vmem [#allocation4], %s227
        // Predicated region
        $region37: #{tpu_custom_call.1} parent=35 // pred_check
          %p229 = pneg %p57
        $region38: #{tpu_custom_call.1} parent=35 // pred_check_branch
          %231 = sbr.rel (%p229) target = $region40
        $region39: #{tpu_custom_call.1} parent=35 // pred_region
          %233 = dma.done %s225, 128
        $region40: #{tpu_custom_call.1} parent=35 // pred_fallthru
          _
        // Predicated region
        $region41: #{tpu_custom_call.1} parent=35 // pred_check
          %p234 = pneg %p78
        $region42: #{tpu_custom_call.1} parent=35 // pred_check_branch
          %236 = sbr.rel (%p234) target = $region44
        $region43: #{tpu_custom_call.1} parent=35 // pred_region
          %238 = dma.done [#allocation8], 4096
        $region44: #{tpu_custom_call.1} parent=35 // pred_fallthru
          _
        // Predicated region
        $region45: #{tpu_custom_call.1} parent=35 // pred_check
          %p239 = pneg %p99
        $region46: #{tpu_custom_call.1} parent=35 // pred_check_branch
          %241 = sbr.rel (%p239) target = $region48
        $region47: #{tpu_custom_call.1} parent=35 // pred_region
          %243 = dma.done [#allocation8], 2048
        $region48: #{tpu_custom_call.1} parent=35 // pred_fallthru
          _
        %s244 = sand.u32 %s44, 1
        %s245 = scalar_lea.sflag [#allocation5], %s244
        %s246 = sand.u32 %s44, 1
        %s247 = smul.addr %s246, 8
        %s248 = scalar_lea.vmem [#allocation4], %s247
        %p249 = pneg %p57
        %p250 = pneg %p54
        %p251 = pneg %p78
        %p252 = pneg %p75
        %p253 = pneg %p99
        %p254 = pneg %p96
        %p255 = pneg %p120
        %p256 = pneg %p117
        %p257 = pneg %p146
        %p258 = pneg %p143
        %s259 = sand.u32 %s133, 1
        %s260 = scalar_lea.sflag [#allocation6], %s259
        %s261 = sand.u32 %s133, 1
        %s262 = smul.addr %s261, 8
        %s263 = scalar_lea.vmem [#allocation10], %s262
        %p264 = scmp.eq.s32.totalorder %s27, 0
        // Predicated region
        $region49: #{tpu_custom_call.1} parent=35 // pred_check
          %p265 = pneg %p264
        $region50: #{tpu_custom_call.1} parent=35 // pred_check_branch
          %267 = sbr.rel (%p265) target = $region52
        $region51: #{tpu_custom_call.1} parent=35 // pred_region
          %268 = vst [vmem:[#allocation2] sm:$0xff] 0.0
          %vm269 = vcmask 7168
          %270 = vst.msk [vmem:[#allocation3] sm:$0xff] %vm269, 0.0
        $region52: #{tpu_custom_call.1} parent=35 // pred_fallthru
          _
        %v271 = vld [vmem:[%s228] sm:$0xff]
        %v272 = vlaneseq
        %v273 = vand.u32 %v272, 127
        %v274 = vadd.s32 %v273, 128
        %v275 = vadd.s32 %v273, 256
        %v276 = vadd.s32 %v273, 384
        %v277 = vperm.slane %v271, 0
        %v278 = vlaneseq
        %v279 = vshrl.u32 %v278, 7
        %281 = vset.pattern.permute.xlu0 %v279
        %282 = vperm.xlu0 %281, %v277
        %v283 = vpop.permute.xlu0 %282
        %v284 = vlaneseq
        %v285 = vshrl.u32 %v284, 7
        %v286 = vadd.s32 %v285, 8
        %287 = vset.pattern.permute.xlu0 %v286
        %288 = vperm.xlu0 %287, %v277
        %v289 = vpop.permute.xlu0 %288
        %v290 = vlaneseq
        %v291 = vshrl.u32 %v290, 7
        %v292 = vadd.s32 %v291, 16
        %293 = vset.pattern.permute.xlu0 %v292
        %294 = vperm.xlu0 %293, %v277
        %v295 = vpop.permute.xlu0 %294
        %v296 = vlaneseq
        %v297 = vshrl.u32 %v296, 7
        %v298 = vadd.s32 %v297, 24
        %299 = vset.pattern.permute.xlu0 %v298
        %300 = vperm.xlu0 %299, %v277
        %v301 = vpop.permute.xlu0 %300
        %v302 = vlaneseq
        %v303 = vshrl.u32 %v302, 7
        %v304 = vadd.s32 %v303, 32
        %305 = vset.pattern.permute.xlu0 %v304
        %306 = vperm.xlu0 %305, %v277
        %v307 = vpop.permute.xlu0 %306
        %v308 = vlaneseq
        %v309 = vshrl.u32 %v308, 7
        %v310 = vadd.s32 %v309, 40
        %311 = vset.pattern.permute.xlu0 %v310
        %312 = vperm.xlu0 %311, %v277
        %v313 = vpop.permute.xlu0 %312
        %v314 = vlaneseq
        %v315 = vshrl.u32 %v314, 7
        %v316 = vadd.s32 %v315, 48
        %317 = vset.pattern.permute.xlu0 %v316
        %318 = vperm.xlu0 %317, %v277
        %v319 = vpop.permute.xlu0 %318
        %v320 = vlaneseq
        %v321 = vshrl.u32 %v320, 7
        %v322 = vadd.s32 %v321, 56
        %323 = vset.pattern.permute.xlu0 %v322
        %324 = vperm.xlu0 %323, %v277
        %v325 = vpop.permute.xlu0 %324
        %v326 = vlaneseq
        %v327 = vshrl.u32 %v326, 7
        %v328 = vadd.s32 %v327, 64
        %329 = vset.pattern.permute.xlu0 %v328
        %330 = vperm.xlu0 %329, %v277
        %v331 = vpop.permute.xlu0 %330
        %v332 = vlaneseq
        %v333 = vshrl.u32 %v332, 7
        %v334 = vadd.s32 %v333, 72
        %335 = vset.pattern.permute.xlu0 %v334
        %336 = vperm.xlu0 %335, %v277
        %v337 = vpop.permute.xlu0 %336
        %v338 = vlaneseq
        %v339 = vshrl.u32 %v338, 7
        %v340 = vadd.s32 %v339, 80
        %341 = vset.pattern.permute.xlu0 %v340
        %342 = vperm.xlu0 %341, %v277
        %v343 = vpop.permute.xlu0 %342
        %v344 = vlaneseq
        %v345 = vshrl.u32 %v344, 7
        %v346 = vadd.s32 %v345, 88
        %347 = vset.pattern.permute.xlu0 %v346
        %348 = vperm.xlu0 %347, %v277
        %v349 = vpop.permute.xlu0 %348
        %v350 = vlaneseq
        %v351 = vshrl.u32 %v350, 7
        %v352 = vadd.s32 %v351, 96
        %353 = vset.pattern.permute.xlu0 %v352
        %354 = vperm.xlu0 %353, %v277
        %v355 = vpop.permute.xlu0 %354
        %v356 = vlaneseq
        %v357 = vshrl.u32 %v356, 7
        %v358 = vadd.s32 %v357, 104
        %359 = vset.pattern.permute.xlu0 %v358
        %360 = vperm.xlu0 %359, %v277
        %v361 = vpop.permute.xlu0 %360
        %v362 = vlaneseq
        %v363 = vshrl.u32 %v362, 7
        %v364 = vadd.s32 %v363, 112
        %365 = vset.pattern.permute.xlu0 %v364
        %366 = vperm.xlu0 %365, %v277
        %v367 = vpop.permute.xlu0 %366
        %v368 = vlaneseq
        %v369 = vshrl.u32 %v368, 7
        %v370 = vadd.s32 %v369, 120
        %371 = vset.pattern.permute.xlu0 %v370
        %372 = vperm.xlu0 %371, %v277
        %v373 = vpop.permute.xlu0 %372
        %v374 = vperm.slane %v271, 1
        %v375 = vlaneseq
        %v376 = vshrl.u32 %v375, 7
        %378 = vset.pattern.permute.xlu0 %v376
        %379 = vperm.xlu0 %378, %v374
        %v380 = vpop.permute.xlu0 %379
        %v381 = vlaneseq
        %v382 = vshrl.u32 %v381, 7
        %v383 = vadd.s32 %v382, 8
        %384 = vset.pattern.permute.xlu0 %v383
        %385 = vperm.xlu0 %384, %v374
        %v386 = vpop.permute.xlu0 %385
        %v387 = vlaneseq
        %v388 = vshrl.u32 %v387, 7
        %v389 = vadd.s32 %v388, 16
        %390 = vset.pattern.permute.xlu0 %v389
        %391 = vperm.xlu0 %390, %v374
        %v392 = vpop.permute.xlu0 %391
        %v393 = vlaneseq
        %v394 = vshrl.u32 %v393, 7
        %v395 = vadd.s32 %v394, 24
        %396 = vset.pattern.permute.xlu0 %v395
        %397 = vperm.xlu0 %396, %v374
        %v398 = vpop.permute.xlu0 %397
        %v399 = vlaneseq
        %v400 = vshrl.u32 %v399, 7
        %v401 = vadd.s32 %v400, 32
        %402 = vset.pattern.permute.xlu0 %v401
        %403 = vperm.xlu0 %402, %v374
        %v404 = vpop.permute.xlu0 %403
        %v405 = vlaneseq
        %v406 = vshrl.u32 %v405, 7
        %v407 = vadd.s32 %v406, 40
        %408 = vset.pattern.permute.xlu0 %v407
        %409 = vperm.xlu0 %408, %v374
        %v410 = vpop.permute.xlu0 %409
        %v411 = vlaneseq
        %v412 = vshrl.u32 %v411, 7
        %v413 = vadd.s32 %v412, 48
        %414 = vset.pattern.permute.xlu0 %v413
        %415 = vperm.xlu0 %414, %v374
        %v416 = vpop.permute.xlu0 %415
        %v417 = vlaneseq
        %v418 = vshrl.u32 %v417, 7
        %v419 = vadd.s32 %v418, 56
        %420 = vset.pattern.permute.xlu0 %v419
        %421 = vperm.xlu0 %420, %v374
        %v422 = vpop.permute.xlu0 %421
        %v423 = vlaneseq
        %v424 = vshrl.u32 %v423, 7
        %v425 = vadd.s32 %v424, 64
        %426 = vset.pattern.permute.xlu0 %v425
        %427 = vperm.xlu0 %426, %v374
        %v428 = vpop.permute.xlu0 %427
        %v429 = vlaneseq
        %v430 = vshrl.u32 %v429, 7
        %v431 = vadd.s32 %v430, 72
        %432 = vset.pattern.permute.xlu0 %v431
        %433 = vperm.xlu0 %432, %v374
        %v434 = vpop.permute.xlu0 %433
        %v435 = vlaneseq
        %v436 = vshrl.u32 %v435, 7
        %v437 = vadd.s32 %v436, 80
        %438 = vset.pattern.permute.xlu0 %v437
        %439 = vperm.xlu0 %438, %v374
        %v440 = vpop.permute.xlu0 %439
        %v441 = vlaneseq
        %v442 = vshrl.u32 %v441, 7
        %v443 = vadd.s32 %v442, 88
        %444 = vset.pattern.permute.xlu0 %v443
        %445 = vperm.xlu0 %444, %v374
        %v446 = vpop.permute.xlu0 %445
        %v447 = vlaneseq
        %v448 = vshrl.u32 %v447, 7
        %v449 = vadd.s32 %v448, 96
        %450 = vset.pattern.permute.xlu0 %v449
        %451 = vperm.xlu0 %450, %v374
        %v452 = vpop.permute.xlu0 %451
        %v453 = vlaneseq
        %v454 = vshrl.u32 %v453, 7
        %v455 = vadd.s32 %v454, 104
        %456 = vset.pattern.permute.xlu0 %v455
        %457 = vperm.xlu0 %456, %v374
        %v458 = vpop.permute.xlu0 %457
        %v459 = vlaneseq
        %v460 = vshrl.u32 %v459, 7
        %v461 = vadd.s32 %v460, 112
        %462 = vset.pattern.permute.xlu0 %v461
        %463 = vperm.xlu0 %462, %v374
        %v464 = vpop.permute.xlu0 %463
        %v465 = vlaneseq
        %v466 = vshrl.u32 %v465, 7
        %v467 = vadd.s32 %v466, 120
        %468 = vset.pattern.permute.xlu0 %v467
        %469 = vperm.xlu0 %468, %v374
        %v470 = vpop.permute.xlu0 %469
        %v471 = vperm.slane %v271, 2
        %v472 = vlaneseq
        %v473 = vshrl.u32 %v472, 7
        %475 = vset.pattern.permute.xlu0 %v473
        %476 = vperm.xlu0 %475, %v471
        %v477 = vpop.permute.xlu0 %476
        %v478 = vlaneseq
        %v479 = vshrl.u32 %v478, 7
        %v480 = vadd.s32 %v479, 8
        %481 = vset.pattern.permute.xlu0 %v480
        %482 = vperm.xlu0 %481, %v471
        %v483 = vpop.permute.xlu0 %482
        %v484 = vlaneseq
        %v485 = vshrl.u32 %v484, 7
        %v486 = vadd.s32 %v485, 16
        %487 = vset.pattern.permute.xlu0 %v486
        %488 = vperm.xlu0 %487, %v471
        %v489 = vpop.permute.xlu0 %488
        %v490 = vlaneseq
        %v491 = vshrl.u32 %v490, 7
        %v492 = vadd.s32 %v491, 24
        %493 = vset.pattern.permute.xlu0 %v492
        %494 = vperm.xlu0 %493, %v471
        %v495 = vpop.permute.xlu0 %494
        %v496 = vlaneseq
        %v497 = vshrl.u32 %v496, 7
        %v498 = vadd.s32 %v497, 32
        %499 = vset.pattern.permute.xlu0 %v498
        %500 = vperm.xlu0 %499, %v471
        %v501 = vpop.permute.xlu0 %500
        %v502 = vlaneseq
        %v503 = vshrl.u32 %v502, 7
        %v504 = vadd.s32 %v503, 40
        %505 = vset.pattern.permute.xlu0 %v504
        %506 = vperm.xlu0 %505, %v471
        %v507 = vpop.permute.xlu0 %506
        %v508 = vlaneseq
        %v509 = vshrl.u32 %v508, 7
        %v510 = vadd.s32 %v509, 48
        %511 = vset.pattern.permute.xlu0 %v510
        %512 = vperm.xlu0 %511, %v471
        %v513 = vpop.permute.xlu0 %512
        %v514 = vlaneseq
        %v515 = vshrl.u32 %v514, 7
        %v516 = vadd.s32 %v515, 56
        %517 = vset.pattern.permute.xlu0 %v516
        %518 = vperm.xlu0 %517, %v471
        %v519 = vpop.permute.xlu0 %518
        %v520 = vlaneseq
        %v521 = vshrl.u32 %v520, 7
        %v522 = vadd.s32 %v521, 64
        %523 = vset.pattern.permute.xlu0 %v522
        %524 = vperm.xlu0 %523, %v471
        %v525 = vpop.permute.xlu0 %524
        %v526 = vlaneseq
        %v527 = vshrl.u32 %v526, 7
        %v528 = vadd.s32 %v527, 72
        %529 = vset.pattern.permute.xlu0 %v528
        %530 = vperm.xlu0 %529, %v471
        %v531 = vpop.permute.xlu0 %530
        %v532 = vlaneseq
        %v533 = vshrl.u32 %v532, 7
        %v534 = vadd.s32 %v533, 80
        %535 = vset.pattern.permute.xlu0 %v534
        %536 = vperm.xlu0 %535, %v471
        %v537 = vpop.permute.xlu0 %536
        %v538 = vlaneseq
        %v539 = vshrl.u32 %v538, 7
        %v540 = vadd.s32 %v539, 88
        %541 = vset.pattern.permute.xlu0 %v540
        %542 = vperm.xlu0 %541, %v471
        %v543 = vpop.permute.xlu0 %542
        %v544 = vlaneseq
        %v545 = vshrl.u32 %v544, 7
        %v546 = vadd.s32 %v545, 96
        %547 = vset.pattern.permute.xlu0 %v546
        %548 = vperm.xlu0 %547, %v471
        %v549 = vpop.permute.xlu0 %548
        %v550 = vlaneseq
        %v551 = vshrl.u32 %v550, 7
        %v552 = vadd.s32 %v551, 104
        %553 = vset.pattern.permute.xlu0 %v552
        %554 = vperm.xlu0 %553, %v471
        %v555 = vpop.permute.xlu0 %554
        %v556 = vlaneseq
        %v557 = vshrl.u32 %v556, 7
        %v558 = vadd.s32 %v557, 112
        %559 = vset.pattern.permute.xlu0 %v558
        %560 = vperm.xlu0 %559, %v471
        %v561 = vpop.permute.xlu0 %560
        %v562 = vlaneseq
        %v563 = vshrl.u32 %v562, 7
        %v564 = vadd.s32 %v563, 120
        %565 = vset.pattern.permute.xlu0 %v564
        %566 = vperm.xlu0 %565, %v471
        %v567 = vpop.permute.xlu0 %566
        %v568 = vperm.slane %v271, 3
        %v569 = vlaneseq
        %v570 = vshrl.u32 %v569, 7
        %572 = vset.pattern.permute.xlu0 %v570
        %573 = vperm.xlu0 %572, %v568
        %v574 = vpop.permute.xlu0 %573
        %v575 = vlaneseq
        %v576 = vshrl.u32 %v575, 7
        %v577 = vadd.s32 %v576, 8
        %578 = vset.pattern.permute.xlu0 %v577
        %579 = vperm.xlu0 %578, %v568
        %v580 = vpop.permute.xlu0 %579
        %v581 = vlaneseq
        %v582 = vshrl.u32 %v581, 7
        %v583 = vadd.s32 %v582, 16
        %584 = vset.pattern.permute.xlu0 %v583
        %585 = vperm.xlu0 %584, %v568
        %v586 = vpop.permute.xlu0 %585
        %v587 = vlaneseq
        %v588 = vshrl.u32 %v587, 7
        %v589 = vadd.s32 %v588, 24
        %590 = vset.pattern.permute.xlu0 %v589
        %591 = vperm.xlu0 %590, %v568
        %v592 = vpop.permute.xlu0 %591
        %v593 = vlaneseq
        %v594 = vshrl.u32 %v593, 7
        %v595 = vadd.s32 %v594, 32
        %596 = vset.pattern.permute.xlu0 %v595
        %597 = vperm.xlu0 %596, %v568
        %v598 = vpop.permute.xlu0 %597
        %v599 = vlaneseq
        %v600 = vshrl.u32 %v599, 7
        %v601 = vadd.s32 %v600, 40
        %602 = vset.pattern.permute.xlu0 %v601
        %603 = vperm.xlu0 %602, %v568
        %v604 = vpop.permute.xlu0 %603
        %v605 = vlaneseq
        %v606 = vshrl.u32 %v605, 7
        %v607 = vadd.s32 %v606, 48
        %608 = vset.pattern.permute.xlu0 %v607
        %609 = vperm.xlu0 %608, %v568
        %v610 = vpop.permute.xlu0 %609
        %v611 = vlaneseq
        %v612 = vshrl.u32 %v611, 7
        %v613 = vadd.s32 %v612, 56
        %614 = vset.pattern.permute.xlu0 %v613
        %615 = vperm.xlu0 %614, %v568
        %v616 = vpop.permute.xlu0 %615
        %v617 = vlaneseq
        %v618 = vshrl.u32 %v617, 7
        %v619 = vadd.s32 %v618, 64
        %620 = vset.pattern.permute.xlu0 %v619
        %621 = vperm.xlu0 %620, %v568
        %v622 = vpop.permute.xlu0 %621
        %v623 = vlaneseq
        %v624 = vshrl.u32 %v623, 7
        %v625 = vadd.s32 %v624, 72
        %626 = vset.pattern.permute.xlu0 %v625
        %627 = vperm.xlu0 %626, %v568
        %v628 = vpop.permute.xlu0 %627
        %v629 = vlaneseq
        %v630 = vshrl.u32 %v629, 7
        %v631 = vadd.s32 %v630, 80
        %632 = vset.pattern.permute.xlu0 %v631
        %633 = vperm.xlu0 %632, %v568
        %v634 = vpop.permute.xlu0 %633
        %v635 = vlaneseq
        %v636 = vshrl.u32 %v635, 7
        %v637 = vadd.s32 %v636, 88
        %638 = vset.pattern.permute.xlu0 %v637
        %639 = vperm.xlu0 %638, %v568
        %v640 = vpop.permute.xlu0 %639
        %v641 = vlaneseq
        %v642 = vshrl.u32 %v641, 7
        %v643 = vadd.s32 %v642, 96
        %644 = vset.pattern.permute.xlu0 %v643
        %645 = vperm.xlu0 %644, %v568
        %v646 = vpop.permute.xlu0 %645
        %v647 = vlaneseq
        %v648 = vshrl.u32 %v647, 7
        %v649 = vadd.s32 %v648, 104
        %650 = vset.pattern.permute.xlu0 %v649
        %651 = vperm.xlu0 %650, %v568
        %v652 = vpop.permute.xlu0 %651
        %v653 = vlaneseq
        %v654 = vshrl.u32 %v653, 7
        %v655 = vadd.s32 %v654, 112
        %656 = vset.pattern.permute.xlu0 %v655
        %657 = vperm.xlu0 %656, %v568
        %v658 = vpop.permute.xlu0 %657
        %v659 = vlaneseq
        %v660 = vshrl.u32 %v659, 7
        %v661 = vadd.s32 %v660, 120
        %662 = vset.pattern.permute.xlu0 %v661
        %663 = vperm.xlu0 %662, %v568
        %v664 = vpop.permute.xlu0 %663
        %v665 = vperm.slane %v271, 4
        %v666 = vlaneseq
        %v667 = vshrl.u32 %v666, 7
        %669 = vset.pattern.permute.xlu0 %v667
        %670 = vperm.xlu0 %669, %v665
        %v671 = vpop.permute.xlu0 %670
        %v672 = vlaneseq
        %v673 = vshrl.u32 %v672, 7
        %v674 = vadd.s32 %v673, 8
        %675 = vset.pattern.permute.xlu0 %v674
        %676 = vperm.xlu0 %675, %v665
        %v677 = vpop.permute.xlu0 %676
        %v678 = vlaneseq
        %v679 = vshrl.u32 %v678, 7
        %v680 = vadd.s32 %v679, 16
        %681 = vset.pattern.permute.xlu0 %v680
        %682 = vperm.xlu0 %681, %v665
        %v683 = vpop.permute.xlu0 %682
        %v684 = vlaneseq
        %v685 = vshrl.u32 %v684, 7
        %v686 = vadd.s32 %v685, 24
        %687 = vset.pattern.permute.xlu0 %v686
        %688 = vperm.xlu0 %687, %v665
        %v689 = vpop.permute.xlu0 %688
        %v690 = vlaneseq
        %v691 = vshrl.u32 %v690, 7
        %v692 = vadd.s32 %v691, 32
        %693 = vset.pattern.permute.xlu0 %v692
        %694 = vperm.xlu0 %693, %v665
        %v695 = vpop.permute.xlu0 %694
        %v696 = vlaneseq
        %v697 = vshrl.u32 %v696, 7
        %v698 = vadd.s32 %v697, 40
        %699 = vset.pattern.permute.xlu0 %v698
        %700 = vperm.xlu0 %699, %v665
        %v701 = vpop.permute.xlu0 %700
        %v702 = vlaneseq
        %v703 = vshrl.u32 %v702, 7
        %v704 = vadd.s32 %v703, 48
        %705 = vset.pattern.permute.xlu0 %v704
        %706 = vperm.xlu0 %705, %v665
        %v707 = vpop.permute.xlu0 %706
        %v708 = vlaneseq
        %v709 = vshrl.u32 %v708, 7
        %v710 = vadd.s32 %v709, 56
        %711 = vset.pattern.permute.xlu0 %v710
        %712 = vperm.xlu0 %711, %v665
        %v713 = vpop.permute.xlu0 %712
        %v714 = vlaneseq
        %v715 = vshrl.u32 %v714, 7
        %v716 = vadd.s32 %v715, 64
        %717 = vset.pattern.permute.xlu0 %v716
        %718 = vperm.xlu0 %717, %v665
        %v719 = vpop.permute.xlu0 %718
        %v720 = vlaneseq
        %v721 = vshrl.u32 %v720, 7
        %v722 = vadd.s32 %v721, 72
        %723 = vset.pattern.permute.xlu0 %v722
        %724 = vperm.xlu0 %723, %v665
        %v725 = vpop.permute.xlu0 %724
        %v726 = vlaneseq
        %v727 = vshrl.u32 %v726, 7
        %v728 = vadd.s32 %v727, 80
        %729 = vset.pattern.permute.xlu0 %v728
        %730 = vperm.xlu0 %729, %v665
        %v731 = vpop.permute.xlu0 %730
        %v732 = vlaneseq
        %v733 = vshrl.u32 %v732, 7
        %v734 = vadd.s32 %v733, 88
        %735 = vset.pattern.permute.xlu0 %v734
        %736 = vperm.xlu0 %735, %v665
        %v737 = vpop.permute.xlu0 %736
        %v738 = vlaneseq
        %v739 = vshrl.u32 %v738, 7
        %v740 = vadd.s32 %v739, 96
        %741 = vset.pattern.permute.xlu0 %v740
        %742 = vperm.xlu0 %741, %v665
        %v743 = vpop.permute.xlu0 %742
        %v744 = vlaneseq
        %v745 = vshrl.u32 %v744, 7
        %v746 = vadd.s32 %v745, 104
        %747 = vset.pattern.permute.xlu0 %v746
        %748 = vperm.xlu0 %747, %v665
        %v749 = vpop.permute.xlu0 %748
        %v750 = vlaneseq
        %v751 = vshrl.u32 %v750, 7
        %v752 = vadd.s32 %v751, 112
        %753 = vset.pattern.permute.xlu0 %v752
        %754 = vperm.xlu0 %753, %v665
        %v755 = vpop.permute.xlu0 %754
        %v756 = vlaneseq
        %v757 = vshrl.u32 %v756, 7
        %v758 = vadd.s32 %v757, 120
        %759 = vset.pattern.permute.xlu0 %v758
        %760 = vperm.xlu0 %759, %v665
        %v761 = vpop.permute.xlu0 %760
        %v762 = vperm.slane %v271, 5
        %v763 = vlaneseq
        %v764 = vshrl.u32 %v763, 7
        %766 = vset.pattern.permute.xlu0 %v764
        %767 = vperm.xlu0 %766, %v762
        %v768 = vpop.permute.xlu0 %767
        %v769 = vlaneseq
        %v770 = vshrl.u32 %v769, 7
        %v771 = vadd.s32 %v770, 8
        %772 = vset.pattern.permute.xlu0 %v771
        %773 = vperm.xlu0 %772, %v762
        %v774 = vpop.permute.xlu0 %773
        %v775 = vlaneseq
        %v776 = vshrl.u32 %v775, 7
        %v777 = vadd.s32 %v776, 16
        %778 = vset.pattern.permute.xlu0 %v777
        %779 = vperm.xlu0 %778, %v762
        %v780 = vpop.permute.xlu0 %779
        %v781 = vlaneseq
        %v782 = vshrl.u32 %v781, 7
        %v783 = vadd.s32 %v782, 24
        %784 = vset.pattern.permute.xlu0 %v783
        %785 = vperm.xlu0 %784, %v762
        %v786 = vpop.permute.xlu0 %785
        %v787 = vlaneseq
        %v788 = vshrl.u32 %v787, 7
        %v789 = vadd.s32 %v788, 32
        %790 = vset.pattern.permute.xlu0 %v789
        %791 = vperm.xlu0 %790, %v762
        %v792 = vpop.permute.xlu0 %791
        %v793 = vlaneseq
        %v794 = vshrl.u32 %v793, 7
        %v795 = vadd.s32 %v794, 40
        %796 = vset.pattern.permute.xlu0 %v795
        %797 = vperm.xlu0 %796, %v762
        %v798 = vpop.permute.xlu0 %797
        %v799 = vlaneseq
        %v800 = vshrl.u32 %v799, 7
        %v801 = vadd.s32 %v800, 48
        %802 = vset.pattern.permute.xlu0 %v801
        %803 = vperm.xlu0 %802, %v762
        %v804 = vpop.permute.xlu0 %803
        %v805 = vlaneseq
        %v806 = vshrl.u32 %v805, 7
        %v807 = vadd.s32 %v806, 56
        %808 = vset.pattern.permute.xlu0 %v807
        %809 = vperm.xlu0 %808, %v762
        %v810 = vpop.permute.xlu0 %809
        %v811 = vlaneseq
        %v812 = vshrl.u32 %v811, 7
        %v813 = vadd.s32 %v812, 64
        %814 = vset.pattern.permute.xlu0 %v813
        %815 = vperm.xlu0 %814, %v762
        %v816 = vpop.permute.xlu0 %815
        %v817 = vlaneseq
        %v818 = vshrl.u32 %v817, 7
        %v819 = vadd.s32 %v818, 72
        %820 = vset.pattern.permute.xlu0 %v819
        %821 = vperm.xlu0 %820, %v762
        %v822 = vpop.permute.xlu0 %821
        %v823 = vlaneseq
        %v824 = vshrl.u32 %v823, 7
        %v825 = vadd.s32 %v824, 80
        %826 = vset.pattern.permute.xlu0 %v825
        %827 = vperm.xlu0 %826, %v762
        %v828 = vpop.permute.xlu0 %827
        %v829 = vlaneseq
        %v830 = vshrl.u32 %v829, 7
        %v831 = vadd.s32 %v830, 88
        %832 = vset.pattern.permute.xlu0 %v831
        %833 = vperm.xlu0 %832, %v762
        %v834 = vpop.permute.xlu0 %833
        %v835 = vlaneseq
        %v836 = vshrl.u32 %v835, 7
        %v837 = vadd.s32 %v836, 96
        %838 = vset.pattern.permute.xlu0 %v837
        %839 = vperm.xlu0 %838, %v762
        %v840 = vpop.permute.xlu0 %839
        %v841 = vlaneseq
        %v842 = vshrl.u32 %v841, 7
        %v843 = vadd.s32 %v842, 104
        %844 = vset.pattern.permute.xlu0 %v843
        %845 = vperm.xlu0 %844, %v762
        %v846 = vpop.permute.xlu0 %845
        %v847 = vlaneseq
        %v848 = vshrl.u32 %v847, 7
        %v849 = vadd.s32 %v848, 112
        %850 = vset.pattern.permute.xlu0 %v849
        %851 = vperm.xlu0 %850, %v762
        %v852 = vpop.permute.xlu0 %851
        %v853 = vlaneseq
        %v854 = vshrl.u32 %v853, 7
        %v855 = vadd.s32 %v854, 120
        %856 = vset.pattern.permute.xlu0 %v855
        %857 = vperm.xlu0 %856, %v762
        %v858 = vpop.permute.xlu0 %857
        %v859 = vperm.slane %v271, 6
        %v860 = vlaneseq
        %v861 = vshrl.u32 %v860, 7
        %863 = vset.pattern.permute.xlu0 %v861
        %864 = vperm.xlu0 %863, %v859
        %v865 = vpop.permute.xlu0 %864
        %v866 = vlaneseq
        %v867 = vshrl.u32 %v866, 7
        %v868 = vadd.s32 %v867, 8
        %869 = vset.pattern.permute.xlu0 %v868
        %870 = vperm.xlu0 %869, %v859
        %v871 = vpop.permute.xlu0 %870
        %v872 = vlaneseq
        %v873 = vshrl.u32 %v872, 7
        %v874 = vadd.s32 %v873, 16
        %875 = vset.pattern.permute.xlu0 %v874
        %876 = vperm.xlu0 %875, %v859
        %v877 = vpop.permute.xlu0 %876
        %v878 = vlaneseq
        %v879 = vshrl.u32 %v878, 7
        %v880 = vadd.s32 %v879, 24
        %881 = vset.pattern.permute.xlu0 %v880
        %882 = vperm.xlu0 %881, %v859
        %v883 = vpop.permute.xlu0 %882
        %v884 = vlaneseq
        %v885 = vshrl.u32 %v884, 7
        %v886 = vadd.s32 %v885, 32
        %887 = vset.pattern.permute.xlu0 %v886
        %888 = vperm.xlu0 %887, %v859
        %v889 = vpop.permute.xlu0 %888
        %v890 = vlaneseq
        %v891 = vshrl.u32 %v890, 7
        %v892 = vadd.s32 %v891, 40
        %893 = vset.pattern.permute.xlu0 %v892
        %894 = vperm.xlu0 %893, %v859
        %v895 = vpop.permute.xlu0 %894
        %v896 = vlaneseq
        %v897 = vshrl.u32 %v896, 7
        %v898 = vadd.s32 %v897, 48
        %899 = vset.pattern.permute.xlu0 %v898
        %900 = vperm.xlu0 %899, %v859
        %v901 = vpop.permute.xlu0 %900
        %v902 = vlaneseq
        %v903 = vshrl.u32 %v902, 7
        %v904 = vadd.s32 %v903, 56
        %905 = vset.pattern.permute.xlu0 %v904
        %906 = vperm.xlu0 %905, %v859
        %v907 = vpop.permute.xlu0 %906
        %v908 = vlaneseq
        %v909 = vshrl.u32 %v908, 7
        %v910 = vadd.s32 %v909, 64
        %911 = vset.pattern.permute.xlu0 %v910
        %912 = vperm.xlu0 %911, %v859
        %v913 = vpop.permute.xlu0 %912
        %v914 = vlaneseq
        %v915 = vshrl.u32 %v914, 7
        %v916 = vadd.s32 %v915, 72
        %917 = vset.pattern.permute.xlu0 %v916
        %918 = vperm.xlu0 %917, %v859
        %v919 = vpop.permute.xlu0 %918
        %v920 = vlaneseq
        %v921 = vshrl.u32 %v920, 7
        %v922 = vadd.s32 %v921, 80
        %923 = vset.pattern.permute.xlu0 %v922
        %924 = vperm.xlu0 %923, %v859
        %v925 = vpop.permute.xlu0 %924
        %v926 = vlaneseq
        %v927 = vshrl.u32 %v926, 7
        %v928 = vadd.s32 %v927, 88
        %929 = vset.pattern.permute.xlu0 %v928
        %930 = vperm.xlu0 %929, %v859
        %v931 = vpop.permute.xlu0 %930
        %v932 = vlaneseq
        %v933 = vshrl.u32 %v932, 7
        %v934 = vadd.s32 %v933, 96
        %935 = vset.pattern.permute.xlu0 %v934
        %936 = vperm.xlu0 %935, %v859
        %v937 = vpop.permute.xlu0 %936
        %v938 = vlaneseq
        %v939 = vshrl.u32 %v938, 7
        %v940 = vadd.s32 %v939, 104
        %941 = vset.pattern.permute.xlu0 %v940
        %942 = vperm.xlu0 %941, %v859
        %v943 = vpop.permute.xlu0 %942
        %v944 = vlaneseq
        %v945 = vshrl.u32 %v944, 7
        %v946 = vadd.s32 %v945, 112
        %947 = vset.pattern.permute.xlu0 %v946
        %948 = vperm.xlu0 %947, %v859
        %v949 = vpop.permute.xlu0 %948
        %v950 = vlaneseq
        %v951 = vshrl.u32 %v950, 7
        %v952 = vadd.s32 %v951, 120
        %953 = vset.pattern.permute.xlu0 %v952
        %954 = vperm.xlu0 %953, %v859
        %v955 = vpop.permute.xlu0 %954
        %v956 = vperm.slane %v271, 7
        %v957 = vlaneseq
        %v958 = vshrl.u32 %v957, 7
        %960 = vset.pattern.permute.xlu0 %v958
        %961 = vperm.xlu0 %960, %v956
        %v962 = vpop.permute.xlu0 %961
        %v963 = vlaneseq
        %v964 = vshrl.u32 %v963, 7
        %v965 = vadd.s32 %v964, 8
        %966 = vset.pattern.permute.xlu0 %v965
        %967 = vperm.xlu0 %966, %v956
        %v968 = vpop.permute.xlu0 %967
        %v969 = vlaneseq
        %v970 = vshrl.u32 %v969, 7
        %v971 = vadd.s32 %v970, 16
        %972 = vset.pattern.permute.xlu0 %v971
        %973 = vperm.xlu0 %972, %v956
        %v974 = vpop.permute.xlu0 %973
        %v975 = vlaneseq
        %v976 = vshrl.u32 %v975, 7
        %v977 = vadd.s32 %v976, 24
        %978 = vset.pattern.permute.xlu0 %v977
        %979 = vperm.xlu0 %978, %v956
        %v980 = vpop.permute.xlu0 %979
        %v981 = vlaneseq
        %v982 = vshrl.u32 %v981, 7
        %v983 = vadd.s32 %v982, 32
        %984 = vset.pattern.permute.xlu0 %v983
        %985 = vperm.xlu0 %984, %v956
        %v986 = vpop.permute.xlu0 %985
        %v987 = vlaneseq
        %v988 = vshrl.u32 %v987, 7
        %v989 = vadd.s32 %v988, 40
        %990 = vset.pattern.permute.xlu0 %v989
        %991 = vperm.xlu0 %990, %v956
        %v992 = vpop.permute.xlu0 %991
        %v993 = vlaneseq
        %v994 = vshrl.u32 %v993, 7
        %v995 = vadd.s32 %v994, 48
        %996 = vset.pattern.permute.xlu0 %v995
        %997 = vperm.xlu0 %996, %v956
        %v998 = vpop.permute.xlu0 %997
        %v999 = vlaneseq
        %v1000 = vshrl.u32 %v999, 7
        %v1001 = vadd.s32 %v1000, 56
        %1002 = vset.pattern.permute.xlu0 %v1001
        %1003 = vperm.xlu0 %1002, %v956
        %v1004 = vpop.permute.xlu0 %1003
        %v1005 = vlaneseq
        %v1006 = vshrl.u32 %v1005, 7
        %v1007 = vadd.s32 %v1006, 64
        %1008 = vset.pattern.permute.xlu0 %v1007
        %1009 = vperm.xlu0 %1008, %v956
        %v1010 = vpop.permute.xlu0 %1009
        %v1011 = vlaneseq
        %v1012 = vshrl.u32 %v1011, 7
        %v1013 = vadd.s32 %v1012, 72
        %1014 = vset.pattern.permute.xlu0 %v1013
        %1015 = vperm.xlu0 %1014, %v956
        %v1016 = vpop.permute.xlu0 %1015
        %v1017 = vlaneseq
        %v1018 = vshrl.u32 %v1017, 7
        %v1019 = vadd.s32 %v1018, 80
        %1020 = vset.pattern.permute.xlu0 %v1019
        %1021 = vperm.xlu0 %1020, %v956
        %v1022 = vpop.permute.xlu0 %1021
        %v1023 = vlaneseq
        %v1024 = vshrl.u32 %v1023, 7
        %v1025 = vadd.s32 %v1024, 88
        %1026 = vset.pattern.permute.xlu0 %v1025
        %1027 = vperm.xlu0 %1026, %v956
        %v1028 = vpop.permute.xlu0 %1027
        %v1029 = vlaneseq
        %v1030 = vshrl.u32 %v1029, 7
        %v1031 = vadd.s32 %v1030, 96
        %1032 = vset.pattern.permute.xlu0 %v1031
        %1033 = vperm.xlu0 %1032, %v956
        %v1034 = vpop.permute.xlu0 %1033
        %v1035 = vlaneseq
        %v1036 = vshrl.u32 %v1035, 7
        %v1037 = vadd.s32 %v1036, 104
        %1038 = vset.pattern.permute.xlu0 %v1037
        %1039 = vperm.xlu0 %1038, %v956
        %v1040 = vpop.permute.xlu0 %1039
        %v1041 = vlaneseq
        %v1042 = vshrl.u32 %v1041, 7
        %v1043 = vadd.s32 %v1042, 112
        %1044 = vset.pattern.permute.xlu0 %v1043
        %1045 = vperm.xlu0 %1044, %v956
        %v1046 = vpop.permute.xlu0 %1045
        %v1047 = vlaneseq
        %v1048 = vshrl.u32 %v1047, 7
        %v1049 = vadd.s32 %v1048, 120
        %1050 = vset.pattern.permute.xlu0 %v1049
        %1051 = vperm.xlu0 %1050, %v956
        %v1052 = vpop.permute.xlu0 %1051
        %vm1053 = vcmp.eq.s32.totalorder %v283, %v273
        %vm1054 = vcmp.eq.s32.totalorder %v283, %v274
        %vm1055 = vcmp.eq.s32.totalorder %v283, %v275
        %vm1056 = vcmp.eq.s32.totalorder %v283, %v276
        %vm1057 = vcmp.eq.s32.totalorder %v289, %v273
        %vm1058 = vcmp.eq.s32.totalorder %v289, %v274
        %vm1059 = vcmp.eq.s32.totalorder %v289, %v275
        %vm1060 = vcmp.eq.s32.totalorder %v289, %v276
        %vm1061 = vcmp.eq.s32.totalorder %v295, %v273
        %vm1062 = vcmp.eq.s32.totalorder %v295, %v274
        %vm1063 = vcmp.eq.s32.totalorder %v295, %v275
        %vm1064 = vcmp.eq.s32.totalorder %v295, %v276
        %vm1065 = vcmp.eq.s32.totalorder %v301, %v273
        %vm1066 = vcmp.eq.s32.totalorder %v301, %v274
        %vm1067 = vcmp.eq.s32.totalorder %v301, %v275
        %vm1068 = vcmp.eq.s32.totalorder %v301, %v276
        %vm1069 = vcmp.eq.s32.totalorder %v307, %v273
        %vm1070 = vcmp.eq.s32.totalorder %v307, %v274
        %vm1071 = vcmp.eq.s32.totalorder %v307, %v275
        %vm1072 = vcmp.eq.s32.totalorder %v307, %v276
        %vm1073 = vcmp.eq.s32.totalorder %v313, %v273
        %vm1074 = vcmp.eq.s32.totalorder %v313, %v274
        %vm1075 = vcmp.eq.s32.totalorder %v313, %v275
        %vm1076 = vcmp.eq.s32.totalorder %v313, %v276
        %vm1077 = vcmp.eq.s32.totalorder %v319, %v273
        %vm1078 = vcmp.eq.s32.totalorder %v319, %v274
        %vm1079 = vcmp.eq.s32.totalorder %v319, %v275
        %vm1080 = vcmp.eq.s32.totalorder %v319, %v276
        %vm1081 = vcmp.eq.s32.totalorder %v325, %v273
        %vm1082 = vcmp.eq.s32.totalorder %v325, %v274
        %vm1083 = vcmp.eq.s32.totalorder %v325, %v275
        %vm1084 = vcmp.eq.s32.totalorder %v325, %v276
        %vm1085 = vcmp.eq.s32.totalorder %v331, %v273
        %vm1086 = vcmp.eq.s32.totalorder %v331, %v274
        %vm1087 = vcmp.eq.s32.totalorder %v331, %v275
        %vm1088 = vcmp.eq.s32.totalorder %v331, %v276
        %vm1089 = vcmp.eq.s32.totalorder %v337, %v273
        %vm1090 = vcmp.eq.s32.totalorder %v337, %v274
        %vm1091 = vcmp.eq.s32.totalorder %v337, %v275
        %vm1092 = vcmp.eq.s32.totalorder %v337, %v276
        %vm1093 = vcmp.eq.s32.totalorder %v343, %v273
        %vm1094 = vcmp.eq.s32.totalorder %v343, %v274
        %vm1095 = vcmp.eq.s32.totalorder %v343, %v275
        %vm1096 = vcmp.eq.s32.totalorder %v343, %v276
        %vm1097 = vcmp.eq.s32.totalorder %v349, %v273
        %vm1098 = vcmp.eq.s32.totalorder %v349, %v274
        %vm1099 = vcmp.eq.s32.totalorder %v349, %v275
        %vm1100 = vcmp.eq.s32.totalorder %v349, %v276
        %vm1101 = vcmp.eq.s32.totalorder %v355, %v273
        %vm1102 = vcmp.eq.s32.totalorder %v355, %v274
        %vm1103 = vcmp.eq.s32.totalorder %v355, %v275
        %vm1104 = vcmp.eq.s32.totalorder %v355, %v276
        %vm1105 = vcmp.eq.s32.totalorder %v361, %v273
        %vm1106 = vcmp.eq.s32.totalorder %v361, %v274
        %vm1107 = vcmp.eq.s32.totalorder %v361, %v275
        %vm1108 = vcmp.eq.s32.totalorder %v361, %v276
        %vm1109 = vcmp.eq.s32.totalorder %v367, %v273
        %vm1110 = vcmp.eq.s32.totalorder %v367, %v274
        %vm1111 = vcmp.eq.s32.totalorder %v367, %v275
        %vm1112 = vcmp.eq.s32.totalorder %v367, %v276
        %vm1113 = vcmp.eq.s32.totalorder %v373, %v273
        %vm1114 = vcmp.eq.s32.totalorder %v373, %v274
        %vm1115 = vcmp.eq.s32.totalorder %v373, %v275
        %vm1116 = vcmp.eq.s32.totalorder %v373, %v276
        %vm1117 = vcmp.eq.s32.totalorder %v380, %v273
        %vm1118 = vcmp.eq.s32.totalorder %v380, %v274
        %vm1119 = vcmp.eq.s32.totalorder %v380, %v275
        %vm1120 = vcmp.eq.s32.totalorder %v380, %v276
        %vm1121 = vcmp.eq.s32.totalorder %v386, %v273
        %vm1122 = vcmp.eq.s32.totalorder %v386, %v274
        %vm1123 = vcmp.eq.s32.totalorder %v386, %v275
        %vm1124 = vcmp.eq.s32.totalorder %v386, %v276
        %vm1125 = vcmp.eq.s32.totalorder %v392, %v273
        %vm1126 = vcmp.eq.s32.totalorder %v392, %v274
        %vm1127 = vcmp.eq.s32.totalorder %v392, %v275
        %vm1128 = vcmp.eq.s32.totalorder %v392, %v276
        %vm1129 = vcmp.eq.s32.totalorder %v398, %v273
        %vm1130 = vcmp.eq.s32.totalorder %v398, %v274
        %vm1131 = vcmp.eq.s32.totalorder %v398, %v275
        %vm1132 = vcmp.eq.s32.totalorder %v398, %v276
        %vm1133 = vcmp.eq.s32.totalorder %v404, %v273
        %vm1134 = vcmp.eq.s32.totalorder %v404, %v274
        %vm1135 = vcmp.eq.s32.totalorder %v404, %v275
        %vm1136 = vcmp.eq.s32.totalorder %v404, %v276
        %vm1137 = vcmp.eq.s32.totalorder %v410, %v273
        %vm1138 = vcmp.eq.s32.totalorder %v410, %v274
        %vm1139 = vcmp.eq.s32.totalorder %v410, %v275
        %vm1140 = vcmp.eq.s32.totalorder %v410, %v276
        %vm1141 = vcmp.eq.s32.totalorder %v416, %v273
        %vm1142 = vcmp.eq.s32.totalorder %v416, %v274
        %vm1143 = vcmp.eq.s32.totalorder %v416, %v275
        %vm1144 = vcmp.eq.s32.totalorder %v416, %v276
        %vm1145 = vcmp.eq.s32.totalorder %v422, %v273
        %vm1146 = vcmp.eq.s32.totalorder %v422, %v274
        %vm1147 = vcmp.eq.s32.totalorder %v422, %v275
        %vm1148 = vcmp.eq.s32.totalorder %v422, %v276
        %vm1149 = vcmp.eq.s32.totalorder %v428, %v273
        %vm1150 = vcmp.eq.s32.totalorder %v428, %v274
        %vm1151 = vcmp.eq.s32.totalorder %v428, %v275
        %vm1152 = vcmp.eq.s32.totalorder %v428, %v276
        %vm1153 = vcmp.eq.s32.totalorder %v434, %v273
        %vm1154 = vcmp.eq.s32.totalorder %v434, %v274
        %vm1155 = vcmp.eq.s32.totalorder %v434, %v275
        %vm1156 = vcmp.eq.s32.totalorder %v434, %v276
        %vm1157 = vcmp.eq.s32.totalorder %v440, %v273
        %vm1158 = vcmp.eq.s32.totalorder %v440, %v274
        %vm1159 = vcmp.eq.s32.totalorder %v440, %v275
        %vm1160 = vcmp.eq.s32.totalorder %v440, %v276
        %vm1161 = vcmp.eq.s32.totalorder %v446, %v273
        %vm1162 = vcmp.eq.s32.totalorder %v446, %v274
        %vm1163 = vcmp.eq.s32.totalorder %v446, %v275
        %vm1164 = vcmp.eq.s32.totalorder %v446, %v276
        %vm1165 = vcmp.eq.s32.totalorder %v452, %v273
        %vm1166 = vcmp.eq.s32.totalorder %v452, %v274
        %vm1167 = vcmp.eq.s32.totalorder %v452, %v275
        %vm1168 = vcmp.eq.s32.totalorder %v452, %v276
        %vm1169 = vcmp.eq.s32.totalorder %v458, %v273
        %vm1170 = vcmp.eq.s32.totalorder %v458, %v274
        %vm1171 = vcmp.eq.s32.totalorder %v458, %v275
        %vm1172 = vcmp.eq.s32.totalorder %v458, %v276
        %vm1173 = vcmp.eq.s32.totalorder %v464, %v273
        %vm1174 = vcmp.eq.s32.totalorder %v464, %v274
        %vm1175 = vcmp.eq.s32.totalorder %v464, %v275
        %vm1176 = vcmp.eq.s32.totalorder %v464, %v276
        %vm1177 = vcmp.eq.s32.totalorder %v470, %v273
        %vm1178 = vcmp.eq.s32.totalorder %v470, %v274
        %vm1179 = vcmp.eq.s32.totalorder %v470, %v275
        %vm1180 = vcmp.eq.s32.totalorder %v470, %v276
        %vm1181 = vcmp.eq.s32.totalorder %v477, %v273
        %vm1182 = vcmp.eq.s32.totalorder %v477, %v274
        %vm1183 = vcmp.eq.s32.totalorder %v477, %v275
        %vm1184 = vcmp.eq.s32.totalorder %v477, %v276
        %vm1185 = vcmp.eq.s32.totalorder %v483, %v273
        %vm1186 = vcmp.eq.s32.totalorder %v483, %v274
        %vm1187 = vcmp.eq.s32.totalorder %v483, %v275
        %vm1188 = vcmp.eq.s32.totalorder %v483, %v276
        %vm1189 = vcmp.eq.s32.totalorder %v489, %v273
        %vm1190 = vcmp.eq.s32.totalorder %v489, %v274
        %vm1191 = vcmp.eq.s32.totalorder %v489, %v275
        %vm1192 = vcmp.eq.s32.totalorder %v489, %v276
        %vm1193 = vcmp.eq.s32.totalorder %v495, %v273
        %vm1194 = vcmp.eq.s32.totalorder %v495, %v274
        %vm1195 = vcmp.eq.s32.totalorder %v495, %v275
        %vm1196 = vcmp.eq.s32.totalorder %v495, %v276
        %vm1197 = vcmp.eq.s32.totalorder %v501, %v273
        %vm1198 = vcmp.eq.s32.totalorder %v501, %v274
        %vm1199 = vcmp.eq.s32.totalorder %v501, %v275
        %vm1200 = vcmp.eq.s32.totalorder %v501, %v276
        %vm1201 = vcmp.eq.s32.totalorder %v507, %v273
        %vm1202 = vcmp.eq.s32.totalorder %v507, %v274
        %vm1203 = vcmp.eq.s32.totalorder %v507, %v275
        %vm1204 = vcmp.eq.s32.totalorder %v507, %v276
        %vm1205 = vcmp.eq.s32.totalorder %v513, %v273
        %vm1206 = vcmp.eq.s32.totalorder %v513, %v274
        %vm1207 = vcmp.eq.s32.totalorder %v513, %v275
        %vm1208 = vcmp.eq.s32.totalorder %v513, %v276
        %vm1209 = vcmp.eq.s32.totalorder %v519, %v273
        %vm1210 = vcmp.eq.s32.totalorder %v519, %v274
        %vm1211 = vcmp.eq.s32.totalorder %v519, %v275
        %vm1212 = vcmp.eq.s32.totalorder %v519, %v276
        %vm1213 = vcmp.eq.s32.totalorder %v525, %v273
        %vm1214 = vcmp.eq.s32.totalorder %v525, %v274
        %vm1215 = vcmp.eq.s32.totalorder %v525, %v275
        %vm1216 = vcmp.eq.s32.totalorder %v525, %v276
        %vm1217 = vcmp.eq.s32.totalorder %v531, %v273
        %vm1218 = vcmp.eq.s32.totalorder %v531, %v274
        %vm1219 = vcmp.eq.s32.totalorder %v531, %v275
        %vm1220 = vcmp.eq.s32.totalorder %v531, %v276
        %vm1221 = vcmp.eq.s32.totalorder %v537, %v273
        %vm1222 = vcmp.eq.s32.totalorder %v537, %v274
        %vm1223 = vcmp.eq.s32.totalorder %v537, %v275
        %vm1224 = vcmp.eq.s32.totalorder %v537, %v276
        %vm1225 = vcmp.eq.s32.totalorder %v543, %v273
        %vm1226 = vcmp.eq.s32.totalorder %v543, %v274
        %vm1227 = vcmp.eq.s32.totalorder %v543, %v275
        %vm1228 = vcmp.eq.s32.totalorder %v543, %v276
        %vm1229 = vcmp.eq.s32.totalorder %v549, %v273
        %vm1230 = vcmp.eq.s32.totalorder %v549, %v274
        %vm1231 = vcmp.eq.s32.totalorder %v549, %v275
        %vm1232 = vcmp.eq.s32.totalorder %v549, %v276
        %vm1233 = vcmp.eq.s32.totalorder %v555, %v273
        %vm1234 = vcmp.eq.s32.totalorder %v555, %v274
        %vm1235 = vcmp.eq.s32.totalorder %v555, %v275
        %vm1236 = vcmp.eq.s32.totalorder %v555, %v276
        %vm1237 = vcmp.eq.s32.totalorder %v561, %v273
        %vm1238 = vcmp.eq.s32.totalorder %v561, %v274
        %vm1239 = vcmp.eq.s32.totalorder %v561, %v275
        %vm1240 = vcmp.eq.s32.totalorder %v561, %v276
        %vm1241 = vcmp.eq.s32.totalorder %v567, %v273
        %vm1242 = vcmp.eq.s32.totalorder %v567, %v274
        %vm1243 = vcmp.eq.s32.totalorder %v567, %v275
        %vm1244 = vcmp.eq.s32.totalorder %v567, %v276
        %vm1245 = vcmp.eq.s32.totalorder %v574, %v273
        %vm1246 = vcmp.eq.s32.totalorder %v574, %v274
        %vm1247 = vcmp.eq.s32.totalorder %v574, %v275
        %vm1248 = vcmp.eq.s32.totalorder %v574, %v276
        %vm1249 = vcmp.eq.s32.totalorder %v580, %v273
        %vm1250 = vcmp.eq.s32.totalorder %v580, %v274
        %vm1251 = vcmp.eq.s32.totalorder %v580, %v275
        %vm1252 = vcmp.eq.s32.totalorder %v580, %v276
        %vm1253 = vcmp.eq.s32.totalorder %v586, %v273
        %vm1254 = vcmp.eq.s32.totalorder %v586, %v274
        %vm1255 = vcmp.eq.s32.totalorder %v586, %v275
        %vm1256 = vcmp.eq.s32.totalorder %v586, %v276
        %vm1257 = vcmp.eq.s32.totalorder %v592, %v273
        %vm1258 = vcmp.eq.s32.totalorder %v592, %v274
        %vm1259 = vcmp.eq.s32.totalorder %v592, %v275
        %vm1260 = vcmp.eq.s32.totalorder %v592, %v276
        %vm1261 = vcmp.eq.s32.totalorder %v598, %v273
        %vm1262 = vcmp.eq.s32.totalorder %v598, %v274
        %vm1263 = vcmp.eq.s32.totalorder %v598, %v275
        %vm1264 = vcmp.eq.s32.totalorder %v598, %v276
        %vm1265 = vcmp.eq.s32.totalorder %v604, %v273
        %vm1266 = vcmp.eq.s32.totalorder %v604, %v274
        %vm1267 = vcmp.eq.s32.totalorder %v604, %v275
        %vm1268 = vcmp.eq.s32.totalorder %v604, %v276
        %vm1269 = vcmp.eq.s32.totalorder %v610, %v273
        %vm1270 = vcmp.eq.s32.totalorder %v610, %v274
        %vm1271 = vcmp.eq.s32.totalorder %v610, %v275
        %vm1272 = vcmp.eq.s32.totalorder %v610, %v276
        %vm1273 = vcmp.eq.s32.totalorder %v616, %v273
        %vm1274 = vcmp.eq.s32.totalorder %v616, %v274
        %vm1275 = vcmp.eq.s32.totalorder %v616, %v275
        %vm1276 = vcmp.eq.s32.totalorder %v616, %v276
        %vm1277 = vcmp.eq.s32.totalorder %v622, %v273
        %vm1278 = vcmp.eq.s32.totalorder %v622, %v274
        %vm1279 = vcmp.eq.s32.totalorder %v622, %v275
        %vm1280 = vcmp.eq.s32.totalorder %v622, %v276
        %vm1281 = vcmp.eq.s32.totalorder %v628, %v273
        %vm1282 = vcmp.eq.s32.totalorder %v628, %v274
        %vm1283 = vcmp.eq.s32.totalorder %v628, %v275
        %vm1284 = vcmp.eq.s32.totalorder %v628, %v276
        %vm1285 = vcmp.eq.s32.totalorder %v634, %v273
        %vm1286 = vcmp.eq.s32.totalorder %v634, %v274
        %vm1287 = vcmp.eq.s32.totalorder %v634, %v275
        %vm1288 = vcmp.eq.s32.totalorder %v634, %v276
        %vm1289 = vcmp.eq.s32.totalorder %v640, %v273
        %vm1290 = vcmp.eq.s32.totalorder %v640, %v274
        %vm1291 = vcmp.eq.s32.totalorder %v640, %v275
        %vm1292 = vcmp.eq.s32.totalorder %v640, %v276
        %vm1293 = vcmp.eq.s32.totalorder %v646, %v273
        %vm1294 = vcmp.eq.s32.totalorder %v646, %v274
        %vm1295 = vcmp.eq.s32.totalorder %v646, %v275
        %vm1296 = vcmp.eq.s32.totalorder %v646, %v276
        %vm1297 = vcmp.eq.s32.totalorder %v652, %v273
        %vm1298 = vcmp.eq.s32.totalorder %v652, %v274
        %vm1299 = vcmp.eq.s32.totalorder %v652, %v275
        %vm1300 = vcmp.eq.s32.totalorder %v652, %v276
        %vm1301 = vcmp.eq.s32.totalorder %v658, %v273
        %vm1302 = vcmp.eq.s32.totalorder %v658, %v274
        %vm1303 = vcmp.eq.s32.totalorder %v658, %v275
        %vm1304 = vcmp.eq.s32.totalorder %v658, %v276
        %vm1305 = vcmp.eq.s32.totalorder %v664, %v273
        %vm1306 = vcmp.eq.s32.totalorder %v664, %v274
        %vm1307 = vcmp.eq.s32.totalorder %v664, %v275
        %vm1308 = vcmp.eq.s32.totalorder %v664, %v276
        %vm1309 = vcmp.eq.s32.totalorder %v671, %v273
        %vm1310 = vcmp.eq.s32.totalorder %v671, %v274
        %vm1311 = vcmp.eq.s32.totalorder %v671, %v275
        %vm1312 = vcmp.eq.s32.totalorder %v671, %v276
        %vm1313 = vcmp.eq.s32.totalorder %v677, %v273
        %vm1314 = vcmp.eq.s32.totalorder %v677, %v274
        %vm1315 = vcmp.eq.s32.totalorder %v677, %v275
        %vm1316 = vcmp.eq.s32.totalorder %v677, %v276
        %vm1317 = vcmp.eq.s32.totalorder %v683, %v273
        %vm1318 = vcmp.eq.s32.totalorder %v683, %v274
        %vm1319 = vcmp.eq.s32.totalorder %v683, %v275
        %vm1320 = vcmp.eq.s32.totalorder %v683, %v276
        %vm1321 = vcmp.eq.s32.totalorder %v689, %v273
        %vm1322 = vcmp.eq.s32.totalorder %v689, %v274
        %vm1323 = vcmp.eq.s32.totalorder %v689, %v275
        %vm1324 = vcmp.eq.s32.totalorder %v689, %v276
        %vm1325 = vcmp.eq.s32.totalorder %v695, %v273
        %vm1326 = vcmp.eq.s32.totalorder %v695, %v274
        %vm1327 = vcmp.eq.s32.totalorder %v695, %v275
        %vm1328 = vcmp.eq.s32.totalorder %v695, %v276
        %vm1329 = vcmp.eq.s32.totalorder %v701, %v273
        %vm1330 = vcmp.eq.s32.totalorder %v701, %v274
        %vm1331 = vcmp.eq.s32.totalorder %v701, %v275
        %vm1332 = vcmp.eq.s32.totalorder %v701, %v276
        %vm1333 = vcmp.eq.s32.totalorder %v707, %v273
        %vm1334 = vcmp.eq.s32.totalorder %v707, %v274
        %vm1335 = vcmp.eq.s32.totalorder %v707, %v275
        %vm1336 = vcmp.eq.s32.totalorder %v707, %v276
        %vm1337 = vcmp.eq.s32.totalorder %v713, %v273
        %vm1338 = vcmp.eq.s32.totalorder %v713, %v274
        %vm1339 = vcmp.eq.s32.totalorder %v713, %v275
        %vm1340 = vcmp.eq.s32.totalorder %v713, %v276
        %vm1341 = vcmp.eq.s32.totalorder %v719, %v273
        %vm1342 = vcmp.eq.s32.totalorder %v719, %v274
        %vm1343 = vcmp.eq.s32.totalorder %v719, %v275
        %vm1344 = vcmp.eq.s32.totalorder %v719, %v276
        %vm1345 = vcmp.eq.s32.totalorder %v725, %v273
        %vm1346 = vcmp.eq.s32.totalorder %v725, %v274
        %vm1347 = vcmp.eq.s32.totalorder %v725, %v275
        %vm1348 = vcmp.eq.s32.totalorder %v725, %v276
        %vm1349 = vcmp.eq.s32.totalorder %v731, %v273
        %vm1350 = vcmp.eq.s32.totalorder %v731, %v274
        %vm1351 = vcmp.eq.s32.totalorder %v731, %v275
        %vm1352 = vcmp.eq.s32.totalorder %v731, %v276
        %vm1353 = vcmp.eq.s32.totalorder %v737, %v273
        %vm1354 = vcmp.eq.s32.totalorder %v737, %v274
        %vm1355 = vcmp.eq.s32.totalorder %v737, %v275
        %vm1356 = vcmp.eq.s32.totalorder %v737, %v276
        %vm1357 = vcmp.eq.s32.totalorder %v743, %v273
        %vm1358 = vcmp.eq.s32.totalorder %v743, %v274
        %vm1359 = vcmp.eq.s32.totalorder %v743, %v275
        %vm1360 = vcmp.eq.s32.totalorder %v743, %v276
        %vm1361 = vcmp.eq.s32.totalorder %v749, %v273
        %vm1362 = vcmp.eq.s32.totalorder %v749, %v274
        %vm1363 = vcmp.eq.s32.totalorder %v749, %v275
        %vm1364 = vcmp.eq.s32.totalorder %v749, %v276
        %vm1365 = vcmp.eq.s32.totalorder %v755, %v273
        %vm1366 = vcmp.eq.s32.totalorder %v755, %v274
        %vm1367 = vcmp.eq.s32.totalorder %v755, %v275
        %vm1368 = vcmp.eq.s32.totalorder %v755, %v276
        %vm1369 = vcmp.eq.s32.totalorder %v761, %v273
        %vm1370 = vcmp.eq.s32.totalorder %v761, %v274
        %vm1371 = vcmp.eq.s32.totalorder %v761, %v275
        %vm1372 = vcmp.eq.s32.totalorder %v761, %v276
        %vm1373 = vcmp.eq.s32.totalorder %v768, %v273
        %vm1374 = vcmp.eq.s32.totalorder %v768, %v274
        %vm1375 = vcmp.eq.s32.totalorder %v768, %v275
        %vm1376 = vcmp.eq.s32.totalorder %v768, %v276
        %vm1377 = vcmp.eq.s32.totalorder %v774, %v273
        %vm1378 = vcmp.eq.s32.totalorder %v774, %v274
        %vm1379 = vcmp.eq.s32.totalorder %v774, %v275
        %vm1380 = vcmp.eq.s32.totalorder %v774, %v276
        %vm1381 = vcmp.eq.s32.totalorder %v780, %v273
        %vm1382 = vcmp.eq.s32.totalorder %v780, %v274
        %vm1383 = vcmp.eq.s32.totalorder %v780, %v275
        %vm1384 = vcmp.eq.s32.totalorder %v780, %v276
        %vm1385 = vcmp.eq.s32.totalorder %v786, %v273
        %vm1386 = vcmp.eq.s32.totalorder %v786, %v274
        %vm1387 = vcmp.eq.s32.totalorder %v786, %v275
        %vm1388 = vcmp.eq.s32.totalorder %v786, %v276
        %vm1389 = vcmp.eq.s32.totalorder %v792, %v273
        %vm1390 = vcmp.eq.s32.totalorder %v792, %v274
        %vm1391 = vcmp.eq.s32.totalorder %v792, %v275
        %vm1392 = vcmp.eq.s32.totalorder %v792, %v276
        %vm1393 = vcmp.eq.s32.totalorder %v798, %v273
        %vm1394 = vcmp.eq.s32.totalorder %v798, %v274
        %vm1395 = vcmp.eq.s32.totalorder %v798, %v275
        %vm1396 = vcmp.eq.s32.totalorder %v798, %v276
        %vm1397 = vcmp.eq.s32.totalorder %v804, %v273
        %vm1398 = vcmp.eq.s32.totalorder %v804, %v274
        %vm1399 = vcmp.eq.s32.totalorder %v804, %v275
        %vm1400 = vcmp.eq.s32.totalorder %v804, %v276
        %vm1401 = vcmp.eq.s32.totalorder %v810, %v273
        %vm1402 = vcmp.eq.s32.totalorder %v810, %v274
        %vm1403 = vcmp.eq.s32.totalorder %v810, %v275
        %vm1404 = vcmp.eq.s32.totalorder %v810, %v276
        %vm1405 = vcmp.eq.s32.totalorder %v816, %v273
        %vm1406 = vcmp.eq.s32.totalorder %v816, %v274
        %vm1407 = vcmp.eq.s32.totalorder %v816, %v275
        %vm1408 = vcmp.eq.s32.totalorder %v816, %v276
        %vm1409 = vcmp.eq.s32.totalorder %v822, %v273
        %vm1410 = vcmp.eq.s32.totalorder %v822, %v274
        %vm1411 = vcmp.eq.s32.totalorder %v822, %v275
        %vm1412 = vcmp.eq.s32.totalorder %v822, %v276
        %vm1413 = vcmp.eq.s32.totalorder %v828, %v273
        %vm1414 = vcmp.eq.s32.totalorder %v828, %v274
        %vm1415 = vcmp.eq.s32.totalorder %v828, %v275
        %vm1416 = vcmp.eq.s32.totalorder %v828, %v276
        %vm1417 = vcmp.eq.s32.totalorder %v834, %v273
        %vm1418 = vcmp.eq.s32.totalorder %v834, %v274
        %vm1419 = vcmp.eq.s32.totalorder %v834, %v275
        %vm1420 = vcmp.eq.s32.totalorder %v834, %v276
        %vm1421 = vcmp.eq.s32.totalorder %v840, %v273
        %vm1422 = vcmp.eq.s32.totalorder %v840, %v274
        %vm1423 = vcmp.eq.s32.totalorder %v840, %v275
        %vm1424 = vcmp.eq.s32.totalorder %v840, %v276
        %vm1425 = vcmp.eq.s32.totalorder %v846, %v273
        %vm1426 = vcmp.eq.s32.totalorder %v846, %v274
        %vm1427 = vcmp.eq.s32.totalorder %v846, %v275
        %vm1428 = vcmp.eq.s32.totalorder %v846, %v276
        %vm1429 = vcmp.eq.s32.totalorder %v852, %v273
        %vm1430 = vcmp.eq.s32.totalorder %v852, %v274
        %vm1431 = vcmp.eq.s32.totalorder %v852, %v275
        %vm1432 = vcmp.eq.s32.totalorder %v852, %v276
        %vm1433 = vcmp.eq.s32.totalorder %v858, %v273
        %vm1434 = vcmp.eq.s32.totalorder %v858, %v274
        %vm1435 = vcmp.eq.s32.totalorder %v858, %v275
        %vm1436 = vcmp.eq.s32.totalorder %v858, %v276
        %vm1437 = vcmp.eq.s32.totalorder %v865, %v273
        %vm1438 = vcmp.eq.s32.totalorder %v865, %v274
        %vm1439 = vcmp.eq.s32.totalorder %v865, %v275
        %vm1440 = vcmp.eq.s32.totalorder %v865, %v276
        %vm1441 = vcmp.eq.s32.totalorder %v871, %v273
        %vm1442 = vcmp.eq.s32.totalorder %v871, %v274
        %vm1443 = vcmp.eq.s32.totalorder %v871, %v275
        %vm1444 = vcmp.eq.s32.totalorder %v871, %v276
        %vm1445 = vcmp.eq.s32.totalorder %v877, %v273
        %vm1446 = vcmp.eq.s32.totalorder %v877, %v274
        %vm1447 = vcmp.eq.s32.totalorder %v877, %v275
        %vm1448 = vcmp.eq.s32.totalorder %v877, %v276
        %vm1449 = vcmp.eq.s32.totalorder %v883, %v273
        %vm1450 = vcmp.eq.s32.totalorder %v883, %v274
        %vm1451 = vcmp.eq.s32.totalorder %v883, %v275
        %vm1452 = vcmp.eq.s32.totalorder %v883, %v276
        %vm1453 = vcmp.eq.s32.totalorder %v889, %v273
        %vm1454 = vcmp.eq.s32.totalorder %v889, %v274
        %vm1455 = vcmp.eq.s32.totalorder %v889, %v275
        %vm1456 = vcmp.eq.s32.totalorder %v889, %v276
        %vm1457 = vcmp.eq.s32.totalorder %v895, %v273
        %vm1458 = vcmp.eq.s32.totalorder %v895, %v274
        %vm1459 = vcmp.eq.s32.totalorder %v895, %v275
        %vm1460 = vcmp.eq.s32.totalorder %v895, %v276
        %vm1461 = vcmp.eq.s32.totalorder %v901, %v273
        %vm1462 = vcmp.eq.s32.totalorder %v901, %v274
        %vm1463 = vcmp.eq.s32.totalorder %v901, %v275
        %vm1464 = vcmp.eq.s32.totalorder %v901, %v276
        %vm1465 = vcmp.eq.s32.totalorder %v907, %v273
        %vm1466 = vcmp.eq.s32.totalorder %v907, %v274
        %vm1467 = vcmp.eq.s32.totalorder %v907, %v275
        %vm1468 = vcmp.eq.s32.totalorder %v907, %v276
        %vm1469 = vcmp.eq.s32.totalorder %v913, %v273
        %vm1470 = vcmp.eq.s32.totalorder %v913, %v274
        %vm1471 = vcmp.eq.s32.totalorder %v913, %v275
        %vm1472 = vcmp.eq.s32.totalorder %v913, %v276
        %vm1473 = vcmp.eq.s32.totalorder %v919, %v273
        %vm1474 = vcmp.eq.s32.totalorder %v919, %v274
        %vm1475 = vcmp.eq.s32.totalorder %v919, %v275
        %vm1476 = vcmp.eq.s32.totalorder %v919, %v276
        %vm1477 = vcmp.eq.s32.totalorder %v925, %v273
        %vm1478 = vcmp.eq.s32.totalorder %v925, %v274
        %vm1479 = vcmp.eq.s32.totalorder %v925, %v275
        %vm1480 = vcmp.eq.s32.totalorder %v925, %v276
        %vm1481 = vcmp.eq.s32.totalorder %v931, %v273
        %vm1482 = vcmp.eq.s32.totalorder %v931, %v274
        %vm1483 = vcmp.eq.s32.totalorder %v931, %v275
        %vm1484 = vcmp.eq.s32.totalorder %v931, %v276
        %vm1485 = vcmp.eq.s32.totalorder %v937, %v273
        %vm1486 = vcmp.eq.s32.totalorder %v937, %v274
        %vm1487 = vcmp.eq.s32.totalorder %v937, %v275
        %vm1488 = vcmp.eq.s32.totalorder %v937, %v276
        %vm1489 = vcmp.eq.s32.totalorder %v943, %v273
        %vm1490 = vcmp.eq.s32.totalorder %v943, %v274
        %vm1491 = vcmp.eq.s32.totalorder %v943, %v275
        %vm1492 = vcmp.eq.s32.totalorder %v943, %v276
        %vm1493 = vcmp.eq.s32.totalorder %v949, %v273
        %vm1494 = vcmp.eq.s32.totalorder %v949, %v274
        %vm1495 = vcmp.eq.s32.totalorder %v949, %v275
        %vm1496 = vcmp.eq.s32.totalorder %v949, %v276
        %vm1497 = vcmp.eq.s32.totalorder %v955, %v273
        %vm1498 = vcmp.eq.s32.totalorder %v955, %v274
        %vm1499 = vcmp.eq.s32.totalorder %v955, %v275
        %vm1500 = vcmp.eq.s32.totalorder %v955, %v276
        %vm1501 = vcmp.eq.s32.totalorder %v962, %v273
        %vm1502 = vcmp.eq.s32.totalorder %v962, %v274
        %vm1503 = vcmp.eq.s32.totalorder %v962, %v275
        %vm1504 = vcmp.eq.s32.totalorder %v962, %v276
        %vm1505 = vcmp.eq.s32.totalorder %v968, %v273
        %vm1506 = vcmp.eq.s32.totalorder %v968, %v274
        %vm1507 = vcmp.eq.s32.totalorder %v968, %v275
        %vm1508 = vcmp.eq.s32.totalorder %v968, %v276
        %vm1509 = vcmp.eq.s32.totalorder %v974, %v273
        %vm1510 = vcmp.eq.s32.totalorder %v974, %v274
        %vm1511 = vcmp.eq.s32.totalorder %v974, %v275
        %vm1512 = vcmp.eq.s32.totalorder %v974, %v276
        %vm1513 = vcmp.eq.s32.totalorder %v980, %v273
        %vm1514 = vcmp.eq.s32.totalorder %v980, %v274
        %vm1515 = vcmp.eq.s32.totalorder %v980, %v275
        %vm1516 = vcmp.eq.s32.totalorder %v980, %v276
        %vm1517 = vcmp.eq.s32.totalorder %v986, %v273
        %vm1518 = vcmp.eq.s32.totalorder %v986, %v274
        %vm1519 = vcmp.eq.s32.totalorder %v986, %v275
        %vm1520 = vcmp.eq.s32.totalorder %v986, %v276
        %vm1521 = vcmp.eq.s32.totalorder %v992, %v273
        %vm1522 = vcmp.eq.s32.totalorder %v992, %v274
        %vm1523 = vcmp.eq.s32.totalorder %v992, %v275
        %vm1524 = vcmp.eq.s32.totalorder %v992, %v276
        %vm1525 = vcmp.eq.s32.totalorder %v998, %v273
        %vm1526 = vcmp.eq.s32.totalorder %v998, %v274
        %vm1527 = vcmp.eq.s32.totalorder %v998, %v275
        %vm1528 = vcmp.eq.s32.totalorder %v998, %v276
        %vm1529 = vcmp.eq.s32.totalorder %v1004, %v273
        %vm1530 = vcmp.eq.s32.totalorder %v1004, %v274
        %vm1531 = vcmp.eq.s32.totalorder %v1004, %v275
        %vm1532 = vcmp.eq.s32.totalorder %v1004, %v276
        %vm1533 = vcmp.eq.s32.totalorder %v1010, %v273
        %vm1534 = vcmp.eq.s32.totalorder %v1010, %v274
        %vm1535 = vcmp.eq.s32.totalorder %v1010, %v275
        %vm1536 = vcmp.eq.s32.totalorder %v1010, %v276
        %vm1537 = vcmp.eq.s32.totalorder %v1016, %v273
        %vm1538 = vcmp.eq.s32.totalorder %v1016, %v274
        %vm1539 = vcmp.eq.s32.totalorder %v1016, %v275
        %vm1540 = vcmp.eq.s32.totalorder %v1016, %v276
        %vm1541 = vcmp.eq.s32.totalorder %v1022, %v273
        %vm1542 = vcmp.eq.s32.totalorder %v1022, %v274
        %vm1543 = vcmp.eq.s32.totalorder %v1022, %v275
        %vm1544 = vcmp.eq.s32.totalorder %v1022, %v276
        %vm1545 = vcmp.eq.s32.totalorder %v1028, %v273
        %vm1546 = vcmp.eq.s32.totalorder %v1028, %v274
        %vm1547 = vcmp.eq.s32.totalorder %v1028, %v275
        %vm1548 = vcmp.eq.s32.totalorder %v1028, %v276
        %vm1549 = vcmp.eq.s32.totalorder %v1034, %v273
        %vm1550 = vcmp.eq.s32.totalorder %v1034, %v274
        %vm1551 = vcmp.eq.s32.totalorder %v1034, %v275
        %vm1552 = vcmp.eq.s32.totalorder %v1034, %v276
        %vm1553 = vcmp.eq.s32.totalorder %v1040, %v273
        %vm1554 = vcmp.eq.s32.totalorder %v1040, %v274
        %vm1555 = vcmp.eq.s32.totalorder %v1040, %v275
        %vm1556 = vcmp.eq.s32.totalorder %v1040, %v276
        %vm1557 = vcmp.eq.s32.totalorder %v1046, %v273
        %vm1558 = vcmp.eq.s32.totalorder %v1046, %v274
        %vm1559 = vcmp.eq.s32.totalorder %v1046, %v275
        %vm1560 = vcmp.eq.s32.totalorder %v1046, %v276
        %vm1561 = vcmp.eq.s32.totalorder %v1052, %v273
        %vm1562 = vcmp.eq.s32.totalorder %v1052, %v274
        %vm1563 = vcmp.eq.s32.totalorder %v1052, %v275
        %vm1564 = vcmp.eq.s32.totalorder %v1052, %v276
        %v1565 = vsel %vm1053, 1, 0
        %v1566 = vsel %vm1054, 1, 0
        %v1567 = vsel %vm1055, 1, 0
        %v1568 = vsel %vm1056, 1, 0
        %v1569 = vsel %vm1057, 1, 0
        %v1570 = vsel %vm1058, 1, 0
        %v1571 = vsel %vm1059, 1, 0
        %v1572 = vsel %vm1060, 1, 0
        %v1573 = vsel %vm1061, 1, 0
        %v1574 = vsel %vm1062, 1, 0
        %v1575 = vsel %vm1063, 1, 0
        %v1576 = vsel %vm1064, 1, 0
        %v1577 = vsel %vm1065, 1, 0
        %v1578 = vsel %vm1066, 1, 0
        %v1579 = vsel %vm1067, 1, 0
        %v1580 = vsel %vm1068, 1, 0
        %v1581 = vsel %vm1069, 1, 0
        %v1582 = vsel %vm1070, 1, 0
        %v1583 = vsel %vm1071, 1, 0
        %v1584 = vsel %vm1072, 1, 0
        %v1585 = vsel %vm1073, 1, 0
        %v1586 = vsel %vm1074, 1, 0
        %v1587 = vsel %vm1075, 1, 0
        %v1588 = vsel %vm1076, 1, 0
        %v1589 = vsel %vm1077, 1, 0
        %v1590 = vsel %vm1078, 1, 0
        %v1591 = vsel %vm1079, 1, 0
        %v1592 = vsel %vm1080, 1, 0
        %v1593 = vsel %vm1081, 1, 0
        %v1594 = vsel %vm1082, 1, 0
        %v1595 = vsel %vm1083, 1, 0
        %v1596 = vsel %vm1084, 1, 0
        %v1597 = vsel %vm1085, 1, 0
        %v1598 = vsel %vm1086, 1, 0
        %v1599 = vsel %vm1087, 1, 0
        %v1600 = vsel %vm1088, 1, 0
        %v1601 = vsel %vm1089, 1, 0
        %v1602 = vsel %vm1090, 1, 0
        %v1603 = vsel %vm1091, 1, 0
        %v1604 = vsel %vm1092, 1, 0
        %v1605 = vsel %vm1093, 1, 0
        %v1606 = vsel %vm1094, 1, 0
        %v1607 = vsel %vm1095, 1, 0
        %v1608 = vsel %vm1096, 1, 0
        %v1609 = vsel %vm1097, 1, 0
        %v1610 = vsel %vm1098, 1, 0
        %v1611 = vsel %vm1099, 1, 0
        %v1612 = vsel %vm1100, 1, 0
        %v1613 = vsel %vm1101, 1, 0
        %v1614 = vsel %vm1102, 1, 0
        %v1615 = vsel %vm1103, 1, 0
        %v1616 = vsel %vm1104, 1, 0
        %v1617 = vsel %vm1105, 1, 0
        %v1618 = vsel %vm1106, 1, 0
        %v1619 = vsel %vm1107, 1, 0
        %v1620 = vsel %vm1108, 1, 0
        %v1621 = vsel %vm1109, 1, 0
        %v1622 = vsel %vm1110, 1, 0
        %v1623 = vsel %vm1111, 1, 0
        %v1624 = vsel %vm1112, 1, 0
        %v1625 = vsel %vm1113, 1, 0
        %v1626 = vsel %vm1114, 1, 0
        %v1627 = vsel %vm1115, 1, 0
        %v1628 = vsel %vm1116, 1, 0
        %v1629 = vsel %vm1117, 1, 0
        %v1630 = vsel %vm1118, 1, 0
        %v1631 = vsel %vm1119, 1, 0
        %v1632 = vsel %vm1120, 1, 0
        %v1633 = vsel %vm1121, 1, 0
        %v1634 = vsel %vm1122, 1, 0
        %v1635 = vsel %vm1123, 1, 0
        %v1636 = vsel %vm1124, 1, 0
        %v1637 = vsel %vm1125, 1, 0
        %v1638 = vsel %vm1126, 1, 0
        %v1639 = vsel %vm1127, 1, 0
        %v1640 = vsel %vm1128, 1, 0
        %v1641 = vsel %vm1129, 1, 0
        %v1642 = vsel %vm1130, 1, 0
        %v1643 = vsel %vm1131, 1, 0
        %v1644 = vsel %vm1132, 1, 0
        %v1645 = vsel %vm1133, 1, 0
        %v1646 = vsel %vm1134, 1, 0
        %v1647 = vsel %vm1135, 1, 0
        %v1648 = vsel %vm1136, 1, 0
        %v1649 = vsel %vm1137, 1, 0
        %v1650 = vsel %vm1138, 1, 0
        %v1651 = vsel %vm1139, 1, 0
        %v1652 = vsel %vm1140, 1, 0
        %v1653 = vsel %vm1141, 1, 0
        %v1654 = vsel %vm1142, 1, 0
        %v1655 = vsel %vm1143, 1, 0
        %v1656 = vsel %vm1144, 1, 0
        %v1657 = vsel %vm1145, 1, 0
        %v1658 = vsel %vm1146, 1, 0
        %v1659 = vsel %vm1147, 1, 0
        %v1660 = vsel %vm1148, 1, 0
        %v1661 = vsel %vm1149, 1, 0
        %v1662 = vsel %vm1150, 1, 0
        %v1663 = vsel %vm1151, 1, 0
        %v1664 = vsel %vm1152, 1, 0
        %v1665 = vsel %vm1153, 1, 0
        %v1666 = vsel %vm1154, 1, 0
        %v1667 = vsel %vm1155, 1, 0
        %v1668 = vsel %vm1156, 1, 0
        %v1669 = vsel %vm1157, 1, 0
        %v1670 = vsel %vm1158, 1, 0
        %v1671 = vsel %vm1159, 1, 0
        %v1672 = vsel %vm1160, 1, 0
        %v1673 = vsel %vm1161, 1, 0
        %v1674 = vsel %vm1162, 1, 0
        %v1675 = vsel %vm1163, 1, 0
        %v1676 = vsel %vm1164, 1, 0
        %v1677 = vsel %vm1165, 1, 0
        %v1678 = vsel %vm1166, 1, 0
        %v1679 = vsel %vm1167, 1, 0
        %v1680 = vsel %vm1168, 1, 0
        %v1681 = vsel %vm1169, 1, 0
        %v1682 = vsel %vm1170, 1, 0
        %v1683 = vsel %vm1171, 1, 0
        %v1684 = vsel %vm1172, 1, 0
        %v1685 = vsel %vm1173, 1, 0
        %v1686 = vsel %vm1174, 1, 0
        %v1687 = vsel %vm1175, 1, 0
        %v1688 = vsel %vm1176, 1, 0
        %v1689 = vsel %vm1177, 1, 0
        %v1690 = vsel %vm1178, 1, 0
        %v1691 = vsel %vm1179, 1, 0
        %v1692 = vsel %vm1180, 1, 0
        %v1693 = vsel %vm1181, 1, 0
        %v1694 = vsel %vm1182, 1, 0
        %v1695 = vsel %vm1183, 1, 0
        %v1696 = vsel %vm1184, 1, 0
        %v1697 = vsel %vm1185, 1, 0
        %v1698 = vsel %vm1186, 1, 0
        %v1699 = vsel %vm1187, 1, 0
        %v1700 = vsel %vm1188, 1, 0
        %v1701 = vsel %vm1189, 1, 0
        %v1702 = vsel %vm1190, 1, 0
        %v1703 = vsel %vm1191, 1, 0
        %v1704 = vsel %vm1192, 1, 0
        %v1705 = vsel %vm1193, 1, 0
        %v1706 = vsel %vm1194, 1, 0
        %v1707 = vsel %vm1195, 1, 0
        %v1708 = vsel %vm1196, 1, 0
        %v1709 = vsel %vm1197, 1, 0
        %v1710 = vsel %vm1198, 1, 0
        %v1711 = vsel %vm1199, 1, 0
        %v1712 = vsel %vm1200, 1, 0
        %v1713 = vsel %vm1201, 1, 0
        %v1714 = vsel %vm1202, 1, 0
        %v1715 = vsel %vm1203, 1, 0
        %v1716 = vsel %vm1204, 1, 0
        %v1717 = vsel %vm1205, 1, 0
        %v1718 = vsel %vm1206, 1, 0
        %v1719 = vsel %vm1207, 1, 0
        %v1720 = vsel %vm1208, 1, 0
        %v1721 = vsel %vm1209, 1, 0
        %v1722 = vsel %vm1210, 1, 0
        %v1723 = vsel %vm1211, 1, 0
        %v1724 = vsel %vm1212, 1, 0
        %v1725 = vsel %vm1213, 1, 0
        %v1726 = vsel %vm1214, 1, 0
        %v1727 = vsel %vm1215, 1, 0
        %v1728 = vsel %vm1216, 1, 0
        %v1729 = vsel %vm1217, 1, 0
        %v1730 = vsel %vm1218, 1, 0
        %v1731 = vsel %vm1219, 1, 0
        %v1732 = vsel %vm1220, 1, 0
        %v1733 = vsel %vm1221, 1, 0
        %v1734 = vsel %vm1222, 1, 0
        %v1735 = vsel %vm1223, 1, 0
        %v1736 = vsel %vm1224, 1, 0
        %v1737 = vsel %vm1225, 1, 0
        %v1738 = vsel %vm1226, 1, 0
        %v1739 = vsel %vm1227, 1, 0
        %v1740 = vsel %vm1228, 1, 0
        %v1741 = vsel %vm1229, 1, 0
        %v1742 = vsel %vm1230, 1, 0
        %v1743 = vsel %vm1231, 1, 0
        %v1744 = vsel %vm1232, 1, 0
        %v1745 = vsel %vm1233, 1, 0
        %v1746 = vsel %vm1234, 1, 0
        %v1747 = vsel %vm1235, 1, 0
        %v1748 = vsel %vm1236, 1, 0
        %v1749 = vsel %vm1237, 1, 0
        %v1750 = vsel %vm1238, 1, 0
        %v1751 = vsel %vm1239, 1, 0
        %v1752 = vsel %vm1240, 1, 0
        %v1753 = vsel %vm1241, 1, 0
        %v1754 = vsel %vm1242, 1, 0
        %v1755 = vsel %vm1243, 1, 0
        %v1756 = vsel %vm1244, 1, 0
        %v1757 = vsel %vm1245, 1, 0
        %v1758 = vsel %vm1246, 1, 0
        %v1759 = vsel %vm1247, 1, 0
        %v1760 = vsel %vm1248, 1, 0
        %v1761 = vsel %vm1249, 1, 0
        %v1762 = vsel %vm1250, 1, 0
        %v1763 = vsel %vm1251, 1, 0
        %v1764 = vsel %vm1252, 1, 0
        %v1765 = vsel %vm1253, 1, 0
        %v1766 = vsel %vm1254, 1, 0
        %v1767 = vsel %vm1255, 1, 0
        %v1768 = vsel %vm1256, 1, 0
        %v1769 = vsel %vm1257, 1, 0
        %v1770 = vsel %vm1258, 1, 0
        %v1771 = vsel %vm1259, 1, 0
        %v1772 = vsel %vm1260, 1, 0
        %v1773 = vsel %vm1261, 1, 0
        %v1774 = vsel %vm1262, 1, 0
        %v1775 = vsel %vm1263, 1, 0
        %v1776 = vsel %vm1264, 1, 0
        %v1777 = vsel %vm1265, 1, 0
        %v1778 = vsel %vm1266, 1, 0
        %v1779 = vsel %vm1267, 1, 0
        %v1780 = vsel %vm1268, 1, 0
        %v1781 = vsel %vm1269, 1, 0
        %v1782 = vsel %vm1270, 1, 0
        %v1783 = vsel %vm1271, 1, 0
        %v1784 = vsel %vm1272, 1, 0
        %v1785 = vsel %vm1273, 1, 0
        %v1786 = vsel %vm1274, 1, 0
        %v1787 = vsel %vm1275, 1, 0
        %v1788 = vsel %vm1276, 1, 0
        %v1789 = vsel %vm1277, 1, 0
        %v1790 = vsel %vm1278, 1, 0
        %v1791 = vsel %vm1279, 1, 0
        %v1792 = vsel %vm1280, 1, 0
        %v1793 = vsel %vm1281, 1, 0
        %v1794 = vsel %vm1282, 1, 0
        %v1795 = vsel %vm1283, 1, 0
        %v1796 = vsel %vm1284, 1, 0
        %v1797 = vsel %vm1285, 1, 0
        %v1798 = vsel %vm1286, 1, 0
        %v1799 = vsel %vm1287, 1, 0
        %v1800 = vsel %vm1288, 1, 0
        %v1801 = vsel %vm1289, 1, 0
        %v1802 = vsel %vm1290, 1, 0
        %v1803 = vsel %vm1291, 1, 0
        %v1804 = vsel %vm1292, 1, 0
        %v1805 = vsel %vm1293, 1, 0
        %v1806 = vsel %vm1294, 1, 0
        %v1807 = vsel %vm1295, 1, 0
        %v1808 = vsel %vm1296, 1, 0
        %v1809 = vsel %vm1297, 1, 0
        %v1810 = vsel %vm1298, 1, 0
        %v1811 = vsel %vm1299, 1, 0
        %v1812 = vsel %vm1300, 1, 0
        %v1813 = vsel %vm1301, 1, 0
        %v1814 = vsel %vm1302, 1, 0
        %v1815 = vsel %vm1303, 1, 0
        %v1816 = vsel %vm1304, 1, 0
        %v1817 = vsel %vm1305, 1, 0
        %v1818 = vsel %vm1306, 1, 0
        %v1819 = vsel %vm1307, 1, 0
        %v1820 = vsel %vm1308, 1, 0
        %v1821 = vsel %vm1309, 1, 0
        %v1822 = vsel %vm1310, 1, 0
        %v1823 = vsel %vm1311, 1, 0
        %v1824 = vsel %vm1312, 1, 0
        %v1825 = vsel %vm1313, 1, 0
        %v1826 = vsel %vm1314, 1, 0
        %v1827 = vsel %vm1315, 1, 0
        %v1828 = vsel %vm1316, 1, 0
        %v1829 = vsel %vm1317, 1, 0
        %v1830 = vsel %vm1318, 1, 0
        %v1831 = vsel %vm1319, 1, 0
        %v1832 = vsel %vm1320, 1, 0
        %v1833 = vsel %vm1321, 1, 0
        %v1834 = vsel %vm1322, 1, 0
        %v1835 = vsel %vm1323, 1, 0
        %v1836 = vsel %vm1324, 1, 0
        %v1837 = vsel %vm1325, 1, 0
        %v1838 = vsel %vm1326, 1, 0
        %v1839 = vsel %vm1327, 1, 0
        %v1840 = vsel %vm1328, 1, 0
        %v1841 = vsel %vm1329, 1, 0
        %v1842 = vsel %vm1330, 1, 0
        %v1843 = vsel %vm1331, 1, 0
        %v1844 = vsel %vm1332, 1, 0
        %v1845 = vsel %vm1333, 1, 0
        %v1846 = vsel %vm1334, 1, 0
        %v1847 = vsel %vm1335, 1, 0
        %v1848 = vsel %vm1336, 1, 0
        %v1849 = vsel %vm1337, 1, 0
        %v1850 = vsel %vm1338, 1, 0
        %v1851 = vsel %vm1339, 1, 0
        %v1852 = vsel %vm1340, 1, 0
        %v1853 = vsel %vm1341, 1, 0
        %v1854 = vsel %vm1342, 1, 0
        %v1855 = vsel %vm1343, 1, 0
        %v1856 = vsel %vm1344, 1, 0
        %v1857 = vsel %vm1345, 1, 0
        %v1858 = vsel %vm1346, 1, 0
        %v1859 = vsel %vm1347, 1, 0
        %v1860 = vsel %vm1348, 1, 0
        %v1861 = vsel %vm1349, 1, 0
        %v1862 = vsel %vm1350, 1, 0
        %v1863 = vsel %vm1351, 1, 0
        %v1864 = vsel %vm1352, 1, 0
        %v1865 = vsel %vm1353, 1, 0
        %v1866 = vsel %vm1354, 1, 0
        %v1867 = vsel %vm1355, 1, 0
        %v1868 = vsel %vm1356, 1, 0
        %v1869 = vsel %vm1357, 1, 0
        %v1870 = vsel %vm1358, 1, 0
        %v1871 = vsel %vm1359, 1, 0
        %v1872 = vsel %vm1360, 1, 0
        %v1873 = vsel %vm1361, 1, 0
        %v1874 = vsel %vm1362, 1, 0
        %v1875 = vsel %vm1363, 1, 0
        %v1876 = vsel %vm1364, 1, 0
        %v1877 = vsel %vm1365, 1, 0
        %v1878 = vsel %vm1366, 1, 0
        %v1879 = vsel %vm1367, 1, 0
        %v1880 = vsel %vm1368, 1, 0
        %v1881 = vsel %vm1369, 1, 0
        %v1882 = vsel %vm1370, 1, 0
        %v1883 = vsel %vm1371, 1, 0
        %v1884 = vsel %vm1372, 1, 0
        %v1885 = vsel %vm1373, 1, 0
        %v1886 = vsel %vm1374, 1, 0
        %v1887 = vsel %vm1375, 1, 0
        %v1888 = vsel %vm1376, 1, 0
        %v1889 = vsel %vm1377, 1, 0
        %v1890 = vsel %vm1378, 1, 0
        %v1891 = vsel %vm1379, 1, 0
        %v1892 = vsel %vm1380, 1, 0
        %v1893 = vsel %vm1381, 1, 0
        %v1894 = vsel %vm1382, 1, 0
        %v1895 = vsel %vm1383, 1, 0
        %v1896 = vsel %vm1384, 1, 0
        %v1897 = vsel %vm1385, 1, 0
        %v1898 = vsel %vm1386, 1, 0
        %v1899 = vsel %vm1387, 1, 0
        %v1900 = vsel %vm1388, 1, 0
        %v1901 = vsel %vm1389, 1, 0
        %v1902 = vsel %vm1390, 1, 0
        %v1903 = vsel %vm1391, 1, 0
        %v1904 = vsel %vm1392, 1, 0
        %v1905 = vsel %vm1393, 1, 0
        %v1906 = vsel %vm1394, 1, 0
        %v1907 = vsel %vm1395, 1, 0
        %v1908 = vsel %vm1396, 1, 0
        %v1909 = vsel %vm1397, 1, 0
        %v1910 = vsel %vm1398, 1, 0
        %v1911 = vsel %vm1399, 1, 0
        %v1912 = vsel %vm1400, 1, 0
        %v1913 = vsel %vm1401, 1, 0
        %v1914 = vsel %vm1402, 1, 0
        %v1915 = vsel %vm1403, 1, 0
        %v1916 = vsel %vm1404, 1, 0
        %v1917 = vsel %vm1405, 1, 0
        %v1918 = vsel %vm1406, 1, 0
        %v1919 = vsel %vm1407, 1, 0
        %v1920 = vsel %vm1408, 1, 0
        %v1921 = vsel %vm1409, 1, 0
        %v1922 = vsel %vm1410, 1, 0
        %v1923 = vsel %vm1411, 1, 0
        %v1924 = vsel %vm1412, 1, 0
        %v1925 = vsel %vm1413, 1, 0
        %v1926 = vsel %vm1414, 1, 0
        %v1927 = vsel %vm1415, 1, 0
        %v1928 = vsel %vm1416, 1, 0
        %v1929 = vsel %vm1417, 1, 0
        %v1930 = vsel %vm1418, 1, 0
        %v1931 = vsel %vm1419, 1, 0
        %v1932 = vsel %vm1420, 1, 0
        %v1933 = vsel %vm1421, 1, 0
        %v1934 = vsel %vm1422, 1, 0
        %v1935 = vsel %vm1423, 1, 0
        %v1936 = vsel %vm1424, 1, 0
        %v1937 = vsel %vm1425, 1, 0
        %v1938 = vsel %vm1426, 1, 0
        %v1939 = vsel %vm1427, 1, 0
        %v1940 = vsel %vm1428, 1, 0
        %v1941 = vsel %vm1429, 1, 0
        %v1942 = vsel %vm1430, 1, 0
        %v1943 = vsel %vm1431, 1, 0
        %v1944 = vsel %vm1432, 1, 0
        %v1945 = vsel %vm1433, 1, 0
        %v1946 = vsel %vm1434, 1, 0
        %v1947 = vsel %vm1435, 1, 0
        %v1948 = vsel %vm1436, 1, 0
        %v1949 = vsel %vm1437, 1, 0
        %v1950 = vsel %vm1438, 1, 0
        %v1951 = vsel %vm1439, 1, 0
        %v1952 = vsel %vm1440, 1, 0
        %v1953 = vsel %vm1441, 1, 0
        %v1954 = vsel %vm1442, 1, 0
        %v1955 = vsel %vm1443, 1, 0
        %v1956 = vsel %vm1444, 1, 0
        %v1957 = vsel %vm1445, 1, 0
        %v1958 = vsel %vm1446, 1, 0
        %v1959 = vsel %vm1447, 1, 0
        %v1960 = vsel %vm1448, 1, 0
        %v1961 = vsel %vm1449, 1, 0
        %v1962 = vsel %vm1450, 1, 0
        %v1963 = vsel %vm1451, 1, 0
        %v1964 = vsel %vm1452, 1, 0
        %v1965 = vsel %vm1453, 1, 0
        %v1966 = vsel %vm1454, 1, 0
        %v1967 = vsel %vm1455, 1, 0
        %v1968 = vsel %vm1456, 1, 0
        %v1969 = vsel %vm1457, 1, 0
        %v1970 = vsel %vm1458, 1, 0
        %v1971 = vsel %vm1459, 1, 0
        %v1972 = vsel %vm1460, 1, 0
        %v1973 = vsel %vm1461, 1, 0
        %v1974 = vsel %vm1462, 1, 0
        %v1975 = vsel %vm1463, 1, 0
        %v1976 = vsel %vm1464, 1, 0
        %v1977 = vsel %vm1465, 1, 0
        %v1978 = vsel %vm1466, 1, 0
        %v1979 = vsel %vm1467, 1, 0
        %v1980 = vsel %vm1468, 1, 0
        %v1981 = vsel %vm1469, 1, 0
        %v1982 = vsel %vm1470, 1, 0
        %v1983 = vsel %vm1471, 1, 0
        %v1984 = vsel %vm1472, 1, 0
        %v1985 = vsel %vm1473, 1, 0
        %v1986 = vsel %vm1474, 1, 0
        %v1987 = vsel %vm1475, 1, 0
        %v1988 = vsel %vm1476, 1, 0
        %v1989 = vsel %vm1477, 1, 0
        %v1990 = vsel %vm1478, 1, 0
        %v1991 = vsel %vm1479, 1, 0
        %v1992 = vsel %vm1480, 1, 0
        %v1993 = vsel %vm1481, 1, 0
        %v1994 = vsel %vm1482, 1, 0
        %v1995 = vsel %vm1483, 1, 0
        %v1996 = vsel %vm1484, 1, 0
        %v1997 = vsel %vm1485, 1, 0
        %v1998 = vsel %vm1486, 1, 0
        %v1999 = vsel %vm1487, 1, 0
        %v2000 = vsel %vm1488, 1, 0
        %v2001 = vsel %vm1489, 1, 0
        %v2002 = vsel %vm1490, 1, 0
        %v2003 = vsel %vm1491, 1, 0
        %v2004 = vsel %vm1492, 1, 0
        %v2005 = vsel %vm1493, 1, 0
        %v2006 = vsel %vm1494, 1, 0
        %v2007 = vsel %vm1495, 1, 0
        %v2008 = vsel %vm1496, 1, 0
        %v2009 = vsel %vm1497, 1, 0
        %v2010 = vsel %vm1498, 1, 0
        %v2011 = vsel %vm1499, 1, 0
        %v2012 = vsel %vm1500, 1, 0
        %v2013 = vsel %vm1501, 1, 0
        %v2014 = vsel %vm1502, 1, 0
        %v2015 = vsel %vm1503, 1, 0
        %v2016 = vsel %vm1504, 1, 0
        %v2017 = vsel %vm1505, 1, 0
        %v2018 = vsel %vm1506, 1, 0
        %v2019 = vsel %vm1507, 1, 0
        %v2020 = vsel %vm1508, 1, 0
        %v2021 = vsel %vm1509, 1, 0
        %v2022 = vsel %vm1510, 1, 0
        %v2023 = vsel %vm1511, 1, 0
        %v2024 = vsel %vm1512, 1, 0
        %v2025 = vsel %vm1513, 1, 0
        %v2026 = vsel %vm1514, 1, 0
        %v2027 = vsel %vm1515, 1, 0
        %v2028 = vsel %vm1516, 1, 0
        %v2029 = vsel %vm1517, 1, 0
        %v2030 = vsel %vm1518, 1, 0
        %v2031 = vsel %vm1519, 1, 0
        %v2032 = vsel %vm1520, 1, 0
        %v2033 = vsel %vm1521, 1, 0
        %v2034 = vsel %vm1522, 1, 0
        %v2035 = vsel %vm1523, 1, 0
        %v2036 = vsel %vm1524, 1, 0
        %v2037 = vsel %vm1525, 1, 0
        %v2038 = vsel %vm1526, 1, 0
        %v2039 = vsel %vm1527, 1, 0
        %v2040 = vsel %vm1528, 1, 0
        %v2041 = vsel %vm1529, 1, 0
        %v2042 = vsel %vm1530, 1, 0
        %v2043 = vsel %vm1531, 1, 0
        %v2044 = vsel %vm1532, 1, 0
        %v2045 = vsel %vm1533, 1, 0
        %v2046 = vsel %vm1534, 1, 0
        %v2047 = vsel %vm1535, 1, 0
        %v2048 = vsel %vm1536, 1, 0
        %v2049 = vsel %vm1537, 1, 0
        %v2050 = vsel %vm1538, 1, 0
        %v2051 = vsel %vm1539, 1, 0
        %v2052 = vsel %vm1540, 1, 0
        %v2053 = vsel %vm1541, 1, 0
        %v2054 = vsel %vm1542, 1, 0
        %v2055 = vsel %vm1543, 1, 0
        %v2056 = vsel %vm1544, 1, 0
        %v2057 = vsel %vm1545, 1, 0
        %v2058 = vsel %vm1546, 1, 0
        %v2059 = vsel %vm1547, 1, 0
        %v2060 = vsel %vm1548, 1, 0
        %v2061 = vsel %vm1549, 1, 0
        %v2062 = vsel %vm1550, 1, 0
        %v2063 = vsel %vm1551, 1, 0
        %v2064 = vsel %vm1552, 1, 0
        %v2065 = vsel %vm1553, 1, 0
        %v2066 = vsel %vm1554, 1, 0
        %v2067 = vsel %vm1555, 1, 0
        %v2068 = vsel %vm1556, 1, 0
        %v2069 = vsel %vm1557, 1, 0
        %v2070 = vsel %vm1558, 1, 0
        %v2071 = vsel %vm1559, 1, 0
        %v2072 = vsel %vm1560, 1, 0
        %v2073 = vsel %vm1561, 1, 0
        %v2074 = vsel %vm1562, 1, 0
        %v2075 = vsel %vm1563, 1, 0
        %v2076 = vsel %vm1564, 1, 0
        %v2077 = vcvt.s32.f32 %v1565
        %v2078 = vcvt.s32.f32 %v1566
        %v2079 = vcvt.s32.f32 %v1567
        %v2080 = vcvt.s32.f32 %v1568
        %v2081 = vcvt.s32.f32 %v1569
        %v2082 = vcvt.s32.f32 %v1570
        %v2083 = vcvt.s32.f32 %v1571
        %v2084 = vcvt.s32.f32 %v1572
        %v2085 = vcvt.s32.f32 %v1573
        %v2086 = vcvt.s32.f32 %v1574
        %v2087 = vcvt.s32.f32 %v1575
        %v2088 = vcvt.s32.f32 %v1576
        %v2089 = vcvt.s32.f32 %v1577
        %v2090 = vcvt.s32.f32 %v1578
        %v2091 = vcvt.s32.f32 %v1579
        %v2092 = vcvt.s32.f32 %v1580
        %v2093 = vcvt.s32.f32 %v1581
        %v2094 = vcvt.s32.f32 %v1582
        %v2095 = vcvt.s32.f32 %v1583
        %v2096 = vcvt.s32.f32 %v1584
        %v2097 = vcvt.s32.f32 %v1585
        %v2098 = vcvt.s32.f32 %v1586
        %v2099 = vcvt.s32.f32 %v1587
        %v2100 = vcvt.s32.f32 %v1588
        %v2101 = vcvt.s32.f32 %v1589
        %v2102 = vcvt.s32.f32 %v1590
        %v2103 = vcvt.s32.f32 %v1591
        %v2104 = vcvt.s32.f32 %v1592
        %v2105 = vcvt.s32.f32 %v1593
        %v2106 = vcvt.s32.f32 %v1594
        %v2107 = vcvt.s32.f32 %v1595
        %v2108 = vcvt.s32.f32 %v1596
        %v2109 = vcvt.s32.f32 %v1597
        %v2110 = vcvt.s32.f32 %v1598
        %v2111 = vcvt.s32.f32 %v1599
        %v2112 = vcvt.s32.f32 %v1600
        %v2113 = vcvt.s32.f32 %v1601
        %v2114 = vcvt.s32.f32 %v1602
        %v2115 = vcvt.s32.f32 %v1603
        %v2116 = vcvt.s32.f32 %v1604
        %v2117 = vcvt.s32.f32 %v1605
        %v2118 = vcvt.s32.f32 %v1606
        %v2119 = vcvt.s32.f32 %v1607
        %v2120 = vcvt.s32.f32 %v1608
        %v2121 = vcvt.s32.f32 %v1609
        %v2122 = vcvt.s32.f32 %v1610
        %v2123 = vcvt.s32.f32 %v1611
        %v2124 = vcvt.s32.f32 %v1612
        %v2125 = vcvt.s32.f32 %v1613
        %v2126 = vcvt.s32.f32 %v1614
        %v2127 = vcvt.s32.f32 %v1615
        %v2128 = vcvt.s32.f32 %v1616
        %v2129 = vcvt.s32.f32 %v1617
        %v2130 = vcvt.s32.f32 %v1618
        %v2131 = vcvt.s32.f32 %v1619
        %v2132 = vcvt.s32.f32 %v1620
        %v2133 = vcvt.s32.f32 %v1621
        %v2134 = vcvt.s32.f32 %v1622
        %v2135 = vcvt.s32.f32 %v1623
        %v2136 = vcvt.s32.f32 %v1624
        %v2137 = vcvt.s32.f32 %v1625
        %v2138 = vcvt.s32.f32 %v1626
        %v2139 = vcvt.s32.f32 %v1627
        %v2140 = vcvt.s32.f32 %v1628
        %v2141 = vcvt.s32.f32 %v1629
        %v2142 = vcvt.s32.f32 %v1630
        %v2143 = vcvt.s32.f32 %v1631
        %v2144 = vcvt.s32.f32 %v1632
        %v2145 = vcvt.s32.f32 %v1633
        %v2146 = vcvt.s32.f32 %v1634
        %v2147 = vcvt.s32.f32 %v1635
        %v2148 = vcvt.s32.f32 %v1636
        %v2149 = vcvt.s32.f32 %v1637
        %v2150 = vcvt.s32.f32 %v1638
        %v2151 = vcvt.s32.f32 %v1639
        %v2152 = vcvt.s32.f32 %v1640
        %v2153 = vcvt.s32.f32 %v1641
        %v2154 = vcvt.s32.f32 %v1642
        %v2155 = vcvt.s32.f32 %v1643
        %v2156 = vcvt.s32.f32 %v1644
        %v2157 = vcvt.s32.f32 %v1645
        %v2158 = vcvt.s32.f32 %v1646
        %v2159 = vcvt.s32.f32 %v1647
        %v2160 = vcvt.s32.f32 %v1648
        %v2161 = vcvt.s32.f32 %v1649
        %v2162 = vcvt.s32.f32 %v1650
        %v2163 = vcvt.s32.f32 %v1651
        %v2164 = vcvt.s32.f32 %v1652
        %v2165 = vcvt.s32.f32 %v1653
        %v2166 = vcvt.s32.f32 %v1654
        %v2167 = vcvt.s32.f32 %v1655
        %v2168 = vcvt.s32.f32 %v1656
        %v2169 = vcvt.s32.f32 %v1657
        %v2170 = vcvt.s32.f32 %v1658
        %v2171 = vcvt.s32.f32 %v1659
        %v2172 = vcvt.s32.f32 %v1660
        %v2173 = vcvt.s32.f32 %v1661
        %v2174 = vcvt.s32.f32 %v1662
        %v2175 = vcvt.s32.f32 %v1663
        %v2176 = vcvt.s32.f32 %v1664
        %v2177 = vcvt.s32.f32 %v1665
        %v2178 = vcvt.s32.f32 %v1666
        %v2179 = vcvt.s32.f32 %v1667
        %v2180 = vcvt.s32.f32 %v1668
        %v2181 = vcvt.s32.f32 %v1669
        %v2182 = vcvt.s32.f32 %v1670
        %v2183 = vcvt.s32.f32 %v1671
        %v2184 = vcvt.s32.f32 %v1672
        %v2185 = vcvt.s32.f32 %v1673
        %v2186 = vcvt.s32.f32 %v1674
        %v2187 = vcvt.s32.f32 %v1675
        %v2188 = vcvt.s32.f32 %v1676
        %v2189 = vcvt.s32.f32 %v1677
        %v2190 = vcvt.s32.f32 %v1678
        %v2191 = vcvt.s32.f32 %v1679
        %v2192 = vcvt.s32.f32 %v1680
        %v2193 = vcvt.s32.f32 %v1681
        %v2194 = vcvt.s32.f32 %v1682
        %v2195 = vcvt.s32.f32 %v1683
        %v2196 = vcvt.s32.f32 %v1684
        %v2197 = vcvt.s32.f32 %v1685
        %v2198 = vcvt.s32.f32 %v1686
        %v2199 = vcvt.s32.f32 %v1687
        %v2200 = vcvt.s32.f32 %v1688
        %v2201 = vcvt.s32.f32 %v1689
        %v2202 = vcvt.s32.f32 %v1690
        %v2203 = vcvt.s32.f32 %v1691
        %v2204 = vcvt.s32.f32 %v1692
        %v2205 = vcvt.s32.f32 %v1693
        %v2206 = vcvt.s32.f32 %v1694
        %v2207 = vcvt.s32.f32 %v1695
        %v2208 = vcvt.s32.f32 %v1696
        %v2209 = vcvt.s32.f32 %v1697
        %v2210 = vcvt.s32.f32 %v1698
        %v2211 = vcvt.s32.f32 %v1699
        %v2212 = vcvt.s32.f32 %v1700
        %v2213 = vcvt.s32.f32 %v1701
        %v2214 = vcvt.s32.f32 %v1702
        %v2215 = vcvt.s32.f32 %v1703
        %v2216 = vcvt.s32.f32 %v1704
        %v2217 = vcvt.s32.f32 %v1705
        %v2218 = vcvt.s32.f32 %v1706
        %v2219 = vcvt.s32.f32 %v1707
        %v2220 = vcvt.s32.f32 %v1708
        %v2221 = vcvt.s32.f32 %v1709
        %v2222 = vcvt.s32.f32 %v1710
        %v2223 = vcvt.s32.f32 %v1711
        %v2224 = vcvt.s32.f32 %v1712
        %v2225 = vcvt.s32.f32 %v1713
        %v2226 = vcvt.s32.f32 %v1714
        %v2227 = vcvt.s32.f32 %v1715
        %v2228 = vcvt.s32.f32 %v1716
        %v2229 = vcvt.s32.f32 %v1717
        %v2230 = vcvt.s32.f32 %v1718
        %v2231 = vcvt.s32.f32 %v1719
        %v2232 = vcvt.s32.f32 %v1720
        %v2233 = vcvt.s32.f32 %v1721
        %v2234 = vcvt.s32.f32 %v1722
        %v2235 = vcvt.s32.f32 %v1723
        %v2236 = vcvt.s32.f32 %v1724
        %v2237 = vcvt.s32.f32 %v1725
        %v2238 = vcvt.s32.f32 %v1726
        %v2239 = vcvt.s32.f32 %v1727
        %v2240 = vcvt.s32.f32 %v1728
        %v2241 = vcvt.s32.f32 %v1729
        %v2242 = vcvt.s32.f32 %v1730
        %v2243 = vcvt.s32.f32 %v1731
        %v2244 = vcvt.s32.f32 %v1732
        %v2245 = vcvt.s32.f32 %v1733
        %v2246 = vcvt.s32.f32 %v1734
        %v2247 = vcvt.s32.f32 %v1735
        %v2248 = vcvt.s32.f32 %v1736
        %v2249 = vcvt.s32.f32 %v1737
        %v2250 = vcvt.s32.f32 %v1738
        %v2251 = vcvt.s32.f32 %v1739
        %v2252 = vcvt.s32.f32 %v1740
        %v2253 = vcvt.s32.f32 %v1741
        %v2254 = vcvt.s32.f32 %v1742
        %v2255 = vcvt.s32.f32 %v1743
        %v2256 = vcvt.s32.f32 %v1744
        %v2257 = vcvt.s32.f32 %v1745
        %v2258 = vcvt.s32.f32 %v1746
        %v2259 = vcvt.s32.f32 %v1747
        %v2260 = vcvt.s32.f32 %v1748
        %v2261 = vcvt.s32.f32 %v1749
        %v2262 = vcvt.s32.f32 %v1750
        %v2263 = vcvt.s32.f32 %v1751
        %v2264 = vcvt.s32.f32 %v1752
        %v2265 = vcvt.s32.f32 %v1753
        %v2266 = vcvt.s32.f32 %v1754
        %v2267 = vcvt.s32.f32 %v1755
        %v2268 = vcvt.s32.f32 %v1756
        %v2269 = vcvt.s32.f32 %v1757
        %v2270 = vcvt.s32.f32 %v1758
        %v2271 = vcvt.s32.f32 %v1759
        %v2272 = vcvt.s32.f32 %v1760
        %v2273 = vcvt.s32.f32 %v1761
        %v2274 = vcvt.s32.f32 %v1762
        %v2275 = vcvt.s32.f32 %v1763
        %v2276 = vcvt.s32.f32 %v1764
        %v2277 = vcvt.s32.f32 %v1765
        %v2278 = vcvt.s32.f32 %v1766
        %v2279 = vcvt.s32.f32 %v1767
        %v2280 = vcvt.s32.f32 %v1768
        %v2281 = vcvt.s32.f32 %v1769
        %v2282 = vcvt.s32.f32 %v1770
        %v2283 = vcvt.s32.f32 %v1771
        %v2284 = vcvt.s32.f32 %v1772
        %v2285 = vcvt.s32.f32 %v1773
        %v2286 = vcvt.s32.f32 %v1774
        %v2287 = vcvt.s32.f32 %v1775
        %v2288 = vcvt.s32.f32 %v1776
        %v2289 = vcvt.s32.f32 %v1777
        %v2290 = vcvt.s32.f32 %v1778
        %v2291 = vcvt.s32.f32 %v1779
        %v2292 = vcvt.s32.f32 %v1780
        %v2293 = vcvt.s32.f32 %v1781
        %v2294 = vcvt.s32.f32 %v1782
        %v2295 = vcvt.s32.f32 %v1783
        %v2296 = vcvt.s32.f32 %v1784
        %v2297 = vcvt.s32.f32 %v1785
        %v2298 = vcvt.s32.f32 %v1786
        %v2299 = vcvt.s32.f32 %v1787
        %v2300 = vcvt.s32.f32 %v1788
        %v2301 = vcvt.s32.f32 %v1789
        %v2302 = vcvt.s32.f32 %v1790
        %v2303 = vcvt.s32.f32 %v1791
        %v2304 = vcvt.s32.f32 %v1792
        %v2305 = vcvt.s32.f32 %v1793
        %v2306 = vcvt.s32.f32 %v1794
        %v2307 = vcvt.s32.f32 %v1795
        %v2308 = vcvt.s32.f32 %v1796
        %v2309 = vcvt.s32.f32 %v1797
        %v2310 = vcvt.s32.f32 %v1798
        %v2311 = vcvt.s32.f32 %v1799
        %v2312 = vcvt.s32.f32 %v1800
        %v2313 = vcvt.s32.f32 %v1801
        %v2314 = vcvt.s32.f32 %v1802
        %v2315 = vcvt.s32.f32 %v1803
        %v2316 = vcvt.s32.f32 %v1804
        %v2317 = vcvt.s32.f32 %v1805
        %v2318 = vcvt.s32.f32 %v1806
        %v2319 = vcvt.s32.f32 %v1807
        %v2320 = vcvt.s32.f32 %v1808
        %v2321 = vcvt.s32.f32 %v1809
        %v2322 = vcvt.s32.f32 %v1810
        %v2323 = vcvt.s32.f32 %v1811
        %v2324 = vcvt.s32.f32 %v1812
        %v2325 = vcvt.s32.f32 %v1813
        %v2326 = vcvt.s32.f32 %v1814
        %v2327 = vcvt.s32.f32 %v1815
        %v2328 = vcvt.s32.f32 %v1816
        %v2329 = vcvt.s32.f32 %v1817
        %v2330 = vcvt.s32.f32 %v1818
        %v2331 = vcvt.s32.f32 %v1819
        %v2332 = vcvt.s32.f32 %v1820
        %v2333 = vcvt.s32.f32 %v1821
        %v2334 = vcvt.s32.f32 %v1822
        %v2335 = vcvt.s32.f32 %v1823
        %v2336 = vcvt.s32.f32 %v1824
        %v2337 = vcvt.s32.f32 %v1825
        %v2338 = vcvt.s32.f32 %v1826
        %v2339 = vcvt.s32.f32 %v1827
        %v2340 = vcvt.s32.f32 %v1828
        %v2341 = vcvt.s32.f32 %v1829
        %v2342 = vcvt.s32.f32 %v1830
        %v2343 = vcvt.s32.f32 %v1831
        %v2344 = vcvt.s32.f32 %v1832
        %v2345 = vcvt.s32.f32 %v1833
        %v2346 = vcvt.s32.f32 %v1834
        %v2347 = vcvt.s32.f32 %v1835
        %v2348 = vcvt.s32.f32 %v1836
        %v2349 = vcvt.s32.f32 %v1837
        %v2350 = vcvt.s32.f32 %v1838
        %v2351 = vcvt.s32.f32 %v1839
        %v2352 = vcvt.s32.f32 %v1840
        %v2353 = vcvt.s32.f32 %v1841
        %v2354 = vcvt.s32.f32 %v1842
        %v2355 = vcvt.s32.f32 %v1843
        %v2356 = vcvt.s32.f32 %v1844
        %v2357 = vcvt.s32.f32 %v1845
        %v2358 = vcvt.s32.f32 %v1846
        %v2359 = vcvt.s32.f32 %v1847
        %v2360 = vcvt.s32.f32 %v1848
        %v2361 = vcvt.s32.f32 %v1849
        %v2362 = vcvt.s32.f32 %v1850
        %v2363 = vcvt.s32.f32 %v1851
        %v2364 = vcvt.s32.f32 %v1852
        %v2365 = vcvt.s32.f32 %v1853
        %v2366 = vcvt.s32.f32 %v1854
        %v2367 = vcvt.s32.f32 %v1855
        %v2368 = vcvt.s32.f32 %v1856
        %v2369 = vcvt.s32.f32 %v1857
        %v2370 = vcvt.s32.f32 %v1858
        %v2371 = vcvt.s32.f32 %v1859
        %v2372 = vcvt.s32.f32 %v1860
        %v2373 = vcvt.s32.f32 %v1861
        %v2374 = vcvt.s32.f32 %v1862
        %v2375 = vcvt.s32.f32 %v1863
        %v2376 = vcvt.s32.f32 %v1864
        %v2377 = vcvt.s32.f32 %v1865
        %v2378 = vcvt.s32.f32 %v1866
        %v2379 = vcvt.s32.f32 %v1867
        %v2380 = vcvt.s32.f32 %v1868
        %v2381 = vcvt.s32.f32 %v1869
        %v2382 = vcvt.s32.f32 %v1870
        %v2383 = vcvt.s32.f32 %v1871
        %v2384 = vcvt.s32.f32 %v1872
        %v2385 = vcvt.s32.f32 %v1873
        %v2386 = vcvt.s32.f32 %v1874
        %v2387 = vcvt.s32.f32 %v1875
        %v2388 = vcvt.s32.f32 %v1876
        %v2389 = vcvt.s32.f32 %v1877
        %v2390 = vcvt.s32.f32 %v1878
        %v2391 = vcvt.s32.f32 %v1879
        %v2392 = vcvt.s32.f32 %v1880
        %v2393 = vcvt.s32.f32 %v1881
        %v2394 = vcvt.s32.f32 %v1882
        %v2395 = vcvt.s32.f32 %v1883
        %v2396 = vcvt.s32.f32 %v1884
        %v2397 = vcvt.s32.f32 %v1885
        %v2398 = vcvt.s32.f32 %v1886
        %v2399 = vcvt.s32.f32 %v1887
        %v2400 = vcvt.s32.f32 %v1888
        %v2401 = vcvt.s32.f32 %v1889
        %v2402 = vcvt.s32.f32 %v1890
        %v2403 = vcvt.s32.f32 %v1891
        %v2404 = vcvt.s32.f32 %v1892
        %v2405 = vcvt.s32.f32 %v1893
        %v2406 = vcvt.s32.f32 %v1894
        %v2407 = vcvt.s32.f32 %v1895
        %v2408 = vcvt.s32.f32 %v1896
        %v2409 = vcvt.s32.f32 %v1897
        %v2410 = vcvt.s32.f32 %v1898
        %v2411 = vcvt.s32.f32 %v1899
        %v2412 = vcvt.s32.f32 %v1900
        %v2413 = vcvt.s32.f32 %v1901
        %v2414 = vcvt.s32.f32 %v1902
        %v2415 = vcvt.s32.f32 %v1903
        %v2416 = vcvt.s32.f32 %v1904
        %v2417 = vcvt.s32.f32 %v1905
        %v2418 = vcvt.s32.f32 %v1906
        %v2419 = vcvt.s32.f32 %v1907
        %v2420 = vcvt.s32.f32 %v1908
        %v2421 = vcvt.s32.f32 %v1909
        %v2422 = vcvt.s32.f32 %v1910
        %v2423 = vcvt.s32.f32 %v1911
        %v2424 = vcvt.s32.f32 %v1912
        %v2425 = vcvt.s32.f32 %v1913
        %v2426 = vcvt.s32.f32 %v1914
        %v2427 = vcvt.s32.f32 %v1915
        %v2428 = vcvt.s32.f32 %v1916
        %v2429 = vcvt.s32.f32 %v1917
        %v2430 = vcvt.s32.f32 %v1918
        %v2431 = vcvt.s32.f32 %v1919
        %v2432 = vcvt.s32.f32 %v1920
        %v2433 = vcvt.s32.f32 %v1921
        %v2434 = vcvt.s32.f32 %v1922
        %v2435 = vcvt.s32.f32 %v1923
        %v2436 = vcvt.s32.f32 %v1924
        %v2437 = vcvt.s32.f32 %v1925
        %v2438 = vcvt.s32.f32 %v1926
        %v2439 = vcvt.s32.f32 %v1927
        %v2440 = vcvt.s32.f32 %v1928
        %v2441 = vcvt.s32.f32 %v1929
        %v2442 = vcvt.s32.f32 %v1930
        %v2443 = vcvt.s32.f32 %v1931
        %v2444 = vcvt.s32.f32 %v1932
        %v2445 = vcvt.s32.f32 %v1933
        %v2446 = vcvt.s32.f32 %v1934
        %v2447 = vcvt.s32.f32 %v1935
        %v2448 = vcvt.s32.f32 %v1936
        %v2449 = vcvt.s32.f32 %v1937
        %v2450 = vcvt.s32.f32 %v1938
        %v2451 = vcvt.s32.f32 %v1939
        %v2452 = vcvt.s32.f32 %v1940
        %v2453 = vcvt.s32.f32 %v1941
        %v2454 = vcvt.s32.f32 %v1942
        %v2455 = vcvt.s32.f32 %v1943
        %v2456 = vcvt.s32.f32 %v1944
        %v2457 = vcvt.s32.f32 %v1945
        %v2458 = vcvt.s32.f32 %v1946
        %v2459 = vcvt.s32.f32 %v1947
        %v2460 = vcvt.s32.f32 %v1948
        %v2461 = vcvt.s32.f32 %v1949
        %v2462 = vcvt.s32.f32 %v1950
        %v2463 = vcvt.s32.f32 %v1951
        %v2464 = vcvt.s32.f32 %v1952
        %v2465 = vcvt.s32.f32 %v1953
        %v2466 = vcvt.s32.f32 %v1954
        %v2467 = vcvt.s32.f32 %v1955
        %v2468 = vcvt.s32.f32 %v1956
        %v2469 = vcvt.s32.f32 %v1957
        %v2470 = vcvt.s32.f32 %v1958
        %v2471 = vcvt.s32.f32 %v1959
        %v2472 = vcvt.s32.f32 %v1960
        %v2473 = vcvt.s32.f32 %v1961
        %v2474 = vcvt.s32.f32 %v1962
        %v2475 = vcvt.s32.f32 %v1963
        %v2476 = vcvt.s32.f32 %v1964
        %v2477 = vcvt.s32.f32 %v1965
        %v2478 = vcvt.s32.f32 %v1966
        %v2479 = vcvt.s32.f32 %v1967
        %v2480 = vcvt.s32.f32 %v1968
        %v2481 = vcvt.s32.f32 %v1969
        %v2482 = vcvt.s32.f32 %v1970
        %v2483 = vcvt.s32.f32 %v1971
        %v2484 = vcvt.s32.f32 %v1972
        %v2485 = vcvt.s32.f32 %v1973
        %v2486 = vcvt.s32.f32 %v1974
        %v2487 = vcvt.s32.f32 %v1975
        %v2488 = vcvt.s32.f32 %v1976
        %v2489 = vcvt.s32.f32 %v1977
        %v2490 = vcvt.s32.f32 %v1978
        %v2491 = vcvt.s32.f32 %v1979
        %v2492 = vcvt.s32.f32 %v1980
        %v2493 = vcvt.s32.f32 %v1981
        %v2494 = vcvt.s32.f32 %v1982
        %v2495 = vcvt.s32.f32 %v1983
        %v2496 = vcvt.s32.f32 %v1984
        %v2497 = vcvt.s32.f32 %v1985
        %v2498 = vcvt.s32.f32 %v1986
        %v2499 = vcvt.s32.f32 %v1987
        %v2500 = vcvt.s32.f32 %v1988
        %v2501 = vcvt.s32.f32 %v1989
        %v2502 = vcvt.s32.f32 %v1990
        %v2503 = vcvt.s32.f32 %v1991
        %v2504 = vcvt.s32.f32 %v1992
        %v2505 = vcvt.s32.f32 %v1993
        %v2506 = vcvt.s32.f32 %v1994
        %v2507 = vcvt.s32.f32 %v1995
        %v2508 = vcvt.s32.f32 %v1996
        %v2509 = vcvt.s32.f32 %v1997
        %v2510 = vcvt.s32.f32 %v1998
        %v2511 = vcvt.s32.f32 %v1999
        %v2512 = vcvt.s32.f32 %v2000
        %v2513 = vcvt.s32.f32 %v2001
        %v2514 = vcvt.s32.f32 %v2002
        %v2515 = vcvt.s32.f32 %v2003
        %v2516 = vcvt.s32.f32 %v2004
        %v2517 = vcvt.s32.f32 %v2005
        %v2518 = vcvt.s32.f32 %v2006
        %v2519 = vcvt.s32.f32 %v2007
        %v2520 = vcvt.s32.f32 %v2008
        %v2521 = vcvt.s32.f32 %v2009
        %v2522 = vcvt.s32.f32 %v2010
        %v2523 = vcvt.s32.f32 %v2011
        %v2524 = vcvt.s32.f32 %v2012
        %v2525 = vcvt.s32.f32 %v2013
        %v2526 = vcvt.s32.f32 %v2014
        %v2527 = vcvt.s32.f32 %v2015
        %v2528 = vcvt.s32.f32 %v2016
        %v2529 = vcvt.s32.f32 %v2017
        %v2530 = vcvt.s32.f32 %v2018
        %v2531 = vcvt.s32.f32 %v2019
        %v2532 = vcvt.s32.f32 %v2020
        %v2533 = vcvt.s32.f32 %v2021
        %v2534 = vcvt.s32.f32 %v2022
        %v2535 = vcvt.s32.f32 %v2023
        %v2536 = vcvt.s32.f32 %v2024
        %v2537 = vcvt.s32.f32 %v2025
        %v2538 = vcvt.s32.f32 %v2026
        %v2539 = vcvt.s32.f32 %v2027
        %v2540 = vcvt.s32.f32 %v2028
        %v2541 = vcvt.s32.f32 %v2029
        %v2542 = vcvt.s32.f32 %v2030
        %v2543 = vcvt.s32.f32 %v2031
        %v2544 = vcvt.s32.f32 %v2032
        %v2545 = vcvt.s32.f32 %v2033
        %v2546 = vcvt.s32.f32 %v2034
        %v2547 = vcvt.s32.f32 %v2035
        %v2548 = vcvt.s32.f32 %v2036
        %v2549 = vcvt.s32.f32 %v2037
        %v2550 = vcvt.s32.f32 %v2038
        %v2551 = vcvt.s32.f32 %v2039
        %v2552 = vcvt.s32.f32 %v2040
        %v2553 = vcvt.s32.f32 %v2041
        %v2554 = vcvt.s32.f32 %v2042
        %v2555 = vcvt.s32.f32 %v2043
        %v2556 = vcvt.s32.f32 %v2044
        %v2557 = vcvt.s32.f32 %v2045
        %v2558 = vcvt.s32.f32 %v2046
        %v2559 = vcvt.s32.f32 %v2047
        %v2560 = vcvt.s32.f32 %v2048
        %v2561 = vcvt.s32.f32 %v2049
        %v2562 = vcvt.s32.f32 %v2050
        %v2563 = vcvt.s32.f32 %v2051
        %v2564 = vcvt.s32.f32 %v2052
        %v2565 = vcvt.s32.f32 %v2053
        %v2566 = vcvt.s32.f32 %v2054
        %v2567 = vcvt.s32.f32 %v2055
        %v2568 = vcvt.s32.f32 %v2056
        %v2569 = vcvt.s32.f32 %v2057
        %v2570 = vcvt.s32.f32 %v2058
        %v2571 = vcvt.s32.f32 %v2059
        %v2572 = vcvt.s32.f32 %v2060
        %v2573 = vcvt.s32.f32 %v2061
        %v2574 = vcvt.s32.f32 %v2062
        %v2575 = vcvt.s32.f32 %v2063
        %v2576 = vcvt.s32.f32 %v2064
        %v2577 = vcvt.s32.f32 %v2065
        %v2578 = vcvt.s32.f32 %v2066
        %v2579 = vcvt.s32.f32 %v2067
        %v2580 = vcvt.s32.f32 %v2068
        %v2581 = vcvt.s32.f32 %v2069
        %v2582 = vcvt.s32.f32 %v2070
        %v2583 = vcvt.s32.f32 %v2071
        %v2584 = vcvt.s32.f32 %v2072
        %v2585 = vcvt.s32.f32 %v2073
        %v2586 = vcvt.s32.f32 %v2074
        %v2587 = vcvt.s32.f32 %v2075
        %v2588 = vcvt.s32.f32 %v2076
        %v2589 = vpack.c.bf16 %v2078, %v2077
        %v2590 = vpack.c.bf16 %v2080, %v2079
        %v2591 = vpack.c.bf16 %v2082, %v2081
        %v2592 = vpack.c.bf16 %v2084, %v2083
        %v2593 = vpack.c.bf16 %v2086, %v2085
        %v2594 = vpack.c.bf16 %v2088, %v2087
        %v2595 = vpack.c.bf16 %v2090, %v2089
        %v2596 = vpack.c.bf16 %v2092, %v2091
        %v2597 = vpack.c.bf16 %v2094, %v2093
        %v2598 = vpack.c.bf16 %v2096, %v2095
        %v2599 = vpack.c.bf16 %v2098, %v2097
        %v2600 = vpack.c.bf16 %v2100, %v2099
        %v2601 = vpack.c.bf16 %v2102, %v2101
        %v2602 = vpack.c.bf16 %v2104, %v2103
        %v2603 = vpack.c.bf16 %v2106, %v2105
        %v2604 = vpack.c.bf16 %v2108, %v2107
        %v2605 = vpack.c.bf16 %v2110, %v2109
        %v2606 = vpack.c.bf16 %v2112, %v2111
        %v2607 = vpack.c.bf16 %v2114, %v2113
        %v2608 = vpack.c.bf16 %v2116, %v2115
        %v2609 = vpack.c.bf16 %v2118, %v2117
        %v2610 = vpack.c.bf16 %v2120, %v2119
        %v2611 = vpack.c.bf16 %v2122, %v2121
        %v2612 = vpack.c.bf16 %v2124, %v2123
        %v2613 = vpack.c.bf16 %v2126, %v2125
        %v2614 = vpack.c.bf16 %v2128, %v2127
        %v2615 = vpack.c.bf16 %v2130, %v2129
        %v2616 = vpack.c.bf16 %v2132, %v2131
        %v2617 = vpack.c.bf16 %v2134, %v2133
        %v2618 = vpack.c.bf16 %v2136, %v2135
        %v2619 = vpack.c.bf16 %v2138, %v2137
        %v2620 = vpack.c.bf16 %v2140, %v2139
        %v2621 = vpack.c.bf16 %v2142, %v2141
        %v2622 = vpack.c.bf16 %v2144, %v2143
        %v2623 = vpack.c.bf16 %v2146, %v2145
        %v2624 = vpack.c.bf16 %v2148, %v2147
        %v2625 = vpack.c.bf16 %v2150, %v2149
        %v2626 = vpack.c.bf16 %v2152, %v2151
        %v2627 = vpack.c.bf16 %v2154, %v2153
        %v2628 = vpack.c.bf16 %v2156, %v2155
        %v2629 = vpack.c.bf16 %v2158, %v2157
        %v2630 = vpack.c.bf16 %v2160, %v2159
        %v2631 = vpack.c.bf16 %v2162, %v2161
        %v2632 = vpack.c.bf16 %v2164, %v2163
        %v2633 = vpack.c.bf16 %v2166, %v2165
        %v2634 = vpack.c.bf16 %v2168, %v2167
        %v2635 = vpack.c.bf16 %v2170, %v2169
        %v2636 = vpack.c.bf16 %v2172, %v2171
        %v2637 = vpack.c.bf16 %v2174, %v2173
        %v2638 = vpack.c.bf16 %v2176, %v2175
        %v2639 = vpack.c.bf16 %v2178, %v2177
        %v2640 = vpack.c.bf16 %v2180, %v2179
        %v2641 = vpack.c.bf16 %v2182, %v2181
        %v2642 = vpack.c.bf16 %v2184, %v2183
        %v2643 = vpack.c.bf16 %v2186, %v2185
        %v2644 = vpack.c.bf16 %v2188, %v2187
        %v2645 = vpack.c.bf16 %v2190, %v2189
        %v2646 = vpack.c.bf16 %v2192, %v2191
        %v2647 = vpack.c.bf16 %v2194, %v2193
        %v2648 = vpack.c.bf16 %v2196, %v2195
        %v2649 = vpack.c.bf16 %v2198, %v2197
        %v2650 = vpack.c.bf16 %v2200, %v2199
        %v2651 = vpack.c.bf16 %v2202, %v2201
        %v2652 = vpack.c.bf16 %v2204, %v2203
        %v2653 = vpack.c.bf16 %v2206, %v2205
        %v2654 = vpack.c.bf16 %v2208, %v2207
        %v2655 = vpack.c.bf16 %v2210, %v2209
        %v2656 = vpack.c.bf16 %v2212, %v2211
        %v2657 = vpack.c.bf16 %v2214, %v2213
        %v2658 = vpack.c.bf16 %v2216, %v2215
        %v2659 = vpack.c.bf16 %v2218, %v2217
        %v2660 = vpack.c.bf16 %v2220, %v2219
        %v2661 = vpack.c.bf16 %v2222, %v2221
        %v2662 = vpack.c.bf16 %v2224, %v2223
        %v2663 = vpack.c.bf16 %v2226, %v2225
        %v2664 = vpack.c.bf16 %v2228, %v2227
        %v2665 = vpack.c.bf16 %v2230, %v2229
        %v2666 = vpack.c.bf16 %v2232, %v2231
        %v2667 = vpack.c.bf16 %v2234, %v2233
        %v2668 = vpack.c.bf16 %v2236, %v2235
        %v2669 = vpack.c.bf16 %v2238, %v2237
        %v2670 = vpack.c.bf16 %v2240, %v2239
        %v2671 = vpack.c.bf16 %v2242, %v2241
        %v2672 = vpack.c.bf16 %v2244, %v2243
        %v2673 = vpack.c.bf16 %v2246, %v2245
        %v2674 = vpack.c.bf16 %v2248, %v2247
        %v2675 = vpack.c.bf16 %v2250, %v2249
        %v2676 = vpack.c.bf16 %v2252, %v2251
        %v2677 = vpack.c.bf16 %v2254, %v2253
        %v2678 = vpack.c.bf16 %v2256, %v2255
        %v2679 = vpack.c.bf16 %v2258, %v2257
        %v2680 = vpack.c.bf16 %v2260, %v2259
        %v2681 = vpack.c.bf16 %v2262, %v2261
        %v2682 = vpack.c.bf16 %v2264, %v2263
        %v2683 = vpack.c.bf16 %v2266, %v2265
        %v2684 = vpack.c.bf16 %v2268, %v2267
        %v2685 = vpack.c.bf16 %v2270, %v2269
        %v2686 = vpack.c.bf16 %v2272, %v2271
        %v2687 = vpack.c.bf16 %v2274, %v2273
        %v2688 = vpack.c.bf16 %v2276, %v2275
        %v2689 = vpack.c.bf16 %v2278, %v2277
        %v2690 = vpack.c.bf16 %v2280, %v2279
        %v2691 = vpack.c.bf16 %v2282, %v2281
        %v2692 = vpack.c.bf16 %v2284, %v2283
        %v2693 = vpack.c.bf16 %v2286, %v2285
        %v2694 = vpack.c.bf16 %v2288, %v2287
        %v2695 = vpack.c.bf16 %v2290, %v2289
        %v2696 = vpack.c.bf16 %v2292, %v2291
        %v2697 = vpack.c.bf16 %v2294, %v2293
        %v2698 = vpack.c.bf16 %v2296, %v2295
        %v2699 = vpack.c.bf16 %v2298, %v2297
        %v2700 = vpack.c.bf16 %v2300, %v2299
        %v2701 = vpack.c.bf16 %v2302, %v2301
        %v2702 = vpack.c.bf16 %v2304, %v2303
        %v2703 = vpack.c.bf16 %v2306, %v2305
        %v2704 = vpack.c.bf16 %v2308, %v2307
        %v2705 = vpack.c.bf16 %v2310, %v2309
        %v2706 = vpack.c.bf16 %v2312, %v2311
        %v2707 = vpack.c.bf16 %v2314, %v2313
        %v2708 = vpack.c.bf16 %v2316, %v2315
        %v2709 = vpack.c.bf16 %v2318, %v2317
        %v2710 = vpack.c.bf16 %v2320, %v2319
        %v2711 = vpack.c.bf16 %v2322, %v2321
        %v2712 = vpack.c.bf16 %v2324, %v2323
        %v2713 = vpack.c.bf16 %v2326, %v2325
        %v2714 = vpack.c.bf16 %v2328, %v2327
        %v2715 = vpack.c.bf16 %v2330, %v2329
        %v2716 = vpack.c.bf16 %v2332, %v2331
        %v2717 = vpack.c.bf16 %v2334, %v2333
        %v2718 = vpack.c.bf16 %v2336, %v2335
        %v2719 = vpack.c.bf16 %v2338, %v2337
        %v2720 = vpack.c.bf16 %v2340, %v2339
        %v2721 = vpack.c.bf16 %v2342, %v2341
        %v2722 = vpack.c.bf16 %v2344, %v2343
        %v2723 = vpack.c.bf16 %v2346, %v2345
        %v2724 = vpack.c.bf16 %v2348, %v2347
        %v2725 = vpack.c.bf16 %v2350, %v2349
        %v2726 = vpack.c.bf16 %v2352, %v2351
        %v2727 = vpack.c.bf16 %v2354, %v2353
        %v2728 = vpack.c.bf16 %v2356, %v2355
        %v2729 = vpack.c.bf16 %v2358, %v2357
        %v2730 = vpack.c.bf16 %v2360, %v2359
        %v2731 = vpack.c.bf16 %v2362, %v2361
        %v2732 = vpack.c.bf16 %v2364, %v2363
        %v2733 = vpack.c.bf16 %v2366, %v2365
        %v2734 = vpack.c.bf16 %v2368, %v2367
        %v2735 = vpack.c.bf16 %v2370, %v2369
        %v2736 = vpack.c.bf16 %v2372, %v2371
        %v2737 = vpack.c.bf16 %v2374, %v2373
        %v2738 = vpack.c.bf16 %v2376, %v2375
        %v2739 = vpack.c.bf16 %v2378, %v2377
        %v2740 = vpack.c.bf16 %v2380, %v2379
        %v2741 = vpack.c.bf16 %v2382, %v2381
        %v2742 = vpack.c.bf16 %v2384, %v2383
        %v2743 = vpack.c.bf16 %v2386, %v2385
        %v2744 = vpack.c.bf16 %v2388, %v2387
        %v2745 = vpack.c.bf16 %v2390, %v2389
        %v2746 = vpack.c.bf16 %v2392, %v2391
        %v2747 = vpack.c.bf16 %v2394, %v2393
        %v2748 = vpack.c.bf16 %v2396, %v2395
        %v2749 = vpack.c.bf16 %v2398, %v2397
        %v2750 = vpack.c.bf16 %v2400, %v2399
        %v2751 = vpack.c.bf16 %v2402, %v2401
        %v2752 = vpack.c.bf16 %v2404, %v2403
        %v2753 = vpack.c.bf16 %v2406, %v2405
        %v2754 = vpack.c.bf16 %v2408, %v2407
        %v2755 = vpack.c.bf16 %v2410, %v2409
        %v2756 = vpack.c.bf16 %v2412, %v2411
        %v2757 = vpack.c.bf16 %v2414, %v2413
        %v2758 = vpack.c.bf16 %v2416, %v2415
        %v2759 = vpack.c.bf16 %v2418, %v2417
        %v2760 = vpack.c.bf16 %v2420, %v2419
        %v2761 = vpack.c.bf16 %v2422, %v2421
        %v2762 = vpack.c.bf16 %v2424, %v2423
        %v2763 = vpack.c.bf16 %v2426, %v2425
        %v2764 = vpack.c.bf16 %v2428, %v2427
        %v2765 = vpack.c.bf16 %v2430, %v2429
        %v2766 = vpack.c.bf16 %v2432, %v2431
        %v2767 = vpack.c.bf16 %v2434, %v2433
        %v2768 = vpack.c.bf16 %v2436, %v2435
        %v2769 = vpack.c.bf16 %v2438, %v2437
        %v2770 = vpack.c.bf16 %v2440, %v2439
        %v2771 = vpack.c.bf16 %v2442, %v2441
        %v2772 = vpack.c.bf16 %v2444, %v2443
        %v2773 = vpack.c.bf16 %v2446, %v2445
        %v2774 = vpack.c.bf16 %v2448, %v2447
        %v2775 = vpack.c.bf16 %v2450, %v2449
        %v2776 = vpack.c.bf16 %v2452, %v2451
        %v2777 = vpack.c.bf16 %v2454, %v2453
        %v2778 = vpack.c.bf16 %v2456, %v2455
        %v2779 = vpack.c.bf16 %v2458, %v2457
        %v2780 = vpack.c.bf16 %v2460, %v2459
        %v2781 = vpack.c.bf16 %v2462, %v2461
        %v2782 = vpack.c.bf16 %v2464, %v2463
        %v2783 = vpack.c.bf16 %v2466, %v2465
        %v2784 = vpack.c.bf16 %v2468, %v2467
        %v2785 = vpack.c.bf16 %v2470, %v2469
        %v2786 = vpack.c.bf16 %v2472, %v2471
        %v2787 = vpack.c.bf16 %v2474, %v2473
        %v2788 = vpack.c.bf16 %v2476, %v2475
        %v2789 = vpack.c.bf16 %v2478, %v2477
        %v2790 = vpack.c.bf16 %v2480, %v2479
        %v2791 = vpack.c.bf16 %v2482, %v2481
        %v2792 = vpack.c.bf16 %v2484, %v2483
        %v2793 = vpack.c.bf16 %v2486, %v2485
        %v2794 = vpack.c.bf16 %v2488, %v2487
        %v2795 = vpack.c.bf16 %v2490, %v2489
        %v2796 = vpack.c.bf16 %v2492, %v2491
        %v2797 = vpack.c.bf16 %v2494, %v2493
        %v2798 = vpack.c.bf16 %v2496, %v2495
        %v2799 = vpack.c.bf16 %v2498, %v2497
        %v2800 = vpack.c.bf16 %v2500, %v2499
        %v2801 = vpack.c.bf16 %v2502, %v2501
        %v2802 = vpack.c.bf16 %v2504, %v2503
        %v2803 = vpack.c.bf16 %v2506, %v2505
        %v2804 = vpack.c.bf16 %v2508, %v2507
        %v2805 = vpack.c.bf16 %v2510, %v2509
        %v2806 = vpack.c.bf16 %v2512, %v2511
        %v2807 = vpack.c.bf16 %v2514, %v2513
        %v2808 = vpack.c.bf16 %v2516, %v2515
        %v2809 = vpack.c.bf16 %v2518, %v2517
        %v2810 = vpack.c.bf16 %v2520, %v2519
        %v2811 = vpack.c.bf16 %v2522, %v2521
        %v2812 = vpack.c.bf16 %v2524, %v2523
        %v2813 = vpack.c.bf16 %v2526, %v2525
        %v2814 = vpack.c.bf16 %v2528, %v2527
        %v2815 = vpack.c.bf16 %v2530, %v2529
        %v2816 = vpack.c.bf16 %v2532, %v2531
        %v2817 = vpack.c.bf16 %v2534, %v2533
        %v2818 = vpack.c.bf16 %v2536, %v2535
        %v2819 = vpack.c.bf16 %v2538, %v2537
        %v2820 = vpack.c.bf16 %v2540, %v2539
        %v2821 = vpack.c.bf16 %v2542, %v2541
        %v2822 = vpack.c.bf16 %v2544, %v2543
        %v2823 = vpack.c.bf16 %v2546, %v2545
        %v2824 = vpack.c.bf16 %v2548, %v2547
        %v2825 = vpack.c.bf16 %v2550, %v2549
        %v2826 = vpack.c.bf16 %v2552, %v2551
        %v2827 = vpack.c.bf16 %v2554, %v2553
        %v2828 = vpack.c.bf16 %v2556, %v2555
        %v2829 = vpack.c.bf16 %v2558, %v2557
        %v2830 = vpack.c.bf16 %v2560, %v2559
        %v2831 = vpack.c.bf16 %v2562, %v2561
        %v2832 = vpack.c.bf16 %v2564, %v2563
        %v2833 = vpack.c.bf16 %v2566, %v2565
        %v2834 = vpack.c.bf16 %v2568, %v2567
        %v2835 = vpack.c.bf16 %v2570, %v2569
        %v2836 = vpack.c.bf16 %v2572, %v2571
        %v2837 = vpack.c.bf16 %v2574, %v2573
        %v2838 = vpack.c.bf16 %v2576, %v2575
        %v2839 = vpack.c.bf16 %v2578, %v2577
        %v2840 = vpack.c.bf16 %v2580, %v2579
        %v2841 = vpack.c.bf16 %v2582, %v2581
        %v2842 = vpack.c.bf16 %v2584, %v2583
        %v2843 = vpack.c.bf16 %v2586, %v2585
        %v2844 = vpack.c.bf16 %v2588, %v2587
        %v2845 = vld [vmem:[#allocation7] sm:$0xf]
        %v2846 = vld [vmem:[#allocation7 + $0x4] sm:$0xf]
        %v2847 = vld [vmem:[#allocation7 + $0x8] sm:$0xf]
        %v2848 = vld [vmem:[#allocation7 + $0xc] sm:$0xf]
        %v2849 = vld [vmem:[#allocation7 + $0x10] sm:$0xf]
        %v2850 = vld [vmem:[#allocation7 + $0x14] sm:$0xf]
        %v2851 = vld [vmem:[#allocation7 + $0x18] sm:$0xf]
        %v2852 = vld [vmem:[#allocation7 + $0x1c] sm:$0xf]
        %v2853 = vld [vmem:[#allocation7 + $0x20] sm:$0xf]
        %v2854 = vld [vmem:[#allocation7 + $0x24] sm:$0xf]
        %v2855 = vld [vmem:[#allocation7 + $0x28] sm:$0xf]
        %v2856 = vld [vmem:[#allocation7 + $0x2c] sm:$0xf]
        %v2857 = vld [vmem:[#allocation7 + $0x30] sm:$0xf]
        %v2858 = vld [vmem:[#allocation7 + $0x34] sm:$0xf]
        %v2859 = vld [vmem:[#allocation7 + $0x38] sm:$0xf]
        %v2860 = vld [vmem:[#allocation7 + $0x3c] sm:$0xf]
        %v2861 = vld [vmem:[#allocation7 + $0x40] sm:$0xf]
        %v2862 = vld [vmem:[#allocation7 + $0x44] sm:$0xf]
        %v2863 = vld [vmem:[#allocation7 + $0x48] sm:$0xf]
        %v2864 = vld [vmem:[#allocation7 + $0x4c] sm:$0xf]
        %v2865 = vld [vmem:[#allocation7 + $0x50] sm:$0xf]
        %v2866 = vld [vmem:[#allocation7 + $0x54] sm:$0xf]
        %v2867 = vld [vmem:[#allocation7 + $0x58] sm:$0xf]
        %v2868 = vld [vmem:[#allocation7 + $0x5c] sm:$0xf]
        %v2869 = vld [vmem:[#allocation7 + $0x60] sm:$0xf]
        %v2870 = vld [vmem:[#allocation7 + $0x64] sm:$0xf]
        %v2871 = vld [vmem:[#allocation7 + $0x68] sm:$0xf]
        %v2872 = vld [vmem:[#allocation7 + $0x6c] sm:$0xf]
        %v2873 = vld [vmem:[#allocation7 + $0x70] sm:$0xf]
        %v2874 = vld [vmem:[#allocation7 + $0x74] sm:$0xf]
        %v2875 = vld [vmem:[#allocation7 + $0x78] sm:$0xf]
        %v2876 = vld [vmem:[#allocation7 + $0x7c] sm:$0xf]
        %v2877 = vld [vmem:[#allocation7 + $0x80] sm:$0xf]
        %v2878 = vld [vmem:[#allocation7 + $0x84] sm:$0xf]
        %v2879 = vld [vmem:[#allocation7 + $0x88] sm:$0xf]
        %v2880 = vld [vmem:[#allocation7 + $0x8c] sm:$0xf]
        %v2881 = vld [vmem:[#allocation7 + $0x90] sm:$0xf]
        %v2882 = vld [vmem:[#allocation7 + $0x94] sm:$0xf]
        %v2883 = vld [vmem:[#allocation7 + $0x98] sm:$0xf]
        %v2884 = vld [vmem:[#allocation7 + $0x9c] sm:$0xf]
        %v2885 = vld [vmem:[#allocation7 + $0xa0] sm:$0xf]
        %v2886 = vld [vmem:[#allocation7 + $0xa4] sm:$0xf]
        %v2887 = vld [vmem:[#allocation7 + $0xa8] sm:$0xf]
        %v2888 = vld [vmem:[#allocation7 + $0xac] sm:$0xf]
        %v2889 = vld [vmem:[#allocation7 + $0xb0] sm:$0xf]
        %v2890 = vld [vmem:[#allocation7 + $0xb4] sm:$0xf]
        %v2891 = vld [vmem:[#allocation7 + $0xb8] sm:$0xf]
        %v2892 = vld [vmem:[#allocation7 + $0xbc] sm:$0xf]
        %v2893 = vld [vmem:[#allocation7 + $0xc0] sm:$0xf]
        %v2894 = vld [vmem:[#allocation7 + $0xc4] sm:$0xf]
        %v2895 = vld [vmem:[#allocation7 + $0xc8] sm:$0xf]
        %v2896 = vld [vmem:[#allocation7 + $0xcc] sm:$0xf]
        %v2897 = vld [vmem:[#allocation7 + $0xd0] sm:$0xf]
        %v2898 = vld [vmem:[#allocation7 + $0xd4] sm:$0xf]
        %v2899 = vld [vmem:[#allocation7 + $0xd8] sm:$0xf]
        %v2900 = vld [vmem:[#allocation7 + $0xdc] sm:$0xf]
        %v2901 = vld [vmem:[#allocation7 + $0xe0] sm:$0xf]
        %v2902 = vld [vmem:[#allocation7 + $0xe4] sm:$0xf]
        %v2903 = vld [vmem:[#allocation7 + $0xe8] sm:$0xf]
        %v2904 = vld [vmem:[#allocation7 + $0xec] sm:$0xf]
        %v2905 = vld [vmem:[#allocation7 + $0xf0] sm:$0xf]
        %v2906 = vld [vmem:[#allocation7 + $0xf4] sm:$0xf]
        %v2907 = vld [vmem:[#allocation7 + $0xf8] sm:$0xf]
        %v2908 = vld [vmem:[#allocation7 + $0xfc] sm:$0xf]
        %v3165 = vunpack.c.l.b16 %v2589
        %v3166 = vunpack.c.h.b16 %v2589
        %v3167 = vunpack.c.l.b16 %v2590
        %v3168 = vunpack.c.h.b16 %v2590
        %v3169 = vunpack.c.l.b16 %v2591
        %v3170 = vunpack.c.h.b16 %v2591
        %v3171 = vunpack.c.l.b16 %v2592
        %v3172 = vunpack.c.h.b16 %v2592
        %v3173 = vunpack.c.l.b16 %v2593
        %v3174 = vunpack.c.h.b16 %v2593
        %v3175 = vunpack.c.l.b16 %v2594
        %v3176 = vunpack.c.h.b16 %v2594
        %v3177 = vunpack.c.l.b16 %v2595
        %v3178 = vunpack.c.h.b16 %v2595
        %v3179 = vunpack.c.l.b16 %v2596
        %v3180 = vunpack.c.h.b16 %v2596
        %v3181 = vunpack.c.l.b16 %v2597
        %v3182 = vunpack.c.h.b16 %v2597
        %v3183 = vunpack.c.l.b16 %v2598
        %v3184 = vunpack.c.h.b16 %v2598
        %v3185 = vunpack.c.l.b16 %v2599
        %v3186 = vunpack.c.h.b16 %v2599
        %v3187 = vunpack.c.l.b16 %v2600
        %v3188 = vunpack.c.h.b16 %v2600
        %v3189 = vunpack.c.l.b16 %v2601
        %v3190 = vunpack.c.h.b16 %v2601
        %v3191 = vunpack.c.l.b16 %v2602
        %v3192 = vunpack.c.h.b16 %v2602
        %v3193 = vunpack.c.l.b16 %v2603
        %v3194 = vunpack.c.h.b16 %v2603
        %v3195 = vunpack.c.l.b16 %v2604
        %v3196 = vunpack.c.h.b16 %v2604
        %v3197 = vunpack.c.l.b16 %v2605
        %v3198 = vunpack.c.h.b16 %v2605
        %v3199 = vunpack.c.l.b16 %v2606
        %v3200 = vunpack.c.h.b16 %v2606
        %v3201 = vunpack.c.l.b16 %v2607
        %v3202 = vunpack.c.h.b16 %v2607
        %v3203 = vunpack.c.l.b16 %v2608
        %v3204 = vunpack.c.h.b16 %v2608
        %v3205 = vunpack.c.l.b16 %v2609
        %v3206 = vunpack.c.h.b16 %v2609
        %v3207 = vunpack.c.l.b16 %v2610
        %v3208 = vunpack.c.h.b16 %v2610
        %v3209 = vunpack.c.l.b16 %v2611
        %v3210 = vunpack.c.h.b16 %v2611
        %v3211 = vunpack.c.l.b16 %v2612
        %v3212 = vunpack.c.h.b16 %v2612
        %v3213 = vunpack.c.l.b16 %v2613
        %v3214 = vunpack.c.h.b16 %v2613
        %v3215 = vunpack.c.l.b16 %v2614
        %v3216 = vunpack.c.h.b16 %v2614
        %v3217 = vunpack.c.l.b16 %v2615
        %v3218 = vunpack.c.h.b16 %v2615
        %v3219 = vunpack.c.l.b16 %v2616
        %v3220 = vunpack.c.h.b16 %v2616
        %v3221 = vunpack.c.l.b16 %v2617
        %v3222 = vunpack.c.h.b16 %v2617
        %v3223 = vunpack.c.l.b16 %v2618
        %v3224 = vunpack.c.h.b16 %v2618
        %v3225 = vunpack.c.l.b16 %v2619
        %v3226 = vunpack.c.h.b16 %v2619
        %v3227 = vunpack.c.l.b16 %v2620
        %v3228 = vunpack.c.h.b16 %v2620
        %v3229 = vunpack.c.l.b16 %v2621
        %v3230 = vunpack.c.h.b16 %v2621
        %v3231 = vunpack.c.l.b16 %v2622
        %v3232 = vunpack.c.h.b16 %v2622
        %v3233 = vunpack.c.l.b16 %v2623
        %v3234 = vunpack.c.h.b16 %v2623
        %v3235 = vunpack.c.l.b16 %v2624
        %v3236 = vunpack.c.h.b16 %v2624
        %v3237 = vunpack.c.l.b16 %v2625
        %v3238 = vunpack.c.h.b16 %v2625
        %v3239 = vunpack.c.l.b16 %v2626
        %v3240 = vunpack.c.h.b16 %v2626
        %v3241 = vunpack.c.l.b16 %v2627
        %v3242 = vunpack.c.h.b16 %v2627
        %v3243 = vunpack.c.l.b16 %v2628
        %v3244 = vunpack.c.h.b16 %v2628
        %v3245 = vunpack.c.l.b16 %v2629
        %v3246 = vunpack.c.h.b16 %v2629
        %v3247 = vunpack.c.l.b16 %v2630
        %v3248 = vunpack.c.h.b16 %v2630
        %v3249 = vunpack.c.l.b16 %v2631
        %v3250 = vunpack.c.h.b16 %v2631
        %v3251 = vunpack.c.l.b16 %v2632
        %v3252 = vunpack.c.h.b16 %v2632
        %v3253 = vunpack.c.l.b16 %v2633
        %v3254 = vunpack.c.h.b16 %v2633
        %v3255 = vunpack.c.l.b16 %v2634
        %v3256 = vunpack.c.h.b16 %v2634
        %v3257 = vunpack.c.l.b16 %v2635
        %v3258 = vunpack.c.h.b16 %v2635
        %v3259 = vunpack.c.l.b16 %v2636
        %v3260 = vunpack.c.h.b16 %v2636
        %v3261 = vunpack.c.l.b16 %v2637
        %v3262 = vunpack.c.h.b16 %v2637
        %v3263 = vunpack.c.l.b16 %v2638
        %v3264 = vunpack.c.h.b16 %v2638
        %v3265 = vunpack.c.l.b16 %v2639
        %v3266 = vunpack.c.h.b16 %v2639
        %v3267 = vunpack.c.l.b16 %v2640
        %v3268 = vunpack.c.h.b16 %v2640
        %v3269 = vunpack.c.l.b16 %v2641
        %v3270 = vunpack.c.h.b16 %v2641
        %v3271 = vunpack.c.l.b16 %v2642
        %v3272 = vunpack.c.h.b16 %v2642
        %v3273 = vunpack.c.l.b16 %v2643
        %v3274 = vunpack.c.h.b16 %v2643
        %v3275 = vunpack.c.l.b16 %v2644
        %v3276 = vunpack.c.h.b16 %v2644
        %v3277 = vunpack.c.l.b16 %v2645
        %v3278 = vunpack.c.h.b16 %v2645
        %v3279 = vunpack.c.l.b16 %v2646
        %v3280 = vunpack.c.h.b16 %v2646
        %v3281 = vunpack.c.l.b16 %v2647
        %v3282 = vunpack.c.h.b16 %v2647
        %v3283 = vunpack.c.l.b16 %v2648
        %v3284 = vunpack.c.h.b16 %v2648
        %v3285 = vunpack.c.l.b16 %v2649
        %v3286 = vunpack.c.h.b16 %v2649
        %v3287 = vunpack.c.l.b16 %v2650
        %v3288 = vunpack.c.h.b16 %v2650
        %v3289 = vunpack.c.l.b16 %v2651
        %v3290 = vunpack.c.h.b16 %v2651
        %v3291 = vunpack.c.l.b16 %v2652
        %v3292 = vunpack.c.h.b16 %v2652
        %v3293 = vunpack.c.l.b16 %v2653
        %v3294 = vunpack.c.h.b16 %v2653
        %v3295 = vunpack.c.l.b16 %v2654
        %v3296 = vunpack.c.h.b16 %v2654
        %v3297 = vunpack.c.l.b16 %v2655
        %v3298 = vunpack.c.h.b16 %v2655
        %v3299 = vunpack.c.l.b16 %v2656
        %v3300 = vunpack.c.h.b16 %v2656
        %v3301 = vunpack.c.l.b16 %v2657
        %v3302 = vunpack.c.h.b16 %v2657
        %v3303 = vunpack.c.l.b16 %v2658
        %v3304 = vunpack.c.h.b16 %v2658
        %v3305 = vunpack.c.l.b16 %v2659
        %v3306 = vunpack.c.h.b16 %v2659
        %v3307 = vunpack.c.l.b16 %v2660
        %v3308 = vunpack.c.h.b16 %v2660
        %v3309 = vunpack.c.l.b16 %v2661
        %v3310 = vunpack.c.h.b16 %v2661
        %v3311 = vunpack.c.l.b16 %v2662
        %v3312 = vunpack.c.h.b16 %v2662
        %v3313 = vunpack.c.l.b16 %v2663
        %v3314 = vunpack.c.h.b16 %v2663
        %v3315 = vunpack.c.l.b16 %v2664
        %v3316 = vunpack.c.h.b16 %v2664
        %v3317 = vunpack.c.l.b16 %v2665
        %v3318 = vunpack.c.h.b16 %v2665
        %v3319 = vunpack.c.l.b16 %v2666
        %v3320 = vunpack.c.h.b16 %v2666
        %v3321 = vunpack.c.l.b16 %v2667
        %v3322 = vunpack.c.h.b16 %v2667
        %v3323 = vunpack.c.l.b16 %v2668
        %v3324 = vunpack.c.h.b16 %v2668
        %v3325 = vunpack.c.l.b16 %v2669
        %v3326 = vunpack.c.h.b16 %v2669
        %v3327 = vunpack.c.l.b16 %v2670
        %v3328 = vunpack.c.h.b16 %v2670
        %v3329 = vunpack.c.l.b16 %v2671
        %v3330 = vunpack.c.h.b16 %v2671
        %v3331 = vunpack.c.l.b16 %v2672
        %v3332 = vunpack.c.h.b16 %v2672
        %v3333 = vunpack.c.l.b16 %v2673
        %v3334 = vunpack.c.h.b16 %v2673
        %v3335 = vunpack.c.l.b16 %v2674
        %v3336 = vunpack.c.h.b16 %v2674
        %v3337 = vunpack.c.l.b16 %v2675
        %v3338 = vunpack.c.h.b16 %v2675
        %v3339 = vunpack.c.l.b16 %v2676
        %v3340 = vunpack.c.h.b16 %v2676
        %v3341 = vunpack.c.l.b16 %v2677
        %v3342 = vunpack.c.h.b16 %v2677
        %v3343 = vunpack.c.l.b16 %v2678
        %v3344 = vunpack.c.h.b16 %v2678
        %v3345 = vunpack.c.l.b16 %v2679
        %v3346 = vunpack.c.h.b16 %v2679
        %v3347 = vunpack.c.l.b16 %v2680
        %v3348 = vunpack.c.h.b16 %v2680
        %v3349 = vunpack.c.l.b16 %v2681
        %v3350 = vunpack.c.h.b16 %v2681
        %v3351 = vunpack.c.l.b16 %v2682
        %v3352 = vunpack.c.h.b16 %v2682
        %v3353 = vunpack.c.l.b16 %v2683
        %v3354 = vunpack.c.h.b16 %v2683
        %v3355 = vunpack.c.l.b16 %v2684
        %v3356 = vunpack.c.h.b16 %v2684
        %v3357 = vunpack.c.l.b16 %v2685
        %v3358 = vunpack.c.h.b16 %v2685
        %v3359 = vunpack.c.l.b16 %v2686
        %v3360 = vunpack.c.h.b16 %v2686
        %v3361 = vunpack.c.l.b16 %v2687
        %v3362 = vunpack.c.h.b16 %v2687
        %v3363 = vunpack.c.l.b16 %v2688
        %v3364 = vunpack.c.h.b16 %v2688
        %v3365 = vunpack.c.l.b16 %v2689
        %v3366 = vunpack.c.h.b16 %v2689
        %v3367 = vunpack.c.l.b16 %v2690
        %v3368 = vunpack.c.h.b16 %v2690
        %v3369 = vunpack.c.l.b16 %v2691
        %v3370 = vunpack.c.h.b16 %v2691
        %v3371 = vunpack.c.l.b16 %v2692
        %v3372 = vunpack.c.h.b16 %v2692
        %v3373 = vunpack.c.l.b16 %v2693
        %v3374 = vunpack.c.h.b16 %v2693
        %v3375 = vunpack.c.l.b16 %v2694
        %v3376 = vunpack.c.h.b16 %v2694
        %v3377 = vunpack.c.l.b16 %v2695
        %v3378 = vunpack.c.h.b16 %v2695
        %v3379 = vunpack.c.l.b16 %v2696
        %v3380 = vunpack.c.h.b16 %v2696
        %v3381 = vunpack.c.l.b16 %v2697
        %v3382 = vunpack.c.h.b16 %v2697
        %v3383 = vunpack.c.l.b16 %v2698
        %v3384 = vunpack.c.h.b16 %v2698
        %v3385 = vunpack.c.l.b16 %v2699
        %v3386 = vunpack.c.h.b16 %v2699
        %v3387 = vunpack.c.l.b16 %v2700
        %v3388 = vunpack.c.h.b16 %v2700
        %v3389 = vunpack.c.l.b16 %v2701
        %v3390 = vunpack.c.h.b16 %v2701
        %v3391 = vunpack.c.l.b16 %v2702
        %v3392 = vunpack.c.h.b16 %v2702
        %v3393 = vunpack.c.l.b16 %v2703
        %v3394 = vunpack.c.h.b16 %v2703
        %v3395 = vunpack.c.l.b16 %v2704
        %v3396 = vunpack.c.h.b16 %v2704
        %v3397 = vunpack.c.l.b16 %v2705
        %v3398 = vunpack.c.h.b16 %v2705
        %v3399 = vunpack.c.l.b16 %v2706
        %v3400 = vunpack.c.h.b16 %v2706
        %v3401 = vunpack.c.l.b16 %v2707
        %v3402 = vunpack.c.h.b16 %v2707
        %v3403 = vunpack.c.l.b16 %v2708
        %v3404 = vunpack.c.h.b16 %v2708
        %v3405 = vunpack.c.l.b16 %v2709
        %v3406 = vunpack.c.h.b16 %v2709
        %v3407 = vunpack.c.l.b16 %v2710
        %v3408 = vunpack.c.h.b16 %v2710
        %v3409 = vunpack.c.l.b16 %v2711
        %v3410 = vunpack.c.h.b16 %v2711
        %v3411 = vunpack.c.l.b16 %v2712
        %v3412 = vunpack.c.h.b16 %v2712
        %v3413 = vunpack.c.l.b16 %v2713
        %v3414 = vunpack.c.h.b16 %v2713
        %v3415 = vunpack.c.l.b16 %v2714
        %v3416 = vunpack.c.h.b16 %v2714
        %v3417 = vunpack.c.l.b16 %v2715
        %v3418 = vunpack.c.h.b16 %v2715
        %v3419 = vunpack.c.l.b16 %v2716
        %v3420 = vunpack.c.h.b16 %v2716
        %v3421 = vunpack.c.l.b16 %v2717
        %v3422 = vunpack.c.h.b16 %v2717
        %v3423 = vunpack.c.l.b16 %v2718
        %v3424 = vunpack.c.h.b16 %v2718
        %v3425 = vunpack.c.l.b16 %v2719
        %v3426 = vunpack.c.h.b16 %v2719
        %v3427 = vunpack.c.l.b16 %v2720
        %v3428 = vunpack.c.h.b16 %v2720
        %v3429 = vunpack.c.l.b16 %v2721
        %v3430 = vunpack.c.h.b16 %v2721
        %v3431 = vunpack.c.l.b16 %v2722
        %v3432 = vunpack.c.h.b16 %v2722
        %v3433 = vunpack.c.l.b16 %v2723
        %v3434 = vunpack.c.h.b16 %v2723
        %v3435 = vunpack.c.l.b16 %v2724
        %v3436 = vunpack.c.h.b16 %v2724
        %v3437 = vunpack.c.l.b16 %v2725
        %v3438 = vunpack.c.h.b16 %v2725
        %v3439 = vunpack.c.l.b16 %v2726
        %v3440 = vunpack.c.h.b16 %v2726
        %v3441 = vunpack.c.l.b16 %v2727
        %v3442 = vunpack.c.h.b16 %v2727
        %v3443 = vunpack.c.l.b16 %v2728
        %v3444 = vunpack.c.h.b16 %v2728
        %v3445 = vunpack.c.l.b16 %v2729
        %v3446 = vunpack.c.h.b16 %v2729
        %v3447 = vunpack.c.l.b16 %v2730
        %v3448 = vunpack.c.h.b16 %v2730
        %v3449 = vunpack.c.l.b16 %v2731
        %v3450 = vunpack.c.h.b16 %v2731
        %v3451 = vunpack.c.l.b16 %v2732
        %v3452 = vunpack.c.h.b16 %v2732
        %v3453 = vunpack.c.l.b16 %v2733
        %v3454 = vunpack.c.h.b16 %v2733
        %v3455 = vunpack.c.l.b16 %v2734
        %v3456 = vunpack.c.h.b16 %v2734
        %v3457 = vunpack.c.l.b16 %v2735
        %v3458 = vunpack.c.h.b16 %v2735
        %v3459 = vunpack.c.l.b16 %v2736
        %v3460 = vunpack.c.h.b16 %v2736
        %v3461 = vunpack.c.l.b16 %v2737
        %v3462 = vunpack.c.h.b16 %v2737
        %v3463 = vunpack.c.l.b16 %v2738
        %v3464 = vunpack.c.h.b16 %v2738
        %v3465 = vunpack.c.l.b16 %v2739
        %v3466 = vunpack.c.h.b16 %v2739
        %v3467 = vunpack.c.l.b16 %v2740
        %v3468 = vunpack.c.h.b16 %v2740
        %v3469 = vunpack.c.l.b16 %v2741
        %v3470 = vunpack.c.h.b16 %v2741
        %v3471 = vunpack.c.l.b16 %v2742
        %v3472 = vunpack.c.h.b16 %v2742
        %v3473 = vunpack.c.l.b16 %v2743
        %v3474 = vunpack.c.h.b16 %v2743
        %v3475 = vunpack.c.l.b16 %v2744
        %v3476 = vunpack.c.h.b16 %v2744
        %v3477 = vunpack.c.l.b16 %v2745
        %v3478 = vunpack.c.h.b16 %v2745
        %v3479 = vunpack.c.l.b16 %v2746
        %v3480 = vunpack.c.h.b16 %v2746
        %v3481 = vunpack.c.l.b16 %v2747
        %v3482 = vunpack.c.h.b16 %v2747
        %v3483 = vunpack.c.l.b16 %v2748
        %v3484 = vunpack.c.h.b16 %v2748
        %v3485 = vunpack.c.l.b16 %v2749
        %v3486 = vunpack.c.h.b16 %v2749
        %v3487 = vunpack.c.l.b16 %v2750
        %v3488 = vunpack.c.h.b16 %v2750
        %v3489 = vunpack.c.l.b16 %v2751
        %v3490 = vunpack.c.h.b16 %v2751
        %v3491 = vunpack.c.l.b16 %v2752
        %v3492 = vunpack.c.h.b16 %v2752
        %v3493 = vunpack.c.l.b16 %v2753
        %v3494 = vunpack.c.h.b16 %v2753
        %v3495 = vunpack.c.l.b16 %v2754
        %v3496 = vunpack.c.h.b16 %v2754
        %v3497 = vunpack.c.l.b16 %v2755
        %v3498 = vunpack.c.h.b16 %v2755
        %v3499 = vunpack.c.l.b16 %v2756
        %v3500 = vunpack.c.h.b16 %v2756
        %v3501 = vunpack.c.l.b16 %v2757
        %v3502 = vunpack.c.h.b16 %v2757
        %v3503 = vunpack.c.l.b16 %v2758
        %v3504 = vunpack.c.h.b16 %v2758
        %v3505 = vunpack.c.l.b16 %v2759
        %v3506 = vunpack.c.h.b16 %v2759
        %v3507 = vunpack.c.l.b16 %v2760
        %v3508 = vunpack.c.h.b16 %v2760
        %v3509 = vunpack.c.l.b16 %v2761
        %v3510 = vunpack.c.h.b16 %v2761
        %v3511 = vunpack.c.l.b16 %v2762
        %v3512 = vunpack.c.h.b16 %v2762
        %v3513 = vunpack.c.l.b16 %v2763
        %v3514 = vunpack.c.h.b16 %v2763
        %v3515 = vunpack.c.l.b16 %v2764
        %v3516 = vunpack.c.h.b16 %v2764
        %v3517 = vunpack.c.l.b16 %v2765
        %v3518 = vunpack.c.h.b16 %v2765
        %v3519 = vunpack.c.l.b16 %v2766
        %v3520 = vunpack.c.h.b16 %v2766
        %v3521 = vunpack.c.l.b16 %v2767
        %v3522 = vunpack.c.h.b16 %v2767
        %v3523 = vunpack.c.l.b16 %v2768
        %v3524 = vunpack.c.h.b16 %v2768
        %v3525 = vunpack.c.l.b16 %v2769
        %v3526 = vunpack.c.h.b16 %v2769
        %v3527 = vunpack.c.l.b16 %v2770
        %v3528 = vunpack.c.h.b16 %v2770
        %v3529 = vunpack.c.l.b16 %v2771
        %v3530 = vunpack.c.h.b16 %v2771
        %v3531 = vunpack.c.l.b16 %v2772
        %v3532 = vunpack.c.h.b16 %v2772
        %v3533 = vunpack.c.l.b16 %v2773
        %v3534 = vunpack.c.h.b16 %v2773
        %v3535 = vunpack.c.l.b16 %v2774
        %v3536 = vunpack.c.h.b16 %v2774
        %v3537 = vunpack.c.l.b16 %v2775
        %v3538 = vunpack.c.h.b16 %v2775
        %v3539 = vunpack.c.l.b16 %v2776
        %v3540 = vunpack.c.h.b16 %v2776
        %v3541 = vunpack.c.l.b16 %v2777
        %v3542 = vunpack.c.h.b16 %v2777
        %v3543 = vunpack.c.l.b16 %v2778
        %v3544 = vunpack.c.h.b16 %v2778
        %v3545 = vunpack.c.l.b16 %v2779
        %v3546 = vunpack.c.h.b16 %v2779
        %v3547 = vunpack.c.l.b16 %v2780
        %v3548 = vunpack.c.h.b16 %v2780
        %v3549 = vunpack.c.l.b16 %v2781
        %v3550 = vunpack.c.h.b16 %v2781
        %v3551 = vunpack.c.l.b16 %v2782
        %v3552 = vunpack.c.h.b16 %v2782
        %v3553 = vunpack.c.l.b16 %v2783
        %v3554 = vunpack.c.h.b16 %v2783
        %v3555 = vunpack.c.l.b16 %v2784
        %v3556 = vunpack.c.h.b16 %v2784
        %v3557 = vunpack.c.l.b16 %v2785
        %v3558 = vunpack.c.h.b16 %v2785
        %v3559 = vunpack.c.l.b16 %v2786
        %v3560 = vunpack.c.h.b16 %v2786
        %v3561 = vunpack.c.l.b16 %v2787
        %v3562 = vunpack.c.h.b16 %v2787
        %v3563 = vunpack.c.l.b16 %v2788
        %v3564 = vunpack.c.h.b16 %v2788
        %v3565 = vunpack.c.l.b16 %v2789
        %v3566 = vunpack.c.h.b16 %v2789
        %v3567 = vunpack.c.l.b16 %v2790
        %v3568 = vunpack.c.h.b16 %v2790
        %v3569 = vunpack.c.l.b16 %v2791
        %v3570 = vunpack.c.h.b16 %v2791
        %v3571 = vunpack.c.l.b16 %v2792
        %v3572 = vunpack.c.h.b16 %v2792
        %v3573 = vunpack.c.l.b16 %v2793
        %v3574 = vunpack.c.h.b16 %v2793
        %v3575 = vunpack.c.l.b16 %v2794
        %v3576 = vunpack.c.h.b16 %v2794
        %v3577 = vunpack.c.l.b16 %v2795
        %v3578 = vunpack.c.h.b16 %v2795
        %v3579 = vunpack.c.l.b16 %v2796
        %v3580 = vunpack.c.h.b16 %v2796
        %v3581 = vunpack.c.l.b16 %v2797
        %v3582 = vunpack.c.h.b16 %v2797
        %v3583 = vunpack.c.l.b16 %v2798
        %v3584 = vunpack.c.h.b16 %v2798
        %v3585 = vunpack.c.l.b16 %v2799
        %v3586 = vunpack.c.h.b16 %v2799
        %v3587 = vunpack.c.l.b16 %v2800
        %v3588 = vunpack.c.h.b16 %v2800
        %v3589 = vunpack.c.l.b16 %v2801
        %v3590 = vunpack.c.h.b16 %v2801
        %v3591 = vunpack.c.l.b16 %v2802
        %v3592 = vunpack.c.h.b16 %v2802
        %v3593 = vunpack.c.l.b16 %v2803
        %v3594 = vunpack.c.h.b16 %v2803
        %v3595 = vunpack.c.l.b16 %v2804
        %v3596 = vunpack.c.h.b16 %v2804
        %v3597 = vunpack.c.l.b16 %v2805
        %v3598 = vunpack.c.h.b16 %v2805
        %v3599 = vunpack.c.l.b16 %v2806
        %v3600 = vunpack.c.h.b16 %v2806
        %v3601 = vunpack.c.l.b16 %v2807
        %v3602 = vunpack.c.h.b16 %v2807
        %v3603 = vunpack.c.l.b16 %v2808
        %v3604 = vunpack.c.h.b16 %v2808
        %v3605 = vunpack.c.l.b16 %v2809
        %v3606 = vunpack.c.h.b16 %v2809
        %v3607 = vunpack.c.l.b16 %v2810
        %v3608 = vunpack.c.h.b16 %v2810
        %v3609 = vunpack.c.l.b16 %v2811
        %v3610 = vunpack.c.h.b16 %v2811
        %v3611 = vunpack.c.l.b16 %v2812
        %v3612 = vunpack.c.h.b16 %v2812
        %v3613 = vunpack.c.l.b16 %v2813
        %v3614 = vunpack.c.h.b16 %v2813
        %v3615 = vunpack.c.l.b16 %v2814
        %v3616 = vunpack.c.h.b16 %v2814
        %v3617 = vunpack.c.l.b16 %v2815
        %v3618 = vunpack.c.h.b16 %v2815
        %v3619 = vunpack.c.l.b16 %v2816
        %v3620 = vunpack.c.h.b16 %v2816
        %v3621 = vunpack.c.l.b16 %v2817
        %v3622 = vunpack.c.h.b16 %v2817
        %v3623 = vunpack.c.l.b16 %v2818
        %v3624 = vunpack.c.h.b16 %v2818
        %v3625 = vunpack.c.l.b16 %v2819
        %v3626 = vunpack.c.h.b16 %v2819
        %v3627 = vunpack.c.l.b16 %v2820
        %v3628 = vunpack.c.h.b16 %v2820
        %v3629 = vunpack.c.l.b16 %v2821
        %v3630 = vunpack.c.h.b16 %v2821
        %v3631 = vunpack.c.l.b16 %v2822
        %v3632 = vunpack.c.h.b16 %v2822
        %v3633 = vunpack.c.l.b16 %v2823
        %v3634 = vunpack.c.h.b16 %v2823
        %v3635 = vunpack.c.l.b16 %v2824
        %v3636 = vunpack.c.h.b16 %v2824
        %v3637 = vunpack.c.l.b16 %v2825
        %v3638 = vunpack.c.h.b16 %v2825
        %v3639 = vunpack.c.l.b16 %v2826
        %v3640 = vunpack.c.h.b16 %v2826
        %v3641 = vunpack.c.l.b16 %v2827
        %v3642 = vunpack.c.h.b16 %v2827
        %v3643 = vunpack.c.l.b16 %v2828
        %v3644 = vunpack.c.h.b16 %v2828
        %v3645 = vunpack.c.l.b16 %v2829
        %v3646 = vunpack.c.h.b16 %v2829
        %v3647 = vunpack.c.l.b16 %v2830
        %v3648 = vunpack.c.h.b16 %v2830
        %v3649 = vunpack.c.l.b16 %v2831
        %v3650 = vunpack.c.h.b16 %v2831
        %v3651 = vunpack.c.l.b16 %v2832
        %v3652 = vunpack.c.h.b16 %v2832
        %v3653 = vunpack.c.l.b16 %v2833
        %v3654 = vunpack.c.h.b16 %v2833
        %v3655 = vunpack.c.l.b16 %v2834
        %v3656 = vunpack.c.h.b16 %v2834
        %v3657 = vunpack.c.l.b16 %v2835
        %v3658 = vunpack.c.h.b16 %v2835
        %v3659 = vunpack.c.l.b16 %v2836
        %v3660 = vunpack.c.h.b16 %v2836
        %v3661 = vunpack.c.l.b16 %v2837
        %v3662 = vunpack.c.h.b16 %v2837
        %v3663 = vunpack.c.l.b16 %v2838
        %v3664 = vunpack.c.h.b16 %v2838
        %v3665 = vunpack.c.l.b16 %v2839
        %v3666 = vunpack.c.h.b16 %v2839
        %v3667 = vunpack.c.l.b16 %v2840
        %v3668 = vunpack.c.h.b16 %v2840
        %v3669 = vunpack.c.l.b16 %v2841
        %v3670 = vunpack.c.h.b16 %v2841
        %v3671 = vunpack.c.l.b16 %v2842
        %v3672 = vunpack.c.h.b16 %v2842
        %v3673 = vunpack.c.l.b16 %v2843
        %v3674 = vunpack.c.h.b16 %v2843
        %v3675 = vunpack.c.l.b16 %v2844
        %v3676 = vunpack.c.h.b16 %v2844
        %v3677 = vpack.c.b16 %v3169, %v3165
        %v3678 = vpack.c.b16 %v3170, %v3166
        %v3679 = vpack.c.b16 %v3171, %v3167
        %v3680 = vpack.c.b16 %v3172, %v3168
        %v3681 = vpack.c.b16 %v3177, %v3173
        %v3682 = vpack.c.b16 %v3178, %v3174
        %v3683 = vpack.c.b16 %v3179, %v3175
        %v3684 = vpack.c.b16 %v3180, %v3176
        %v3685 = vpack.c.b16 %v3185, %v3181
        %v3686 = vpack.c.b16 %v3186, %v3182
        %v3687 = vpack.c.b16 %v3187, %v3183
        %v3688 = vpack.c.b16 %v3188, %v3184
        %v3689 = vpack.c.b16 %v3193, %v3189
        %v3690 = vpack.c.b16 %v3194, %v3190
        %v3691 = vpack.c.b16 %v3195, %v3191
        %v3692 = vpack.c.b16 %v3196, %v3192
        %v3693 = vpack.c.b16 %v3201, %v3197
        %v3694 = vpack.c.b16 %v3202, %v3198
        %v3695 = vpack.c.b16 %v3203, %v3199
        %v3696 = vpack.c.b16 %v3204, %v3200
        %v3697 = vpack.c.b16 %v3209, %v3205
        %v3698 = vpack.c.b16 %v3210, %v3206
        %v3699 = vpack.c.b16 %v3211, %v3207
        %v3700 = vpack.c.b16 %v3212, %v3208
        %v3701 = vpack.c.b16 %v3217, %v3213
        %v3702 = vpack.c.b16 %v3218, %v3214
        %v3703 = vpack.c.b16 %v3219, %v3215
        %v3704 = vpack.c.b16 %v3220, %v3216
        %v3705 = vpack.c.b16 %v3225, %v3221
        %v3706 = vpack.c.b16 %v3226, %v3222
        %v3707 = vpack.c.b16 %v3227, %v3223
        %v3708 = vpack.c.b16 %v3228, %v3224
        %v3709 = vpack.c.b16 %v3233, %v3229
        %v3710 = vpack.c.b16 %v3234, %v3230
        %v3711 = vpack.c.b16 %v3235, %v3231
        %v3712 = vpack.c.b16 %v3236, %v3232
        %v3713 = vpack.c.b16 %v3241, %v3237
        %v3714 = vpack.c.b16 %v3242, %v3238
        %v3715 = vpack.c.b16 %v3243, %v3239
        %v3716 = vpack.c.b16 %v3244, %v3240
        %v3717 = vpack.c.b16 %v3249, %v3245
        %v3718 = vpack.c.b16 %v3250, %v3246
        %v3719 = vpack.c.b16 %v3251, %v3247
        %v3720 = vpack.c.b16 %v3252, %v3248
        %v3721 = vpack.c.b16 %v3257, %v3253
        %v3722 = vpack.c.b16 %v3258, %v3254
        %v3723 = vpack.c.b16 %v3259, %v3255
        %v3724 = vpack.c.b16 %v3260, %v3256
        %v3725 = vpack.c.b16 %v3265, %v3261
        %v3726 = vpack.c.b16 %v3266, %v3262
        %v3727 = vpack.c.b16 %v3267, %v3263
        %v3728 = vpack.c.b16 %v3268, %v3264
        %v3729 = vpack.c.b16 %v3273, %v3269
        %v3730 = vpack.c.b16 %v3274, %v3270
        %v3731 = vpack.c.b16 %v3275, %v3271
        %v3732 = vpack.c.b16 %v3276, %v3272
        %v3733 = vpack.c.b16 %v3281, %v3277
        %v3734 = vpack.c.b16 %v3282, %v3278
        %v3735 = vpack.c.b16 %v3283, %v3279
        %v3736 = vpack.c.b16 %v3284, %v3280
        %v3737 = vpack.c.b16 %v3289, %v3285
        %v3738 = vpack.c.b16 %v3290, %v3286
        %v3739 = vpack.c.b16 %v3291, %v3287
        %v3740 = vpack.c.b16 %v3292, %v3288
        %v3741 = vpack.c.b16 %v3297, %v3293
        %v3742 = vpack.c.b16 %v3298, %v3294
        %v3743 = vpack.c.b16 %v3299, %v3295
        %v3744 = vpack.c.b16 %v3300, %v3296
        %v3745 = vpack.c.b16 %v3305, %v3301
        %v3746 = vpack.c.b16 %v3306, %v3302
        %v3747 = vpack.c.b16 %v3307, %v3303
        %v3748 = vpack.c.b16 %v3308, %v3304
        %v3749 = vpack.c.b16 %v3313, %v3309
        %v3750 = vpack.c.b16 %v3314, %v3310
        %v3751 = vpack.c.b16 %v3315, %v3311
        %v3752 = vpack.c.b16 %v3316, %v3312
        %v3753 = vpack.c.b16 %v3321, %v3317
        %v3754 = vpack.c.b16 %v3322, %v3318
        %v3755 = vpack.c.b16 %v3323, %v3319
        %v3756 = vpack.c.b16 %v3324, %v3320
        %v3757 = vpack.c.b16 %v3329, %v3325
        %v3758 = vpack.c.b16 %v3330, %v3326
        %v3759 = vpack.c.b16 %v3331, %v3327
        %v3760 = vpack.c.b16 %v3332, %v3328
        %v3761 = vpack.c.b16 %v3337, %v3333
        %v3762 = vpack.c.b16 %v3338, %v3334
        %v3763 = vpack.c.b16 %v3339, %v3335
        %v3764 = vpack.c.b16 %v3340, %v3336
        %v3765 = vpack.c.b16 %v3345, %v3341
        %v3766 = vpack.c.b16 %v3346, %v3342
        %v3767 = vpack.c.b16 %v3347, %v3343
        %v3768 = vpack.c.b16 %v3348, %v3344
        %v3769 = vpack.c.b16 %v3353, %v3349
        %v3770 = vpack.c.b16 %v3354, %v3350
        %v3771 = vpack.c.b16 %v3355, %v3351
        %v3772 = vpack.c.b16 %v3356, %v3352
        %v3773 = vpack.c.b16 %v3361, %v3357
        %v3774 = vpack.c.b16 %v3362, %v3358
        %v3775 = vpack.c.b16 %v3363, %v3359
        %v3776 = vpack.c.b16 %v3364, %v3360
        %v3777 = vpack.c.b16 %v3369, %v3365
        %v3778 = vpack.c.b16 %v3370, %v3366
        %v3779 = vpack.c.b16 %v3371, %v3367
        %v3780 = vpack.c.b16 %v3372, %v3368
        %v3781 = vpack.c.b16 %v3377, %v3373
        %v3782 = vpack.c.b16 %v3378, %v3374
        %v3783 = vpack.c.b16 %v3379, %v3375
        %v3784 = vpack.c.b16 %v3380, %v3376
        %v3785 = vpack.c.b16 %v3385, %v3381
        %v3786 = vpack.c.b16 %v3386, %v3382
        %v3787 = vpack.c.b16 %v3387, %v3383
        %v3788 = vpack.c.b16 %v3388, %v3384
        %v3789 = vpack.c.b16 %v3393, %v3389
        %v3790 = vpack.c.b16 %v3394, %v3390
        %v3791 = vpack.c.b16 %v3395, %v3391
        %v3792 = vpack.c.b16 %v3396, %v3392
        %v3793 = vpack.c.b16 %v3401, %v3397
        %v3794 = vpack.c.b16 %v3402, %v3398
        %v3795 = vpack.c.b16 %v3403, %v3399
        %v3796 = vpack.c.b16 %v3404, %v3400
        %v3797 = vpack.c.b16 %v3409, %v3405
        %v3798 = vpack.c.b16 %v3410, %v3406
        %v3799 = vpack.c.b16 %v3411, %v3407
        %v3800 = vpack.c.b16 %v3412, %v3408
        %v3801 = vpack.c.b16 %v3417, %v3413
        %v3802 = vpack.c.b16 %v3418, %v3414
        %v3803 = vpack.c.b16 %v3419, %v3415
        %v3804 = vpack.c.b16 %v3420, %v3416
        %v3805 = vpack.c.b16 %v3425, %v3421
        %v3806 = vpack.c.b16 %v3426, %v3422
        %v3807 = vpack.c.b16 %v3427, %v3423
        %v3808 = vpack.c.b16 %v3428, %v3424
        %v3809 = vpack.c.b16 %v3433, %v3429
        %v3810 = vpack.c.b16 %v3434, %v3430
        %v3811 = vpack.c.b16 %v3435, %v3431
        %v3812 = vpack.c.b16 %v3436, %v3432
        %v3813 = vpack.c.b16 %v3441, %v3437
        %v3814 = vpack.c.b16 %v3442, %v3438
        %v3815 = vpack.c.b16 %v3443, %v3439
        %v3816 = vpack.c.b16 %v3444, %v3440
        %v3817 = vpack.c.b16 %v3449, %v3445
        %v3818 = vpack.c.b16 %v3450, %v3446
        %v3819 = vpack.c.b16 %v3451, %v3447
        %v3820 = vpack.c.b16 %v3452, %v3448
        %v3821 = vpack.c.b16 %v3457, %v3453
        %v3822 = vpack.c.b16 %v3458, %v3454
        %v3823 = vpack.c.b16 %v3459, %v3455
        %v3824 = vpack.c.b16 %v3460, %v3456
        %v3825 = vpack.c.b16 %v3465, %v3461
        %v3826 = vpack.c.b16 %v3466, %v3462
        %v3827 = vpack.c.b16 %v3467, %v3463
        %v3828 = vpack.c.b16 %v3468, %v3464
        %v3829 = vpack.c.b16 %v3473, %v3469
        %v3830 = vpack.c.b16 %v3474, %v3470
        %v3831 = vpack.c.b16 %v3475, %v3471
        %v3832 = vpack.c.b16 %v3476, %v3472
        %v3833 = vpack.c.b16 %v3481, %v3477
        %v3834 = vpack.c.b16 %v3482, %v3478
        %v3835 = vpack.c.b16 %v3483, %v3479
        %v3836 = vpack.c.b16 %v3484, %v3480
        %v3837 = vpack.c.b16 %v3489, %v3485
        %v3838 = vpack.c.b16 %v3490, %v3486
        %v3839 = vpack.c.b16 %v3491, %v3487
        %v3840 = vpack.c.b16 %v3492, %v3488
        %v3841 = vpack.c.b16 %v3497, %v3493
        %v3842 = vpack.c.b16 %v3498, %v3494
        %v3843 = vpack.c.b16 %v3499, %v3495
        %v3844 = vpack.c.b16 %v3500, %v3496
        %v3845 = vpack.c.b16 %v3505, %v3501
        %v3846 = vpack.c.b16 %v3506, %v3502
        %v3847 = vpack.c.b16 %v3507, %v3503
        %v3848 = vpack.c.b16 %v3508, %v3504
        %v3849 = vpack.c.b16 %v3513, %v3509
        %v3850 = vpack.c.b16 %v3514, %v3510
        %v3851 = vpack.c.b16 %v3515, %v3511
        %v3852 = vpack.c.b16 %v3516, %v3512
        %v3853 = vpack.c.b16 %v3521, %v3517
        %v3854 = vpack.c.b16 %v3522, %v3518
        %v3855 = vpack.c.b16 %v3523, %v3519
        %v3856 = vpack.c.b16 %v3524, %v3520
        %v3857 = vpack.c.b16 %v3529, %v3525
        %v3858 = vpack.c.b16 %v3530, %v3526
        %v3859 = vpack.c.b16 %v3531, %v3527
        %v3860 = vpack.c.b16 %v3532, %v3528
        %v3861 = vpack.c.b16 %v3537, %v3533
        %v3862 = vpack.c.b16 %v3538, %v3534
        %v3863 = vpack.c.b16 %v3539, %v3535
        %v3864 = vpack.c.b16 %v3540, %v3536
        %v3865 = vpack.c.b16 %v3545, %v3541
        %v3866 = vpack.c.b16 %v3546, %v3542
        %v3867 = vpack.c.b16 %v3547, %v3543
        %v3868 = vpack.c.b16 %v3548, %v3544
        %v3869 = vpack.c.b16 %v3553, %v3549
        %v3870 = vpack.c.b16 %v3554, %v3550
        %v3871 = vpack.c.b16 %v3555, %v3551
        %v3872 = vpack.c.b16 %v3556, %v3552
        %v3873 = vpack.c.b16 %v3561, %v3557
        %v3874 = vpack.c.b16 %v3562, %v3558
        %v3875 = vpack.c.b16 %v3563, %v3559
        %v3876 = vpack.c.b16 %v3564, %v3560
        %v3877 = vpack.c.b16 %v3569, %v3565
        %v3878 = vpack.c.b16 %v3570, %v3566
        %v3879 = vpack.c.b16 %v3571, %v3567
        %v3880 = vpack.c.b16 %v3572, %v3568
        %v3881 = vpack.c.b16 %v3577, %v3573
        %v3882 = vpack.c.b16 %v3578, %v3574
        %v3883 = vpack.c.b16 %v3579, %v3575
        %v3884 = vpack.c.b16 %v3580, %v3576
        %v3885 = vpack.c.b16 %v3585, %v3581
        %v3886 = vpack.c.b16 %v3586, %v3582
        %v3887 = vpack.c.b16 %v3587, %v3583
        %v3888 = vpack.c.b16 %v3588, %v3584
        %v3889 = vpack.c.b16 %v3593, %v3589
        %v3890 = vpack.c.b16 %v3594, %v3590
        %v3891 = vpack.c.b16 %v3595, %v3591
        %v3892 = vpack.c.b16 %v3596, %v3592
        %v3893 = vpack.c.b16 %v3601, %v3597
        %v3894 = vpack.c.b16 %v3602, %v3598
        %v3895 = vpack.c.b16 %v3603, %v3599
        %v3896 = vpack.c.b16 %v3604, %v3600
        %v3897 = vpack.c.b16 %v3609, %v3605
        %v3898 = vpack.c.b16 %v3610, %v3606
        %v3899 = vpack.c.b16 %v3611, %v3607
        %v3900 = vpack.c.b16 %v3612, %v3608
        %v3901 = vpack.c.b16 %v3617, %v3613
        %v3902 = vpack.c.b16 %v3618, %v3614
        %v3903 = vpack.c.b16 %v3619, %v3615
        %v3904 = vpack.c.b16 %v3620, %v3616
        %v3905 = vpack.c.b16 %v3625, %v3621
        %v3906 = vpack.c.b16 %v3626, %v3622
        %v3907 = vpack.c.b16 %v3627, %v3623
        %v3908 = vpack.c.b16 %v3628, %v3624
        %v3909 = vpack.c.b16 %v3633, %v3629
        %v3910 = vpack.c.b16 %v3634, %v3630
        %v3911 = vpack.c.b16 %v3635, %v3631
        %v3912 = vpack.c.b16 %v3636, %v3632
        %v3913 = vpack.c.b16 %v3641, %v3637
        %v3914 = vpack.c.b16 %v3642, %v3638
        %v3915 = vpack.c.b16 %v3643, %v3639
        %v3916 = vpack.c.b16 %v3644, %v3640
        %v3917 = vpack.c.b16 %v3649, %v3645
        %v3918 = vpack.c.b16 %v3650, %v3646
        %v3919 = vpack.c.b16 %v3651, %v3647
        %v3920 = vpack.c.b16 %v3652, %v3648
        %v3921 = vpack.c.b16 %v3657, %v3653
        %v3922 = vpack.c.b16 %v3658, %v3654
        %v3923 = vpack.c.b16 %v3659, %v3655
        %v3924 = vpack.c.b16 %v3660, %v3656
        %v3925 = vpack.c.b16 %v3665, %v3661
        %v3926 = vpack.c.b16 %v3666, %v3662
        %v3927 = vpack.c.b16 %v3667, %v3663
        %v3928 = vpack.c.b16 %v3668, %v3664
        %v3929 = vpack.c.b16 %v3673, %v3669
        %v3930 = vpack.c.b16 %v3674, %v3670
        %v3931 = vpack.c.b16 %v3675, %v3671
        %v3932 = vpack.c.b16 %v3676, %v3672
        %v4253 = vunpack.c.l.b16 %v2845
        %v4254 = vunpack.c.l.b16 %v2846
        %v4255 = vunpack.c.l.b16 %v2847
        %v4256 = vunpack.c.l.b16 %v2848
        %v4257 = vunpack.c.l.b16 %v2849
        %v4258 = vunpack.c.l.b16 %v2850
        %v4259 = vunpack.c.l.b16 %v2851
        %v4260 = vunpack.c.l.b16 %v2852
        %v4261 = vunpack.c.l.b16 %v2853
        %v4262 = vunpack.c.l.b16 %v2854
        %v4263 = vunpack.c.l.b16 %v2855
        %v4264 = vunpack.c.l.b16 %v2856
        %v4265 = vunpack.c.l.b16 %v2857
        %v4266 = vunpack.c.l.b16 %v2858
        %v4267 = vunpack.c.l.b16 %v2859
        %v4268 = vunpack.c.l.b16 %v2860
        %v4269 = vunpack.c.l.b16 %v2861
        %v4270 = vunpack.c.l.b16 %v2862
        %v4271 = vunpack.c.l.b16 %v2863
        %v4272 = vunpack.c.l.b16 %v2864
        %v4273 = vunpack.c.l.b16 %v2865
        %v4274 = vunpack.c.l.b16 %v2866
        %v4275 = vunpack.c.l.b16 %v2867
        %v4276 = vunpack.c.l.b16 %v2868
        %v4277 = vunpack.c.l.b16 %v2869
        %v4278 = vunpack.c.l.b16 %v2870
        %v4279 = vunpack.c.l.b16 %v2871
        %v4280 = vunpack.c.l.b16 %v2872
        %v4281 = vunpack.c.l.b16 %v2873
        %v4282 = vunpack.c.l.b16 %v2874
        %v4283 = vunpack.c.l.b16 %v2875
        %v4284 = vunpack.c.l.b16 %v2876
        %v4285 = vunpack.c.l.b16 %v2877
        %v4286 = vunpack.c.l.b16 %v2878
        %v4287 = vunpack.c.l.b16 %v2879
        %v4288 = vunpack.c.l.b16 %v2880
        %v4289 = vunpack.c.l.b16 %v2881
        %v4290 = vunpack.c.l.b16 %v2882
        %v4291 = vunpack.c.l.b16 %v2883
        %v4292 = vunpack.c.l.b16 %v2884
        %v4293 = vunpack.c.l.b16 %v2885
        %v4294 = vunpack.c.l.b16 %v2886
        %v4295 = vunpack.c.l.b16 %v2887
        %v4296 = vunpack.c.l.b16 %v2888
        %v4297 = vunpack.c.l.b16 %v2889
        %v4298 = vunpack.c.l.b16 %v2890
        %v4299 = vunpack.c.l.b16 %v2891
        %v4300 = vunpack.c.l.b16 %v2892
        %v4301 = vunpack.c.l.b16 %v2893
        %v4302 = vunpack.c.l.b16 %v2894
        %v4303 = vunpack.c.l.b16 %v2895
        %v4304 = vunpack.c.l.b16 %v2896
        %v4305 = vunpack.c.l.b16 %v2897
        %v4306 = vunpack.c.l.b16 %v2898
        %v4307 = vunpack.c.l.b16 %v2899
        %v4308 = vunpack.c.l.b16 %v2900
        %v4309 = vunpack.c.l.b16 %v2901
        %v4310 = vunpack.c.l.b16 %v2902
        %v4311 = vunpack.c.l.b16 %v2903
        %v4312 = vunpack.c.l.b16 %v2904
        %v4313 = vunpack.c.l.b16 %v2905
        %v4314 = vunpack.c.l.b16 %v2906
        %v4315 = vunpack.c.l.b16 %v2907
        %v4316 = vunpack.c.l.b16 %v2908
        %v4317 = vpack.c.b16 %v4254, %v4253
        %v4318 = vpack.c.b16 %v4256, %v4255
        %v4319 = vpack.c.b16 %v4258, %v4257
        %v4320 = vpack.c.b16 %v4260, %v4259
        %v4321 = vpack.c.b16 %v4262, %v4261
        %v4322 = vpack.c.b16 %v4264, %v4263
        %v4323 = vpack.c.b16 %v4266, %v4265
        %v4324 = vpack.c.b16 %v4268, %v4267
        %v4325 = vpack.c.b16 %v4270, %v4269
        %v4326 = vpack.c.b16 %v4272, %v4271
        %v4327 = vpack.c.b16 %v4274, %v4273
        %v4328 = vpack.c.b16 %v4276, %v4275
        %v4329 = vpack.c.b16 %v4278, %v4277
        %v4330 = vpack.c.b16 %v4280, %v4279
        %v4331 = vpack.c.b16 %v4282, %v4281
        %v4332 = vpack.c.b16 %v4284, %v4283
        %v4333 = vpack.c.b16 %v4286, %v4285
        %v4334 = vpack.c.b16 %v4288, %v4287
        %v4335 = vpack.c.b16 %v4290, %v4289
        %v4336 = vpack.c.b16 %v4292, %v4291
        %v4337 = vpack.c.b16 %v4294, %v4293
        %v4338 = vpack.c.b16 %v4296, %v4295
        %v4339 = vpack.c.b16 %v4298, %v4297
        %v4340 = vpack.c.b16 %v4300, %v4299
        %v4341 = vpack.c.b16 %v4302, %v4301
        %v4342 = vpack.c.b16 %v4304, %v4303
        %v4343 = vpack.c.b16 %v4306, %v4305
        %v4344 = vpack.c.b16 %v4308, %v4307
        %v4345 = vpack.c.b16 %v4310, %v4309
        %v4346 = vpack.c.b16 %v4312, %v4311
        %v4347 = vpack.c.b16 %v4314, %v4313
        %v4348 = vpack.c.b16 %v4316, %v4315
        %4381 = vmatpush.bf16.msra.mxu0 %v4324
        %4382 = vmatpush.bf16.msra.mxu0 %v4323
        %4383 = vmatpush.bf16.msra.mxu0 %v4322
        %4384 = vmatpush.bf16.msra.mxu0 %v4321
        %4385 = vmatpush.bf16.msra.mxu0 %v4320
        %4386 = vmatpush.bf16.msra.mxu0 %v4319
        %4387 = vmatpush.bf16.msra.mxu0 %v4318
        %4388 = vmatpush.bf16.msra.mxu0 %v4317
        %4389 = vmatmul.bf16.gmra.mxu0 %v3677
        %v4390 = vpop.f32.mrf.mxu0
        %v4391 = vadd.f32 0.0, %v4390
        %v4392 = vpop.f32.mrf.mxu0
        %v4393 = vadd.f32 0.0, %v4392
        %4394 = vmatmul.bf16.gmra.mxu0 %v3681
        %v4395 = vpop.f32.mrf.mxu0
        %v4396 = vadd.f32 0.0, %v4395
        %v4397 = vpop.f32.mrf.mxu0
        %v4398 = vadd.f32 0.0, %v4397
        %4399 = vmatmul.bf16.gmra.mxu0 %v3685
        %v4400 = vpop.f32.mrf.mxu0
        %v4401 = vadd.f32 0.0, %v4400
        %v4402 = vpop.f32.mrf.mxu0
        %v4403 = vadd.f32 0.0, %v4402
        %4404 = vmatmul.bf16.gmra.mxu0 %v3689
        %v4405 = vpop.f32.mrf.mxu0
        %v4406 = vadd.f32 0.0, %v4405
        %v4407 = vpop.f32.mrf.mxu0
        %v4408 = vadd.f32 0.0, %v4407
        %4409 = vmatmul.bf16.gmra.mxu0 %v3693
        %v4410 = vpop.f32.mrf.mxu0
        %v4411 = vadd.f32 0.0, %v4410
        %v4412 = vpop.f32.mrf.mxu0
        %v4413 = vadd.f32 0.0, %v4412
        %4414 = vmatmul.bf16.gmra.mxu0 %v3697
        %v4415 = vpop.f32.mrf.mxu0
        %v4416 = vadd.f32 0.0, %v4415
        %v4417 = vpop.f32.mrf.mxu0
        %v4418 = vadd.f32 0.0, %v4417
        %4419 = vmatmul.bf16.gmra.mxu0 %v3701
        %v4420 = vpop.f32.mrf.mxu0
        %v4421 = vadd.f32 0.0, %v4420
        %v4422 = vpop.f32.mrf.mxu0
        %v4423 = vadd.f32 0.0, %v4422
        %4424 = vmatmul.bf16.gmra.mxu0 %v3705
        %v4425 = vpop.f32.mrf.mxu0
        %v4426 = vadd.f32 0.0, %v4425
        %v4427 = vpop.f32.mrf.mxu0
        %v4428 = vadd.f32 0.0, %v4427
        %4429 = vmatmul.bf16.gmra.mxu0 %v3709
        %v4430 = vpop.f32.mrf.mxu0
        %v4431 = vadd.f32 0.0, %v4430
        %v4432 = vpop.f32.mrf.mxu0
        %v4433 = vadd.f32 0.0, %v4432
        %4434 = vmatmul.bf16.gmra.mxu0 %v3713
        %v4435 = vpop.f32.mrf.mxu0
        %v4436 = vadd.f32 0.0, %v4435
        %v4437 = vpop.f32.mrf.mxu0
        %v4438 = vadd.f32 0.0, %v4437
        %4439 = vmatmul.bf16.gmra.mxu0 %v3717
        %v4440 = vpop.f32.mrf.mxu0
        %v4441 = vadd.f32 0.0, %v4440
        %v4442 = vpop.f32.mrf.mxu0
        %v4443 = vadd.f32 0.0, %v4442
        %4444 = vmatmul.bf16.gmra.mxu0 %v3721
        %v4445 = vpop.f32.mrf.mxu0
        %v4446 = vadd.f32 0.0, %v4445
        %v4447 = vpop.f32.mrf.mxu0
        %v4448 = vadd.f32 0.0, %v4447
        %4449 = vmatmul.bf16.gmra.mxu0 %v3725
        %v4450 = vpop.f32.mrf.mxu0
        %v4451 = vadd.f32 0.0, %v4450
        %v4452 = vpop.f32.mrf.mxu0
        %v4453 = vadd.f32 0.0, %v4452
        %4454 = vmatmul.bf16.gmra.mxu0 %v3729
        %v4455 = vpop.f32.mrf.mxu0
        %v4456 = vadd.f32 0.0, %v4455
        %v4457 = vpop.f32.mrf.mxu0
        %v4458 = vadd.f32 0.0, %v4457
        %4459 = vmatmul.bf16.gmra.mxu0 %v3733
        %v4460 = vpop.f32.mrf.mxu0
        %v4461 = vadd.f32 0.0, %v4460
        %v4462 = vpop.f32.mrf.mxu0
        %v4463 = vadd.f32 0.0, %v4462
        %4464 = vmatmul.bf16.gmra.mxu0 %v3737
        %v4465 = vpop.f32.mrf.mxu0
        %v4466 = vadd.f32 0.0, %v4465
        %v4467 = vpop.f32.mrf.mxu0
        %v4468 = vadd.f32 0.0, %v4467
        %4469 = vmatmul.bf16.gmra.mxu0 %v3741
        %v4470 = vpop.f32.mrf.mxu0
        %v4471 = vadd.f32 0.0, %v4470
        %v4472 = vpop.f32.mrf.mxu0
        %v4473 = vadd.f32 0.0, %v4472
        %4474 = vmatmul.bf16.gmra.mxu0 %v3745
        %v4475 = vpop.f32.mrf.mxu0
        %v4476 = vadd.f32 0.0, %v4475
        %v4477 = vpop.f32.mrf.mxu0
        %v4478 = vadd.f32 0.0, %v4477
        %4479 = vmatmul.bf16.gmra.mxu0 %v3749
        %v4480 = vpop.f32.mrf.mxu0
        %v4481 = vadd.f32 0.0, %v4480
        %v4482 = vpop.f32.mrf.mxu0
        %v4483 = vadd.f32 0.0, %v4482
        %4484 = vmatmul.bf16.gmra.mxu0 %v3753
        %v4485 = vpop.f32.mrf.mxu0
        %v4486 = vadd.f32 0.0, %v4485
        %v4487 = vpop.f32.mrf.mxu0
        %v4488 = vadd.f32 0.0, %v4487
        %4489 = vmatmul.bf16.gmra.mxu0 %v3757
        %v4490 = vpop.f32.mrf.mxu0
        %v4491 = vadd.f32 0.0, %v4490
        %v4492 = vpop.f32.mrf.mxu0
        %v4493 = vadd.f32 0.0, %v4492
        %4494 = vmatmul.bf16.gmra.mxu0 %v3761
        %v4495 = vpop.f32.mrf.mxu0
        %v4496 = vadd.f32 0.0, %v4495
        %v4497 = vpop.f32.mrf.mxu0
        %v4498 = vadd.f32 0.0, %v4497
        %4499 = vmatmul.bf16.gmra.mxu0 %v3765
        %v4500 = vpop.f32.mrf.mxu0
        %v4501 = vadd.f32 0.0, %v4500
        %v4502 = vpop.f32.mrf.mxu0
        %v4503 = vadd.f32 0.0, %v4502
        %4504 = vmatmul.bf16.gmra.mxu0 %v3769
        %v4505 = vpop.f32.mrf.mxu0
        %v4506 = vadd.f32 0.0, %v4505
        %v4507 = vpop.f32.mrf.mxu0
        %v4508 = vadd.f32 0.0, %v4507
        %4509 = vmatmul.bf16.gmra.mxu0 %v3773
        %v4510 = vpop.f32.mrf.mxu0
        %v4511 = vadd.f32 0.0, %v4510
        %v4512 = vpop.f32.mrf.mxu0
        %v4513 = vadd.f32 0.0, %v4512
        %4514 = vmatmul.bf16.gmra.mxu0 %v3777
        %v4515 = vpop.f32.mrf.mxu0
        %v4516 = vadd.f32 0.0, %v4515
        %v4517 = vpop.f32.mrf.mxu0
        %v4518 = vadd.f32 0.0, %v4517
        %4519 = vmatmul.bf16.gmra.mxu0 %v3781
        %v4520 = vpop.f32.mrf.mxu0
        %v4521 = vadd.f32 0.0, %v4520
        %v4522 = vpop.f32.mrf.mxu0
        %v4523 = vadd.f32 0.0, %v4522
        %4524 = vmatmul.bf16.gmra.mxu0 %v3785
        %v4525 = vpop.f32.mrf.mxu0
        %v4526 = vadd.f32 0.0, %v4525
        %v4527 = vpop.f32.mrf.mxu0
        %v4528 = vadd.f32 0.0, %v4527
        %4529 = vmatmul.bf16.gmra.mxu0 %v3789
        %v4530 = vpop.f32.mrf.mxu0
        %v4531 = vadd.f32 0.0, %v4530
        %v4532 = vpop.f32.mrf.mxu0
        %v4533 = vadd.f32 0.0, %v4532
        %4534 = vmatmul.bf16.gmra.mxu0 %v3793
        %v4535 = vpop.f32.mrf.mxu0
        %v4536 = vadd.f32 0.0, %v4535
        %v4537 = vpop.f32.mrf.mxu0
        %v4538 = vadd.f32 0.0, %v4537
        %4539 = vmatmul.bf16.gmra.mxu0 %v3797
        %v4540 = vpop.f32.mrf.mxu0
        %v4541 = vadd.f32 0.0, %v4540
        %v4542 = vpop.f32.mrf.mxu0
        %v4543 = vadd.f32 0.0, %v4542
        %4544 = vmatmul.bf16.gmra.mxu0 %v3801
        %v4545 = vpop.f32.mrf.mxu0
        %v4546 = vadd.f32 0.0, %v4545
        %v4547 = vpop.f32.mrf.mxu0
        %v4548 = vadd.f32 0.0, %v4547
        %4549 = vmatmul.bf16.gmra.mxu0 %v3805
        %v4550 = vpop.f32.mrf.mxu0
        %v4551 = vadd.f32 0.0, %v4550
        %v4552 = vpop.f32.mrf.mxu0
        %v4553 = vadd.f32 0.0, %v4552
        %4554 = vmatmul.bf16.gmra.mxu0 %v3809
        %v4555 = vpop.f32.mrf.mxu0
        %v4556 = vadd.f32 0.0, %v4555
        %v4557 = vpop.f32.mrf.mxu0
        %v4558 = vadd.f32 0.0, %v4557
        %4559 = vmatmul.bf16.gmra.mxu0 %v3813
        %v4560 = vpop.f32.mrf.mxu0
        %v4561 = vadd.f32 0.0, %v4560
        %v4562 = vpop.f32.mrf.mxu0
        %v4563 = vadd.f32 0.0, %v4562
        %4564 = vmatmul.bf16.gmra.mxu0 %v3817
        %v4565 = vpop.f32.mrf.mxu0
        %v4566 = vadd.f32 0.0, %v4565
        %v4567 = vpop.f32.mrf.mxu0
        %v4568 = vadd.f32 0.0, %v4567
        %4569 = vmatmul.bf16.gmra.mxu0 %v3821
        %v4570 = vpop.f32.mrf.mxu0
        %v4571 = vadd.f32 0.0, %v4570
        %v4572 = vpop.f32.mrf.mxu0
        %v4573 = vadd.f32 0.0, %v4572
        %4574 = vmatmul.bf16.gmra.mxu0 %v3825
        %v4575 = vpop.f32.mrf.mxu0
        %v4576 = vadd.f32 0.0, %v4575
        %v4577 = vpop.f32.mrf.mxu0
        %v4578 = vadd.f32 0.0, %v4577
        %4579 = vmatmul.bf16.gmra.mxu0 %v3829
        %v4580 = vpop.f32.mrf.mxu0
        %v4581 = vadd.f32 0.0, %v4580
        %v4582 = vpop.f32.mrf.mxu0
        %v4583 = vadd.f32 0.0, %v4582
        %4584 = vmatmul.bf16.gmra.mxu0 %v3833
        %v4585 = vpop.f32.mrf.mxu0
        %v4586 = vadd.f32 0.0, %v4585
        %v4587 = vpop.f32.mrf.mxu0
        %v4588 = vadd.f32 0.0, %v4587
        %4589 = vmatmul.bf16.gmra.mxu0 %v3837
        %v4590 = vpop.f32.mrf.mxu0
        %v4591 = vadd.f32 0.0, %v4590
        %v4592 = vpop.f32.mrf.mxu0
        %v4593 = vadd.f32 0.0, %v4592
        %4594 = vmatmul.bf16.gmra.mxu0 %v3841
        %v4595 = vpop.f32.mrf.mxu0
        %v4596 = vadd.f32 0.0, %v4595
        %v4597 = vpop.f32.mrf.mxu0
        %v4598 = vadd.f32 0.0, %v4597
        %4599 = vmatmul.bf16.gmra.mxu0 %v3845
        %v4600 = vpop.f32.mrf.mxu0
        %v4601 = vadd.f32 0.0, %v4600
        %v4602 = vpop.f32.mrf.mxu0
        %v4603 = vadd.f32 0.0, %v4602
        %4604 = vmatmul.bf16.gmra.mxu0 %v3849
        %v4605 = vpop.f32.mrf.mxu0
        %v4606 = vadd.f32 0.0, %v4605
        %v4607 = vpop.f32.mrf.mxu0
        %v4608 = vadd.f32 0.0, %v4607
        %4609 = vmatmul.bf16.gmra.mxu0 %v3853
        %v4610 = vpop.f32.mrf.mxu0
        %v4611 = vadd.f32 0.0, %v4610
        %v4612 = vpop.f32.mrf.mxu0
        %v4613 = vadd.f32 0.0, %v4612
        %4614 = vmatmul.bf16.gmra.mxu0 %v3857
        %v4615 = vpop.f32.mrf.mxu0
        %v4616 = vadd.f32 0.0, %v4615
        %v4617 = vpop.f32.mrf.mxu0
        %v4618 = vadd.f32 0.0, %v4617
        %4619 = vmatmul.bf16.gmra.mxu0 %v3861
        %v4620 = vpop.f32.mrf.mxu0
        %v4621 = vadd.f32 0.0, %v4620
        %v4622 = vpop.f32.mrf.mxu0
        %v4623 = vadd.f32 0.0, %v4622
        %4624 = vmatmul.bf16.gmra.mxu0 %v3865
        %v4625 = vpop.f32.mrf.mxu0
        %v4626 = vadd.f32 0.0, %v4625
        %v4627 = vpop.f32.mrf.mxu0
        %v4628 = vadd.f32 0.0, %v4627
        %4629 = vmatmul.bf16.gmra.mxu0 %v3869
        %v4630 = vpop.f32.mrf.mxu0
        %v4631 = vadd.f32 0.0, %v4630
        %v4632 = vpop.f32.mrf.mxu0
        %v4633 = vadd.f32 0.0, %v4632
        %4634 = vmatmul.bf16.gmra.mxu0 %v3873
        %v4635 = vpop.f32.mrf.mxu0
        %v4636 = vadd.f32 0.0, %v4635
        %v4637 = vpop.f32.mrf.mxu0
        %v4638 = vadd.f32 0.0, %v4637
        %4639 = vmatmul.bf16.gmra.mxu0 %v3877
        %v4640 = vpop.f32.mrf.mxu0
        %v4641 = vadd.f32 0.0, %v4640
        %v4642 = vpop.f32.mrf.mxu0
        %v4643 = vadd.f32 0.0, %v4642
        %4644 = vmatmul.bf16.gmra.mxu0 %v3881
        %v4645 = vpop.f32.mrf.mxu0
        %v4646 = vadd.f32 0.0, %v4645
        %v4647 = vpop.f32.mrf.mxu0
        %v4648 = vadd.f32 0.0, %v4647
        %4649 = vmatmul.bf16.gmra.mxu0 %v3885
        %v4650 = vpop.f32.mrf.mxu0
        %v4651 = vadd.f32 0.0, %v4650
        %v4652 = vpop.f32.mrf.mxu0
        %v4653 = vadd.f32 0.0, %v4652
        %4654 = vmatmul.bf16.gmra.mxu0 %v3889
        %v4655 = vpop.f32.mrf.mxu0
        %v4656 = vadd.f32 0.0, %v4655
        %v4657 = vpop.f32.mrf.mxu0
        %v4658 = vadd.f32 0.0, %v4657
        %4659 = vmatmul.bf16.gmra.mxu0 %v3893
        %v4660 = vpop.f32.mrf.mxu0
        %v4661 = vadd.f32 0.0, %v4660
        %v4662 = vpop.f32.mrf.mxu0
        %v4663 = vadd.f32 0.0, %v4662
        %4664 = vmatmul.bf16.gmra.mxu0 %v3897
        %v4665 = vpop.f32.mrf.mxu0
        %v4666 = vadd.f32 0.0, %v4665
        %v4667 = vpop.f32.mrf.mxu0
        %v4668 = vadd.f32 0.0, %v4667
        %4669 = vmatmul.bf16.gmra.mxu0 %v3901
        %v4670 = vpop.f32.mrf.mxu0
        %v4671 = vadd.f32 0.0, %v4670
        %v4672 = vpop.f32.mrf.mxu0
        %v4673 = vadd.f32 0.0, %v4672
        %4674 = vmatmul.bf16.gmra.mxu0 %v3905
        %v4675 = vpop.f32.mrf.mxu0
        %v4676 = vadd.f32 0.0, %v4675
        %v4677 = vpop.f32.mrf.mxu0
        %v4678 = vadd.f32 0.0, %v4677
        %4679 = vmatmul.bf16.gmra.mxu0 %v3909
        %v4680 = vpop.f32.mrf.mxu0
        %v4681 = vadd.f32 0.0, %v4680
        %v4682 = vpop.f32.mrf.mxu0
        %v4683 = vadd.f32 0.0, %v4682
        %4684 = vmatmul.bf16.gmra.mxu0 %v3913
        %v4685 = vpop.f32.mrf.mxu0
        %v4686 = vadd.f32 0.0, %v4685
        %v4687 = vpop.f32.mrf.mxu0
        %v4688 = vadd.f32 0.0, %v4687
        %4689 = vmatmul.bf16.gmra.mxu0 %v3917
        %v4690 = vpop.f32.mrf.mxu0
        %v4691 = vadd.f32 0.0, %v4690
        %v4692 = vpop.f32.mrf.mxu0
        %v4693 = vadd.f32 0.0, %v4692
        %4694 = vmatmul.bf16.gmra.mxu0 %v3921
        %v4695 = vpop.f32.mrf.mxu0
        %v4696 = vadd.f32 0.0, %v4695
        %v4697 = vpop.f32.mrf.mxu0
        %v4698 = vadd.f32 0.0, %v4697
        %4699 = vmatmul.bf16.gmra.mxu0 %v3925
        %v4700 = vpop.f32.mrf.mxu0
        %v4701 = vadd.f32 0.0, %v4700
        %v4702 = vpop.f32.mrf.mxu0
        %v4703 = vadd.f32 0.0, %v4702
        %4704 = vmatmul.bf16.gmra.mxu0 %v3929
        %v4705 = vpop.f32.mrf.mxu0
        %v4706 = vadd.f32 0.0, %v4705
        %v4707 = vpop.f32.mrf.mxu0
        %v4708 = vadd.f32 0.0, %v4707
        %4709 = vdwg.mxu0
        %4710 = vmatpush.bf16.msra.mxu0 %v4332
        %4711 = vmatpush.bf16.msra.mxu0 %v4331
        %4712 = vmatpush.bf16.msra.mxu0 %v4330
        %4713 = vmatpush.bf16.msra.mxu0 %v4329
        %4714 = vmatpush.bf16.msra.mxu0 %v4328
        %4715 = vmatpush.bf16.msra.mxu0 %v4327
        %4716 = vmatpush.bf16.msra.mxu0 %v4326
        %4717 = vmatpush.bf16.msra.mxu0 %v4325
        %4718 = vmatmul.bf16.gmra.mxu0 %v3678
        %v4719 = vpop.f32.mrf.mxu0
        %v4720 = vadd.f32 %v4391, %v4719
        %v4721 = vpop.f32.mrf.mxu0
        %v4722 = vadd.f32 %v4393, %v4721
        %4723 = vmatmul.bf16.gmra.mxu0 %v3682
        %v4724 = vpop.f32.mrf.mxu0
        %v4725 = vadd.f32 %v4396, %v4724
        %v4726 = vpop.f32.mrf.mxu0
        %v4727 = vadd.f32 %v4398, %v4726
        %4728 = vmatmul.bf16.gmra.mxu0 %v3686
        %v4729 = vpop.f32.mrf.mxu0
        %v4730 = vadd.f32 %v4401, %v4729
        %v4731 = vpop.f32.mrf.mxu0
        %v4732 = vadd.f32 %v4403, %v4731
        %4733 = vmatmul.bf16.gmra.mxu0 %v3690
        %v4734 = vpop.f32.mrf.mxu0
        %v4735 = vadd.f32 %v4406, %v4734
        %v4736 = vpop.f32.mrf.mxu0
        %v4737 = vadd.f32 %v4408, %v4736
        %4738 = vmatmul.bf16.gmra.mxu0 %v3694
        %v4739 = vpop.f32.mrf.mxu0
        %v4740 = vadd.f32 %v4411, %v4739
        %v4741 = vpop.f32.mrf.mxu0
        %v4742 = vadd.f32 %v4413, %v4741
        %4743 = vmatmul.bf16.gmra.mxu0 %v3698
        %v4744 = vpop.f32.mrf.mxu0
        %v4745 = vadd.f32 %v4416, %v4744
        %v4746 = vpop.f32.mrf.mxu0
        %v4747 = vadd.f32 %v4418, %v4746
        %4748 = vmatmul.bf16.gmra.mxu0 %v3702
        %v4749 = vpop.f32.mrf.mxu0
        %v4750 = vadd.f32 %v4421, %v4749
        %v4751 = vpop.f32.mrf.mxu0
        %v4752 = vadd.f32 %v4423, %v4751
        %4753 = vmatmul.bf16.gmra.mxu0 %v3706
        %v4754 = vpop.f32.mrf.mxu0
        %v4755 = vadd.f32 %v4426, %v4754
        %v4756 = vpop.f32.mrf.mxu0
        %v4757 = vadd.f32 %v4428, %v4756
        %4758 = vmatmul.bf16.gmra.mxu0 %v3710
        %v4759 = vpop.f32.mrf.mxu0
        %v4760 = vadd.f32 %v4431, %v4759
        %v4761 = vpop.f32.mrf.mxu0
        %v4762 = vadd.f32 %v4433, %v4761
        %4763 = vmatmul.bf16.gmra.mxu0 %v3714
        %v4764 = vpop.f32.mrf.mxu0
        %v4765 = vadd.f32 %v4436, %v4764
        %v4766 = vpop.f32.mrf.mxu0
        %v4767 = vadd.f32 %v4438, %v4766
        %4768 = vmatmul.bf16.gmra.mxu0 %v3718
        %v4769 = vpop.f32.mrf.mxu0
        %v4770 = vadd.f32 %v4441, %v4769
        %v4771 = vpop.f32.mrf.mxu0
        %v4772 = vadd.f32 %v4443, %v4771
        %4773 = vmatmul.bf16.gmra.mxu0 %v3722
        %v4774 = vpop.f32.mrf.mxu0
        %v4775 = vadd.f32 %v4446, %v4774
        %v4776 = vpop.f32.mrf.mxu0
        %v4777 = vadd.f32 %v4448, %v4776
        %4778 = vmatmul.bf16.gmra.mxu0 %v3726
        %v4779 = vpop.f32.mrf.mxu0
        %v4780 = vadd.f32 %v4451, %v4779
        %v4781 = vpop.f32.mrf.mxu0
        %v4782 = vadd.f32 %v4453, %v4781
        %4783 = vmatmul.bf16.gmra.mxu0 %v3730
        %v4784 = vpop.f32.mrf.mxu0
        %v4785 = vadd.f32 %v4456, %v4784
        %v4786 = vpop.f32.mrf.mxu0
        %v4787 = vadd.f32 %v4458, %v4786
        %4788 = vmatmul.bf16.gmra.mxu0 %v3734
        %v4789 = vpop.f32.mrf.mxu0
        %v4790 = vadd.f32 %v4461, %v4789
        %v4791 = vpop.f32.mrf.mxu0
        %v4792 = vadd.f32 %v4463, %v4791
        %4793 = vmatmul.bf16.gmra.mxu0 %v3738
        %v4794 = vpop.f32.mrf.mxu0
        %v4795 = vadd.f32 %v4466, %v4794
        %v4796 = vpop.f32.mrf.mxu0
        %v4797 = vadd.f32 %v4468, %v4796
        %4798 = vmatmul.bf16.gmra.mxu0 %v3742
        %v4799 = vpop.f32.mrf.mxu0
        %v4800 = vadd.f32 %v4471, %v4799
        %v4801 = vpop.f32.mrf.mxu0
        %v4802 = vadd.f32 %v4473, %v4801
        %4803 = vmatmul.bf16.gmra.mxu0 %v3746
        %v4804 = vpop.f32.mrf.mxu0
        %v4805 = vadd.f32 %v4476, %v4804
        %v4806 = vpop.f32.mrf.mxu0
        %v4807 = vadd.f32 %v4478, %v4806
        %4808 = vmatmul.bf16.gmra.mxu0 %v3750
        %v4809 = vpop.f32.mrf.mxu0
        %v4810 = vadd.f32 %v4481, %v4809
        %v4811 = vpop.f32.mrf.mxu0
        %v4812 = vadd.f32 %v4483, %v4811
        %4813 = vmatmul.bf16.gmra.mxu0 %v3754
        %v4814 = vpop.f32.mrf.mxu0
        %v4815 = vadd.f32 %v4486, %v4814
        %v4816 = vpop.f32.mrf.mxu0
        %v4817 = vadd.f32 %v4488, %v4816
        %4818 = vmatmul.bf16.gmra.mxu0 %v3758
        %v4819 = vpop.f32.mrf.mxu0
        %v4820 = vadd.f32 %v4491, %v4819
        %v4821 = vpop.f32.mrf.mxu0
        %v4822 = vadd.f32 %v4493, %v4821
        %4823 = vmatmul.bf16.gmra.mxu0 %v3762
        %v4824 = vpop.f32.mrf.mxu0
        %v4825 = vadd.f32 %v4496, %v4824
        %v4826 = vpop.f32.mrf.mxu0
        %v4827 = vadd.f32 %v4498, %v4826
        %4828 = vmatmul.bf16.gmra.mxu0 %v3766
        %v4829 = vpop.f32.mrf.mxu0
        %v4830 = vadd.f32 %v4501, %v4829
        %v4831 = vpop.f32.mrf.mxu0
        %v4832 = vadd.f32 %v4503, %v4831
        %4833 = vmatmul.bf16.gmra.mxu0 %v3770
        %v4834 = vpop.f32.mrf.mxu0
        %v4835 = vadd.f32 %v4506, %v4834
        %v4836 = vpop.f32.mrf.mxu0
        %v4837 = vadd.f32 %v4508, %v4836
        %4838 = vmatmul.bf16.gmra.mxu0 %v3774
        %v4839 = vpop.f32.mrf.mxu0
        %v4840 = vadd.f32 %v4511, %v4839
        %v4841 = vpop.f32.mrf.mxu0
        %v4842 = vadd.f32 %v4513, %v4841
        %4843 = vmatmul.bf16.gmra.mxu0 %v3778
        %v4844 = vpop.f32.mrf.mxu0
        %v4845 = vadd.f32 %v4516, %v4844
        %v4846 = vpop.f32.mrf.mxu0
        %v4847 = vadd.f32 %v4518, %v4846
        %4848 = vmatmul.bf16.gmra.mxu0 %v3782
        %v4849 = vpop.f32.mrf.mxu0
        %v4850 = vadd.f32 %v4521, %v4849
        %v4851 = vpop.f32.mrf.mxu0
        %v4852 = vadd.f32 %v4523, %v4851
        %4853 = vmatmul.bf16.gmra.mxu0 %v3786
        %v4854 = vpop.f32.mrf.mxu0
        %v4855 = vadd.f32 %v4526, %v4854
        %v4856 = vpop.f32.mrf.mxu0
        %v4857 = vadd.f32 %v4528, %v4856
        %4858 = vmatmul.bf16.gmra.mxu0 %v3790
        %v4859 = vpop.f32.mrf.mxu0
        %v4860 = vadd.f32 %v4531, %v4859
        %v4861 = vpop.f32.mrf.mxu0
        %v4862 = vadd.f32 %v4533, %v4861
        %4863 = vmatmul.bf16.gmra.mxu0 %v3794
        %v4864 = vpop.f32.mrf.mxu0
        %v4865 = vadd.f32 %v4536, %v4864
        %v4866 = vpop.f32.mrf.mxu0
        %v4867 = vadd.f32 %v4538, %v4866
        %4868 = vmatmul.bf16.gmra.mxu0 %v3798
        %v4869 = vpop.f32.mrf.mxu0
        %v4870 = vadd.f32 %v4541, %v4869
        %v4871 = vpop.f32.mrf.mxu0
        %v4872 = vadd.f32 %v4543, %v4871
        %4873 = vmatmul.bf16.gmra.mxu0 %v3802
        %v4874 = vpop.f32.mrf.mxu0
        %v4875 = vadd.f32 %v4546, %v4874
        %v4876 = vpop.f32.mrf.mxu0
        %v4877 = vadd.f32 %v4548, %v4876
        %4878 = vmatmul.bf16.gmra.mxu0 %v3806
        %v4879 = vpop.f32.mrf.mxu0
        %v4880 = vadd.f32 %v4551, %v4879
        %v4881 = vpop.f32.mrf.mxu0
        %v4882 = vadd.f32 %v4553, %v4881
        %4883 = vmatmul.bf16.gmra.mxu0 %v3810
        %v4884 = vpop.f32.mrf.mxu0
        %v4885 = vadd.f32 %v4556, %v4884
        %v4886 = vpop.f32.mrf.mxu0
        %v4887 = vadd.f32 %v4558, %v4886
        %4888 = vmatmul.bf16.gmra.mxu0 %v3814
        %v4889 = vpop.f32.mrf.mxu0
        %v4890 = vadd.f32 %v4561, %v4889
        %v4891 = vpop.f32.mrf.mxu0
        %v4892 = vadd.f32 %v4563, %v4891
        %4893 = vmatmul.bf16.gmra.mxu0 %v3818
        %v4894 = vpop.f32.mrf.mxu0
        %v4895 = vadd.f32 %v4566, %v4894
        %v4896 = vpop.f32.mrf.mxu0
        %v4897 = vadd.f32 %v4568, %v4896
        %4898 = vmatmul.bf16.gmra.mxu0 %v3822
        %v4899 = vpop.f32.mrf.mxu0
        %v4900 = vadd.f32 %v4571, %v4899
        %v4901 = vpop.f32.mrf.mxu0
        %v4902 = vadd.f32 %v4573, %v4901
        %4903 = vmatmul.bf16.gmra.mxu0 %v3826
        %v4904 = vpop.f32.mrf.mxu0
        %v4905 = vadd.f32 %v4576, %v4904
        %v4906 = vpop.f32.mrf.mxu0
        %v4907 = vadd.f32 %v4578, %v4906
        %4908 = vmatmul.bf16.gmra.mxu0 %v3830
        %v4909 = vpop.f32.mrf.mxu0
        %v4910 = vadd.f32 %v4581, %v4909
        %v4911 = vpop.f32.mrf.mxu0
        %v4912 = vadd.f32 %v4583, %v4911
        %4913 = vmatmul.bf16.gmra.mxu0 %v3834
        %v4914 = vpop.f32.mrf.mxu0
        %v4915 = vadd.f32 %v4586, %v4914
        %v4916 = vpop.f32.mrf.mxu0
        %v4917 = vadd.f32 %v4588, %v4916
        %4918 = vmatmul.bf16.gmra.mxu0 %v3838
        %v4919 = vpop.f32.mrf.mxu0
        %v4920 = vadd.f32 %v4591, %v4919
        %v4921 = vpop.f32.mrf.mxu0
        %v4922 = vadd.f32 %v4593, %v4921
        %4923 = vmatmul.bf16.gmra.mxu0 %v3842
        %v4924 = vpop.f32.mrf.mxu0
        %v4925 = vadd.f32 %v4596, %v4924
        %v4926 = vpop.f32.mrf.mxu0
        %v4927 = vadd.f32 %v4598, %v4926
        %4928 = vmatmul.bf16.gmra.mxu0 %v3846
        %v4929 = vpop.f32.mrf.mxu0
        %v4930 = vadd.f32 %v4601, %v4929
        %v4931 = vpop.f32.mrf.mxu0
        %v4932 = vadd.f32 %v4603, %v4931
        %4933 = vmatmul.bf16.gmra.mxu0 %v3850
        %v4934 = vpop.f32.mrf.mxu0
        %v4935 = vadd.f32 %v4606, %v4934
        %v4936 = vpop.f32.mrf.mxu0
        %v4937 = vadd.f32 %v4608, %v4936
        %4938 = vmatmul.bf16.gmra.mxu0 %v3854
        %v4939 = vpop.f32.mrf.mxu0
        %v4940 = vadd.f32 %v4611, %v4939
        %v4941 = vpop.f32.mrf.mxu0
        %v4942 = vadd.f32 %v4613, %v4941
        %4943 = vmatmul.bf16.gmra.mxu0 %v3858
        %v4944 = vpop.f32.mrf.mxu0
        %v4945 = vadd.f32 %v4616, %v4944
        %v4946 = vpop.f32.mrf.mxu0
        %v4947 = vadd.f32 %v4618, %v4946
        %4948 = vmatmul.bf16.gmra.mxu0 %v3862
        %v4949 = vpop.f32.mrf.mxu0
        %v4950 = vadd.f32 %v4621, %v4949
        %v4951 = vpop.f32.mrf.mxu0
        %v4952 = vadd.f32 %v4623, %v4951
        %4953 = vmatmul.bf16.gmra.mxu0 %v3866
        %v4954 = vpop.f32.mrf.mxu0
        %v4955 = vadd.f32 %v4626, %v4954
        %v4956 = vpop.f32.mrf.mxu0
        %v4957 = vadd.f32 %v4628, %v4956
        %4958 = vmatmul.bf16.gmra.mxu0 %v3870
        %v4959 = vpop.f32.mrf.mxu0
        %v4960 = vadd.f32 %v4631, %v4959
        %v4961 = vpop.f32.mrf.mxu0
        %v4962 = vadd.f32 %v4633, %v4961
        %4963 = vmatmul.bf16.gmra.mxu0 %v3874
        %v4964 = vpop.f32.mrf.mxu0
        %v4965 = vadd.f32 %v4636, %v4964
        %v4966 = vpop.f32.mrf.mxu0
        %v4967 = vadd.f32 %v4638, %v4966
        %4968 = vmatmul.bf16.gmra.mxu0 %v3878
        %v4969 = vpop.f32.mrf.mxu0
        %v4970 = vadd.f32 %v4641, %v4969
        %v4971 = vpop.f32.mrf.mxu0
        %v4972 = vadd.f32 %v4643, %v4971
        %4973 = vmatmul.bf16.gmra.mxu0 %v3882
        %v4974 = vpop.f32.mrf.mxu0
        %v4975 = vadd.f32 %v4646, %v4974
        %v4976 = vpop.f32.mrf.mxu0
        %v4977 = vadd.f32 %v4648, %v4976
        %4978 = vmatmul.bf16.gmra.mxu0 %v3886
        %v4979 = vpop.f32.mrf.mxu0
        %v4980 = vadd.f32 %v4651, %v4979
        %v4981 = vpop.f32.mrf.mxu0
        %v4982 = vadd.f32 %v4653, %v4981
        %4983 = vmatmul.bf16.gmra.mxu0 %v3890
        %v4984 = vpop.f32.mrf.mxu0
        %v4985 = vadd.f32 %v4656, %v4984
        %v4986 = vpop.f32.mrf.mxu0
        %v4987 = vadd.f32 %v4658, %v4986
        %4988 = vmatmul.bf16.gmra.mxu0 %v3894
        %v4989 = vpop.f32.mrf.mxu0
        %v4990 = vadd.f32 %v4661, %v4989
        %v4991 = vpop.f32.mrf.mxu0
        %v4992 = vadd.f32 %v4663, %v4991
        %4993 = vmatmul.bf16.gmra.mxu0 %v3898
        %v4994 = vpop.f32.mrf.mxu0
        %v4995 = vadd.f32 %v4666, %v4994
        %v4996 = vpop.f32.mrf.mxu0
        %v4997 = vadd.f32 %v4668, %v4996
        %4998 = vmatmul.bf16.gmra.mxu0 %v3902
        %v4999 = vpop.f32.mrf.mxu0
        %v5000 = vadd.f32 %v4671, %v4999
        %v5001 = vpop.f32.mrf.mxu0
        %v5002 = vadd.f32 %v4673, %v5001
        %5003 = vmatmul.bf16.gmra.mxu0 %v3906
        %v5004 = vpop.f32.mrf.mxu0
        %v5005 = vadd.f32 %v4676, %v5004
        %v5006 = vpop.f32.mrf.mxu0
        %v5007 = vadd.f32 %v4678, %v5006
        %5008 = vmatmul.bf16.gmra.mxu0 %v3910
        %v5009 = vpop.f32.mrf.mxu0
        %v5010 = vadd.f32 %v4681, %v5009
        %v5011 = vpop.f32.mrf.mxu0
        %v5012 = vadd.f32 %v4683, %v5011
        %5013 = vmatmul.bf16.gmra.mxu0 %v3914
        %v5014 = vpop.f32.mrf.mxu0
        %v5015 = vadd.f32 %v4686, %v5014
        %v5016 = vpop.f32.mrf.mxu0
        %v5017 = vadd.f32 %v4688, %v5016
        %5018 = vmatmul.bf16.gmra.mxu0 %v3918
        %v5019 = vpop.f32.mrf.mxu0
        %v5020 = vadd.f32 %v4691, %v5019
        %v5021 = vpop.f32.mrf.mxu0
        %v5022 = vadd.f32 %v4693, %v5021
        %5023 = vmatmul.bf16.gmra.mxu0 %v3922
        %v5024 = vpop.f32.mrf.mxu0
        %v5025 = vadd.f32 %v4696, %v5024
        %v5026 = vpop.f32.mrf.mxu0
        %v5027 = vadd.f32 %v4698, %v5026
        %5028 = vmatmul.bf16.gmra.mxu0 %v3926
        %v5029 = vpop.f32.mrf.mxu0
        %v5030 = vadd.f32 %v4701, %v5029
        %v5031 = vpop.f32.mrf.mxu0
        %v5032 = vadd.f32 %v4703, %v5031
        %5033 = vmatmul.bf16.gmra.mxu0 %v3930
        %v5034 = vpop.f32.mrf.mxu0
        %v5035 = vadd.f32 %v4706, %v5034
        %v5036 = vpop.f32.mrf.mxu0
        %v5037 = vadd.f32 %v4708, %v5036
        %5038 = vdwg.mxu0
        %5039 = vmatpush.bf16.msra.mxu0 %v4340
        %5040 = vmatpush.bf16.msra.mxu0 %v4339
        %5041 = vmatpush.bf16.msra.mxu0 %v4338
        %5042 = vmatpush.bf16.msra.mxu0 %v4337
        %5043 = vmatpush.bf16.msra.mxu0 %v4336
        %5044 = vmatpush.bf16.msra.mxu0 %v4335
        %5045 = vmatpush.bf16.msra.mxu0 %v4334
        %5046 = vmatpush.bf16.msra.mxu0 %v4333
        %5047 = vmatmul.bf16.gmra.mxu0 %v3679
        %v5048 = vpop.f32.mrf.mxu0
        %v5049 = vadd.f32 %v4720, %v5048
        %v5050 = vpop.f32.mrf.mxu0
        %v5051 = vadd.f32 %v4722, %v5050
        %5052 = vmatmul.bf16.gmra.mxu0 %v3683
        %v5053 = vpop.f32.mrf.mxu0
        %v5054 = vadd.f32 %v4725, %v5053
        %v5055 = vpop.f32.mrf.mxu0
        %v5056 = vadd.f32 %v4727, %v5055
        %5057 = vmatmul.bf16.gmra.mxu0 %v3687
        %v5058 = vpop.f32.mrf.mxu0
        %v5059 = vadd.f32 %v4730, %v5058
        %v5060 = vpop.f32.mrf.mxu0
        %v5061 = vadd.f32 %v4732, %v5060
        %5062 = vmatmul.bf16.gmra.mxu0 %v3691
        %v5063 = vpop.f32.mrf.mxu0
        %v5064 = vadd.f32 %v4735, %v5063
        %v5065 = vpop.f32.mrf.mxu0
        %v5066 = vadd.f32 %v4737, %v5065
        %5067 = vmatmul.bf16.gmra.mxu0 %v3695
        %v5068 = vpop.f32.mrf.mxu0
        %v5069 = vadd.f32 %v4740, %v5068
        %v5070 = vpop.f32.mrf.mxu0
        %v5071 = vadd.f32 %v4742, %v5070
        %5072 = vmatmul.bf16.gmra.mxu0 %v3699
        %v5073 = vpop.f32.mrf.mxu0
        %v5074 = vadd.f32 %v4745, %v5073
        %v5075 = vpop.f32.mrf.mxu0
        %v5076 = vadd.f32 %v4747, %v5075
        %5077 = vmatmul.bf16.gmra.mxu0 %v3703
        %v5078 = vpop.f32.mrf.mxu0
        %v5079 = vadd.f32 %v4750, %v5078
        %v5080 = vpop.f32.mrf.mxu0
        %v5081 = vadd.f32 %v4752, %v5080
        %5082 = vmatmul.bf16.gmra.mxu0 %v3707
        %v5083 = vpop.f32.mrf.mxu0
        %v5084 = vadd.f32 %v4755, %v5083
        %v5085 = vpop.f32.mrf.mxu0
        %v5086 = vadd.f32 %v4757, %v5085
        %5087 = vmatmul.bf16.gmra.mxu0 %v3711
        %v5088 = vpop.f32.mrf.mxu0
        %v5089 = vadd.f32 %v4760, %v5088
        %v5090 = vpop.f32.mrf.mxu0
        %v5091 = vadd.f32 %v4762, %v5090
        %5092 = vmatmul.bf16.gmra.mxu0 %v3715
        %v5093 = vpop.f32.mrf.mxu0
        %v5094 = vadd.f32 %v4765, %v5093
        %v5095 = vpop.f32.mrf.mxu0
        %v5096 = vadd.f32 %v4767, %v5095
        %5097 = vmatmul.bf16.gmra.mxu0 %v3719
        %v5098 = vpop.f32.mrf.mxu0
        %v5099 = vadd.f32 %v4770, %v5098
        %v5100 = vpop.f32.mrf.mxu0
        %v5101 = vadd.f32 %v4772, %v5100
        %5102 = vmatmul.bf16.gmra.mxu0 %v3723
        %v5103 = vpop.f32.mrf.mxu0
        %v5104 = vadd.f32 %v4775, %v5103
        %v5105 = vpop.f32.mrf.mxu0
        %v5106 = vadd.f32 %v4777, %v5105
        %5107 = vmatmul.bf16.gmra.mxu0 %v3727
        %v5108 = vpop.f32.mrf.mxu0
        %v5109 = vadd.f32 %v4780, %v5108
        %v5110 = vpop.f32.mrf.mxu0
        %v5111 = vadd.f32 %v4782, %v5110
        %5112 = vmatmul.bf16.gmra.mxu0 %v3731
        %v5113 = vpop.f32.mrf.mxu0
        %v5114 = vadd.f32 %v4785, %v5113
        %v5115 = vpop.f32.mrf.mxu0
        %v5116 = vadd.f32 %v4787, %v5115
        %5117 = vmatmul.bf16.gmra.mxu0 %v3735
        %v5118 = vpop.f32.mrf.mxu0
        %v5119 = vadd.f32 %v4790, %v5118
        %v5120 = vpop.f32.mrf.mxu0
        %v5121 = vadd.f32 %v4792, %v5120
        %5122 = vmatmul.bf16.gmra.mxu0 %v3739
        %v5123 = vpop.f32.mrf.mxu0
        %v5124 = vadd.f32 %v4795, %v5123
        %v5125 = vpop.f32.mrf.mxu0
        %v5126 = vadd.f32 %v4797, %v5125
        %5127 = vmatmul.bf16.gmra.mxu0 %v3743
        %v5128 = vpop.f32.mrf.mxu0
        %v5129 = vadd.f32 %v4800, %v5128
        %v5130 = vpop.f32.mrf.mxu0
        %v5131 = vadd.f32 %v4802, %v5130
        %5132 = vmatmul.bf16.gmra.mxu0 %v3747
        %v5133 = vpop.f32.mrf.mxu0
        %v5134 = vadd.f32 %v4805, %v5133
        %v5135 = vpop.f32.mrf.mxu0
        %v5136 = vadd.f32 %v4807, %v5135
        %5137 = vmatmul.bf16.gmra.mxu0 %v3751
        %v5138 = vpop.f32.mrf.mxu0
        %v5139 = vadd.f32 %v4810, %v5138
        %v5140 = vpop.f32.mrf.mxu0
        %v5141 = vadd.f32 %v4812, %v5140
        %5142 = vmatmul.bf16.gmra.mxu0 %v3755
        %v5143 = vpop.f32.mrf.mxu0
        %v5144 = vadd.f32 %v4815, %v5143
        %v5145 = vpop.f32.mrf.mxu0
        %v5146 = vadd.f32 %v4817, %v5145
        %5147 = vmatmul.bf16.gmra.mxu0 %v3759
        %v5148 = vpop.f32.mrf.mxu0
        %v5149 = vadd.f32 %v4820, %v5148
        %v5150 = vpop.f32.mrf.mxu0
        %v5151 = vadd.f32 %v4822, %v5150
        %5152 = vmatmul.bf16.gmra.mxu0 %v3763
        %v5153 = vpop.f32.mrf.mxu0
        %v5154 = vadd.f32 %v4825, %v5153
        %v5155 = vpop.f32.mrf.mxu0
        %v5156 = vadd.f32 %v4827, %v5155
        %5157 = vmatmul.bf16.gmra.mxu0 %v3767
        %v5158 = vpop.f32.mrf.mxu0
        %v5159 = vadd.f32 %v4830, %v5158
        %v5160 = vpop.f32.mrf.mxu0
        %v5161 = vadd.f32 %v4832, %v5160
        %5162 = vmatmul.bf16.gmra.mxu0 %v3771
        %v5163 = vpop.f32.mrf.mxu0
        %v5164 = vadd.f32 %v4835, %v5163
        %v5165 = vpop.f32.mrf.mxu0
        %v5166 = vadd.f32 %v4837, %v5165
        %5167 = vmatmul.bf16.gmra.mxu0 %v3775
        %v5168 = vpop.f32.mrf.mxu0
        %v5169 = vadd.f32 %v4840, %v5168
        %v5170 = vpop.f32.mrf.mxu0
        %v5171 = vadd.f32 %v4842, %v5170
        %5172 = vmatmul.bf16.gmra.mxu0 %v3779
        %v5173 = vpop.f32.mrf.mxu0
        %v5174 = vadd.f32 %v4845, %v5173
        %v5175 = vpop.f32.mrf.mxu0
        %v5176 = vadd.f32 %v4847, %v5175
        %5177 = vmatmul.bf16.gmra.mxu0 %v3783
        %v5178 = vpop.f32.mrf.mxu0
        %v5179 = vadd.f32 %v4850, %v5178
        %v5180 = vpop.f32.mrf.mxu0
        %v5181 = vadd.f32 %v4852, %v5180
        %5182 = vmatmul.bf16.gmra.mxu0 %v3787
        %v5183 = vpop.f32.mrf.mxu0
        %v5184 = vadd.f32 %v4855, %v5183
        %v5185 = vpop.f32.mrf.mxu0
        %v5186 = vadd.f32 %v4857, %v5185
        %5187 = vmatmul.bf16.gmra.mxu0 %v3791
        %v5188 = vpop.f32.mrf.mxu0
        %v5189 = vadd.f32 %v4860, %v5188
        %v5190 = vpop.f32.mrf.mxu0
        %v5191 = vadd.f32 %v4862, %v5190
        %5192 = vmatmul.bf16.gmra.mxu0 %v3795
        %v5193 = vpop.f32.mrf.mxu0
        %v5194 = vadd.f32 %v4865, %v5193
        %v5195 = vpop.f32.mrf.mxu0
        %v5196 = vadd.f32 %v4867, %v5195
        %5197 = vmatmul.bf16.gmra.mxu0 %v3799
        %v5198 = vpop.f32.mrf.mxu0
        %v5199 = vadd.f32 %v4870, %v5198
        %v5200 = vpop.f32.mrf.mxu0
        %v5201 = vadd.f32 %v4872, %v5200
        %5202 = vmatmul.bf16.gmra.mxu0 %v3803
        %v5203 = vpop.f32.mrf.mxu0
        %v5204 = vadd.f32 %v4875, %v5203
        %v5205 = vpop.f32.mrf.mxu0
        %v5206 = vadd.f32 %v4877, %v5205
        %5207 = vmatmul.bf16.gmra.mxu0 %v3807
        %v5208 = vpop.f32.mrf.mxu0
        %v5209 = vadd.f32 %v4880, %v5208
        %v5210 = vpop.f32.mrf.mxu0
        %v5211 = vadd.f32 %v4882, %v5210
        %5212 = vmatmul.bf16.gmra.mxu0 %v3811
        %v5213 = vpop.f32.mrf.mxu0
        %v5214 = vadd.f32 %v4885, %v5213
        %v5215 = vpop.f32.mrf.mxu0
        %v5216 = vadd.f32 %v4887, %v5215
        %5217 = vmatmul.bf16.gmra.mxu0 %v3815
        %v5218 = vpop.f32.mrf.mxu0
        %v5219 = vadd.f32 %v4890, %v5218
        %v5220 = vpop.f32.mrf.mxu0
        %v5221 = vadd.f32 %v4892, %v5220
        %5222 = vmatmul.bf16.gmra.mxu0 %v3819
        %v5223 = vpop.f32.mrf.mxu0
        %v5224 = vadd.f32 %v4895, %v5223
        %v5225 = vpop.f32.mrf.mxu0
        %v5226 = vadd.f32 %v4897, %v5225
        %5227 = vmatmul.bf16.gmra.mxu0 %v3823
        %v5228 = vpop.f32.mrf.mxu0
        %v5229 = vadd.f32 %v4900, %v5228
        %v5230 = vpop.f32.mrf.mxu0
        %v5231 = vadd.f32 %v4902, %v5230
        %5232 = vmatmul.bf16.gmra.mxu0 %v3827
        %v5233 = vpop.f32.mrf.mxu0
        %v5234 = vadd.f32 %v4905, %v5233
        %v5235 = vpop.f32.mrf.mxu0
        %v5236 = vadd.f32 %v4907, %v5235
        %5237 = vmatmul.bf16.gmra.mxu0 %v3831
        %v5238 = vpop.f32.mrf.mxu0
        %v5239 = vadd.f32 %v4910, %v5238
        %v5240 = vpop.f32.mrf.mxu0
        %v5241 = vadd.f32 %v4912, %v5240
        %5242 = vmatmul.bf16.gmra.mxu0 %v3835
        %v5243 = vpop.f32.mrf.mxu0
        %v5244 = vadd.f32 %v4915, %v5243
        %v5245 = vpop.f32.mrf.mxu0
        %v5246 = vadd.f32 %v4917, %v5245
        %5247 = vmatmul.bf16.gmra.mxu0 %v3839
        %v5248 = vpop.f32.mrf.mxu0
        %v5249 = vadd.f32 %v4920, %v5248
        %v5250 = vpop.f32.mrf.mxu0
        %v5251 = vadd.f32 %v4922, %v5250
        %5252 = vmatmul.bf16.gmra.mxu0 %v3843
        %v5253 = vpop.f32.mrf.mxu0
        %v5254 = vadd.f32 %v4925, %v5253
        %v5255 = vpop.f32.mrf.mxu0
        %v5256 = vadd.f32 %v4927, %v5255
        %5257 = vmatmul.bf16.gmra.mxu0 %v3847
        %v5258 = vpop.f32.mrf.mxu0
        %v5259 = vadd.f32 %v4930, %v5258
        %v5260 = vpop.f32.mrf.mxu0
        %v5261 = vadd.f32 %v4932, %v5260
        %5262 = vmatmul.bf16.gmra.mxu0 %v3851
        %v5263 = vpop.f32.mrf.mxu0
        %v5264 = vadd.f32 %v4935, %v5263
        %v5265 = vpop.f32.mrf.mxu0
        %v5266 = vadd.f32 %v4937, %v5265
        %5267 = vmatmul.bf16.gmra.mxu0 %v3855
        %v5268 = vpop.f32.mrf.mxu0
        %v5269 = vadd.f32 %v4940, %v5268
        %v5270 = vpop.f32.mrf.mxu0
        %v5271 = vadd.f32 %v4942, %v5270
        %5272 = vmatmul.bf16.gmra.mxu0 %v3859
        %v5273 = vpop.f32.mrf.mxu0
        %v5274 = vadd.f32 %v4945, %v5273
        %v5275 = vpop.f32.mrf.mxu0
        %v5276 = vadd.f32 %v4947, %v5275
        %5277 = vmatmul.bf16.gmra.mxu0 %v3863
        %v5278 = vpop.f32.mrf.mxu0
        %v5279 = vadd.f32 %v4950, %v5278
        %v5280 = vpop.f32.mrf.mxu0
        %v5281 = vadd.f32 %v4952, %v5280
        %5282 = vmatmul.bf16.gmra.mxu0 %v3867
        %v5283 = vpop.f32.mrf.mxu0
        %v5284 = vadd.f32 %v4955, %v5283
        %v5285 = vpop.f32.mrf.mxu0
        %v5286 = vadd.f32 %v4957, %v5285
        %5287 = vmatmul.bf16.gmra.mxu0 %v3871
        %v5288 = vpop.f32.mrf.mxu0
        %v5289 = vadd.f32 %v4960, %v5288
        %v5290 = vpop.f32.mrf.mxu0
        %v5291 = vadd.f32 %v4962, %v5290
        %5292 = vmatmul.bf16.gmra.mxu0 %v3875
        %v5293 = vpop.f32.mrf.mxu0
        %v5294 = vadd.f32 %v4965, %v5293
        %v5295 = vpop.f32.mrf.mxu0
        %v5296 = vadd.f32 %v4967, %v5295
        %5297 = vmatmul.bf16.gmra.mxu0 %v3879
        %v5298 = vpop.f32.mrf.mxu0
        %v5299 = vadd.f32 %v4970, %v5298
        %v5300 = vpop.f32.mrf.mxu0
        %v5301 = vadd.f32 %v4972, %v5300
        %5302 = vmatmul.bf16.gmra.mxu0 %v3883
        %v5303 = vpop.f32.mrf.mxu0
        %v5304 = vadd.f32 %v4975, %v5303
        %v5305 = vpop.f32.mrf.mxu0
        %v5306 = vadd.f32 %v4977, %v5305
        %5307 = vmatmul.bf16.gmra.mxu0 %v3887
        %v5308 = vpop.f32.mrf.mxu0
        %v5309 = vadd.f32 %v4980, %v5308
        %v5310 = vpop.f32.mrf.mxu0
        %v5311 = vadd.f32 %v4982, %v5310
        %5312 = vmatmul.bf16.gmra.mxu0 %v3891
        %v5313 = vpop.f32.mrf.mxu0
        %v5314 = vadd.f32 %v4985, %v5313
        %v5315 = vpop.f32.mrf.mxu0
        %v5316 = vadd.f32 %v4987, %v5315
        %5317 = vmatmul.bf16.gmra.mxu0 %v3895
        %v5318 = vpop.f32.mrf.mxu0
        %v5319 = vadd.f32 %v4990, %v5318
        %v5320 = vpop.f32.mrf.mxu0
        %v5321 = vadd.f32 %v4992, %v5320
        %5322 = vmatmul.bf16.gmra.mxu0 %v3899
        %v5323 = vpop.f32.mrf.mxu0
        %v5324 = vadd.f32 %v4995, %v5323
        %v5325 = vpop.f32.mrf.mxu0
        %v5326 = vadd.f32 %v4997, %v5325
        %5327 = vmatmul.bf16.gmra.mxu0 %v3903
        %v5328 = vpop.f32.mrf.mxu0
        %v5329 = vadd.f32 %v5000, %v5328
        %v5330 = vpop.f32.mrf.mxu0
        %v5331 = vadd.f32 %v5002, %v5330
        %5332 = vmatmul.bf16.gmra.mxu0 %v3907
        %v5333 = vpop.f32.mrf.mxu0
        %v5334 = vadd.f32 %v5005, %v5333
        %v5335 = vpop.f32.mrf.mxu0
        %v5336 = vadd.f32 %v5007, %v5335
        %5337 = vmatmul.bf16.gmra.mxu0 %v3911
        %v5338 = vpop.f32.mrf.mxu0
        %v5339 = vadd.f32 %v5010, %v5338
        %v5340 = vpop.f32.mrf.mxu0
        %v5341 = vadd.f32 %v5012, %v5340
        %5342 = vmatmul.bf16.gmra.mxu0 %v3915
        %v5343 = vpop.f32.mrf.mxu0
        %v5344 = vadd.f32 %v5015, %v5343
        %v5345 = vpop.f32.mrf.mxu0
        %v5346 = vadd.f32 %v5017, %v5345
        %5347 = vmatmul.bf16.gmra.mxu0 %v3919
        %v5348 = vpop.f32.mrf.mxu0
        %v5349 = vadd.f32 %v5020, %v5348
        %v5350 = vpop.f32.mrf.mxu0
        %v5351 = vadd.f32 %v5022, %v5350
        %5352 = vmatmul.bf16.gmra.mxu0 %v3923
        %v5353 = vpop.f32.mrf.mxu0
        %v5354 = vadd.f32 %v5025, %v5353
        %v5355 = vpop.f32.mrf.mxu0
        %v5356 = vadd.f32 %v5027, %v5355
        %5357 = vmatmul.bf16.gmra.mxu0 %v3927
        %v5358 = vpop.f32.mrf.mxu0
        %v5359 = vadd.f32 %v5030, %v5358
        %v5360 = vpop.f32.mrf.mxu0
        %v5361 = vadd.f32 %v5032, %v5360
        %5362 = vmatmul.bf16.gmra.mxu0 %v3931
        %v5363 = vpop.f32.mrf.mxu0
        %v5364 = vadd.f32 %v5035, %v5363
        %v5365 = vpop.f32.mrf.mxu0
        %v5366 = vadd.f32 %v5037, %v5365
        %5367 = vdwg.mxu0
        %5368 = vmatpush.bf16.msra.mxu0 %v4348
        %5369 = vmatpush.bf16.msra.mxu0 %v4347
        %5370 = vmatpush.bf16.msra.mxu0 %v4346
        %5371 = vmatpush.bf16.msra.mxu0 %v4345
        %5372 = vmatpush.bf16.msra.mxu0 %v4344
        %5373 = vmatpush.bf16.msra.mxu0 %v4343
        %5374 = vmatpush.bf16.msra.mxu0 %v4342
        %5375 = vmatpush.bf16.msra.mxu0 %v4341
        %5376 = vmatmul.bf16.gmra.mxu0 %v3680
        %v5377 = vpop.f32.mrf.mxu0
        %v5378 = vadd.f32 %v5049, %v5377
        %v5379 = vpop.f32.mrf.mxu0
        %v5380 = vadd.f32 %v5051, %v5379
        %5381 = vmatmul.bf16.gmra.mxu0 %v3684
        %v5382 = vpop.f32.mrf.mxu0
        %v5383 = vadd.f32 %v5054, %v5382
        %v5384 = vpop.f32.mrf.mxu0
        %v5385 = vadd.f32 %v5056, %v5384
        %5386 = vmatmul.bf16.gmra.mxu0 %v3688
        %v5387 = vpop.f32.mrf.mxu0
        %v5388 = vadd.f32 %v5059, %v5387
        %v5389 = vpop.f32.mrf.mxu0
        %v5390 = vadd.f32 %v5061, %v5389
        %5391 = vmatmul.bf16.gmra.mxu0 %v3692
        %v5392 = vpop.f32.mrf.mxu0
        %v5393 = vadd.f32 %v5064, %v5392
        %v5394 = vpop.f32.mrf.mxu0
        %v5395 = vadd.f32 %v5066, %v5394
        %5396 = vmatmul.bf16.gmra.mxu0 %v3696
        %v5397 = vpop.f32.mrf.mxu0
        %v5398 = vadd.f32 %v5069, %v5397
        %v5399 = vpop.f32.mrf.mxu0
        %v5400 = vadd.f32 %v5071, %v5399
        %5401 = vmatmul.bf16.gmra.mxu0 %v3700
        %v5402 = vpop.f32.mrf.mxu0
        %v5403 = vadd.f32 %v5074, %v5402
        %v5404 = vpop.f32.mrf.mxu0
        %v5405 = vadd.f32 %v5076, %v5404
        %5406 = vmatmul.bf16.gmra.mxu0 %v3704
        %v5407 = vpop.f32.mrf.mxu0
        %v5408 = vadd.f32 %v5079, %v5407
        %v5409 = vpop.f32.mrf.mxu0
        %v5410 = vadd.f32 %v5081, %v5409
        %5411 = vmatmul.bf16.gmra.mxu0 %v3708
        %v5412 = vpop.f32.mrf.mxu0
        %v5413 = vadd.f32 %v5084, %v5412
        %v5414 = vpop.f32.mrf.mxu0
        %v5415 = vadd.f32 %v5086, %v5414
        %5416 = vmatmul.bf16.gmra.mxu0 %v3712
        %v5417 = vpop.f32.mrf.mxu0
        %v5418 = vadd.f32 %v5089, %v5417
        %v5419 = vpop.f32.mrf.mxu0
        %v5420 = vadd.f32 %v5091, %v5419
        %5421 = vmatmul.bf16.gmra.mxu0 %v3716
        %v5422 = vpop.f32.mrf.mxu0
        %v5423 = vadd.f32 %v5094, %v5422
        %v5424 = vpop.f32.mrf.mxu0
        %v5425 = vadd.f32 %v5096, %v5424
        %5426 = vmatmul.bf16.gmra.mxu0 %v3720
        %v5427 = vpop.f32.mrf.mxu0
        %v5428 = vadd.f32 %v5099, %v5427
        %v5429 = vpop.f32.mrf.mxu0
        %v5430 = vadd.f32 %v5101, %v5429
        %5431 = vmatmul.bf16.gmra.mxu0 %v3724
        %v5432 = vpop.f32.mrf.mxu0
        %v5433 = vadd.f32 %v5104, %v5432
        %v5434 = vpop.f32.mrf.mxu0
        %v5435 = vadd.f32 %v5106, %v5434
        %5436 = vmatmul.bf16.gmra.mxu0 %v3728
        %v5437 = vpop.f32.mrf.mxu0
        %v5438 = vadd.f32 %v5109, %v5437
        %v5439 = vpop.f32.mrf.mxu0
        %v5440 = vadd.f32 %v5111, %v5439
        %5441 = vmatmul.bf16.gmra.mxu0 %v3732
        %v5442 = vpop.f32.mrf.mxu0
        %v5443 = vadd.f32 %v5114, %v5442
        %v5444 = vpop.f32.mrf.mxu0
        %v5445 = vadd.f32 %v5116, %v5444
        %5446 = vmatmul.bf16.gmra.mxu0 %v3736
        %v5447 = vpop.f32.mrf.mxu0
        %v5448 = vadd.f32 %v5119, %v5447
        %v5449 = vpop.f32.mrf.mxu0
        %v5450 = vadd.f32 %v5121, %v5449
        %5451 = vmatmul.bf16.gmra.mxu0 %v3740
        %v5452 = vpop.f32.mrf.mxu0
        %v5453 = vadd.f32 %v5124, %v5452
        %v5454 = vpop.f32.mrf.mxu0
        %v5455 = vadd.f32 %v5126, %v5454
        %5456 = vmatmul.bf16.gmra.mxu0 %v3744
        %v5457 = vpop.f32.mrf.mxu0
        %v5458 = vadd.f32 %v5129, %v5457
        %v5459 = vpop.f32.mrf.mxu0
        %v5460 = vadd.f32 %v5131, %v5459
        %5461 = vmatmul.bf16.gmra.mxu0 %v3748
        %v5462 = vpop.f32.mrf.mxu0
        %v5463 = vadd.f32 %v5134, %v5462
        %v5464 = vpop.f32.mrf.mxu0
        %v5465 = vadd.f32 %v5136, %v5464
        %5466 = vmatmul.bf16.gmra.mxu0 %v3752
        %v5467 = vpop.f32.mrf.mxu0
        %v5468 = vadd.f32 %v5139, %v5467
        %v5469 = vpop.f32.mrf.mxu0
        %v5470 = vadd.f32 %v5141, %v5469
        %5471 = vmatmul.bf16.gmra.mxu0 %v3756
        %v5472 = vpop.f32.mrf.mxu0
        %v5473 = vadd.f32 %v5144, %v5472
        %v5474 = vpop.f32.mrf.mxu0
        %v5475 = vadd.f32 %v5146, %v5474
        %5476 = vmatmul.bf16.gmra.mxu0 %v3760
        %v5477 = vpop.f32.mrf.mxu0
        %v5478 = vadd.f32 %v5149, %v5477
        %v5479 = vpop.f32.mrf.mxu0
        %v5480 = vadd.f32 %v5151, %v5479
        %5481 = vmatmul.bf16.gmra.mxu0 %v3764
        %v5482 = vpop.f32.mrf.mxu0
        %v5483 = vadd.f32 %v5154, %v5482
        %v5484 = vpop.f32.mrf.mxu0
        %v5485 = vadd.f32 %v5156, %v5484
        %5486 = vmatmul.bf16.gmra.mxu0 %v3768
        %v5487 = vpop.f32.mrf.mxu0
        %v5488 = vadd.f32 %v5159, %v5487
        %v5489 = vpop.f32.mrf.mxu0
        %v5490 = vadd.f32 %v5161, %v5489
        %5491 = vmatmul.bf16.gmra.mxu0 %v3772
        %v5492 = vpop.f32.mrf.mxu0
        %v5493 = vadd.f32 %v5164, %v5492
        %v5494 = vpop.f32.mrf.mxu0
        %v5495 = vadd.f32 %v5166, %v5494
        %5496 = vmatmul.bf16.gmra.mxu0 %v3776
        %v5497 = vpop.f32.mrf.mxu0
        %v5498 = vadd.f32 %v5169, %v5497
        %v5499 = vpop.f32.mrf.mxu0
        %v5500 = vadd.f32 %v5171, %v5499
        %5501 = vmatmul.bf16.gmra.mxu0 %v3780
        %v5502 = vpop.f32.mrf.mxu0
        %v5503 = vadd.f32 %v5174, %v5502
        %v5504 = vpop.f32.mrf.mxu0
        %v5505 = vadd.f32 %v5176, %v5504
        %5506 = vmatmul.bf16.gmra.mxu0 %v3784
        %v5507 = vpop.f32.mrf.mxu0
        %v5508 = vadd.f32 %v5179, %v5507
        %v5509 = vpop.f32.mrf.mxu0
        %v5510 = vadd.f32 %v5181, %v5509
        %5511 = vmatmul.bf16.gmra.mxu0 %v3788
        %v5512 = vpop.f32.mrf.mxu0
        %v5513 = vadd.f32 %v5184, %v5512
        %v5514 = vpop.f32.mrf.mxu0
        %v5515 = vadd.f32 %v5186, %v5514
        %5516 = vmatmul.bf16.gmra.mxu0 %v3792
        %v5517 = vpop.f32.mrf.mxu0
        %v5518 = vadd.f32 %v5189, %v5517
        %v5519 = vpop.f32.mrf.mxu0
        %v5520 = vadd.f32 %v5191, %v5519
        %5521 = vmatmul.bf16.gmra.mxu0 %v3796
        %v5522 = vpop.f32.mrf.mxu0
        %v5523 = vadd.f32 %v5194, %v5522
        %v5524 = vpop.f32.mrf.mxu0
        %v5525 = vadd.f32 %v5196, %v5524
        %5526 = vmatmul.bf16.gmra.mxu0 %v3800
        %v5527 = vpop.f32.mrf.mxu0
        %v5528 = vadd.f32 %v5199, %v5527
        %v5529 = vpop.f32.mrf.mxu0
        %v5530 = vadd.f32 %v5201, %v5529
        %5531 = vmatmul.bf16.gmra.mxu0 %v3804
        %v5532 = vpop.f32.mrf.mxu0
        %v5533 = vadd.f32 %v5204, %v5532
        %v5534 = vpop.f32.mrf.mxu0
        %v5535 = vadd.f32 %v5206, %v5534
        %5536 = vmatmul.bf16.gmra.mxu0 %v3808
        %v5537 = vpop.f32.mrf.mxu0
        %v5538 = vadd.f32 %v5209, %v5537
        %v5539 = vpop.f32.mrf.mxu0
        %v5540 = vadd.f32 %v5211, %v5539
        %5541 = vmatmul.bf16.gmra.mxu0 %v3812
        %v5542 = vpop.f32.mrf.mxu0
        %v5543 = vadd.f32 %v5214, %v5542
        %v5544 = vpop.f32.mrf.mxu0
        %v5545 = vadd.f32 %v5216, %v5544
        %5546 = vmatmul.bf16.gmra.mxu0 %v3816
        %v5547 = vpop.f32.mrf.mxu0
        %v5548 = vadd.f32 %v5219, %v5547
        %v5549 = vpop.f32.mrf.mxu0
        %v5550 = vadd.f32 %v5221, %v5549
        %5551 = vmatmul.bf16.gmra.mxu0 %v3820
        %v5552 = vpop.f32.mrf.mxu0
        %v5553 = vadd.f32 %v5224, %v5552
        %v5554 = vpop.f32.mrf.mxu0
        %v5555 = vadd.f32 %v5226, %v5554
        %5556 = vmatmul.bf16.gmra.mxu0 %v3824
        %v5557 = vpop.f32.mrf.mxu0
        %v5558 = vadd.f32 %v5229, %v5557
        %v5559 = vpop.f32.mrf.mxu0
        %v5560 = vadd.f32 %v5231, %v5559
        %5561 = vmatmul.bf16.gmra.mxu0 %v3828
        %v5562 = vpop.f32.mrf.mxu0
        %v5563 = vadd.f32 %v5234, %v5562
        %v5564 = vpop.f32.mrf.mxu0
        %v5565 = vadd.f32 %v5236, %v5564
        %5566 = vmatmul.bf16.gmra.mxu0 %v3832
        %v5567 = vpop.f32.mrf.mxu0
        %v5568 = vadd.f32 %v5239, %v5567
        %v5569 = vpop.f32.mrf.mxu0
        %v5570 = vadd.f32 %v5241, %v5569
        %5571 = vmatmul.bf16.gmra.mxu0 %v3836
        %v5572 = vpop.f32.mrf.mxu0
        %v5573 = vadd.f32 %v5244, %v5572
        %v5574 = vpop.f32.mrf.mxu0
        %v5575 = vadd.f32 %v5246, %v5574
        %5576 = vmatmul.bf16.gmra.mxu0 %v3840
        %v5577 = vpop.f32.mrf.mxu0
        %v5578 = vadd.f32 %v5249, %v5577
        %v5579 = vpop.f32.mrf.mxu0
        %v5580 = vadd.f32 %v5251, %v5579
        %5581 = vmatmul.bf16.gmra.mxu0 %v3844
        %v5582 = vpop.f32.mrf.mxu0
        %v5583 = vadd.f32 %v5254, %v5582
        %v5584 = vpop.f32.mrf.mxu0
        %v5585 = vadd.f32 %v5256, %v5584
        %5586 = vmatmul.bf16.gmra.mxu0 %v3848
        %v5587 = vpop.f32.mrf.mxu0
        %v5588 = vadd.f32 %v5259, %v5587
        %v5589 = vpop.f32.mrf.mxu0
        %v5590 = vadd.f32 %v5261, %v5589
        %5591 = vmatmul.bf16.gmra.mxu0 %v3852
        %v5592 = vpop.f32.mrf.mxu0
        %v5593 = vadd.f32 %v5264, %v5592
        %v5594 = vpop.f32.mrf.mxu0
        %v5595 = vadd.f32 %v5266, %v5594
        %5596 = vmatmul.bf16.gmra.mxu0 %v3856
        %v5597 = vpop.f32.mrf.mxu0
        %v5598 = vadd.f32 %v5269, %v5597
        %v5599 = vpop.f32.mrf.mxu0
        %v5600 = vadd.f32 %v5271, %v5599
        %5601 = vmatmul.bf16.gmra.mxu0 %v3860
        %v5602 = vpop.f32.mrf.mxu0
        %v5603 = vadd.f32 %v5274, %v5602
        %v5604 = vpop.f32.mrf.mxu0
        %v5605 = vadd.f32 %v5276, %v5604
        %5606 = vmatmul.bf16.gmra.mxu0 %v3864
        %v5607 = vpop.f32.mrf.mxu0
        %v5608 = vadd.f32 %v5279, %v5607
        %v5609 = vpop.f32.mrf.mxu0
        %v5610 = vadd.f32 %v5281, %v5609
        %5611 = vmatmul.bf16.gmra.mxu0 %v3868
        %v5612 = vpop.f32.mrf.mxu0
        %v5613 = vadd.f32 %v5284, %v5612
        %v5614 = vpop.f32.mrf.mxu0
        %v5615 = vadd.f32 %v5286, %v5614
        %5616 = vmatmul.bf16.gmra.mxu0 %v3872
        %v5617 = vpop.f32.mrf.mxu0
        %v5618 = vadd.f32 %v5289, %v5617
        %v5619 = vpop.f32.mrf.mxu0
        %v5620 = vadd.f32 %v5291, %v5619
        %5621 = vmatmul.bf16.gmra.mxu0 %v3876
        %v5622 = vpop.f32.mrf.mxu0
        %v5623 = vadd.f32 %v5294, %v5622
        %v5624 = vpop.f32.mrf.mxu0
        %v5625 = vadd.f32 %v5296, %v5624
        %5626 = vmatmul.bf16.gmra.mxu0 %v3880
        %v5627 = vpop.f32.mrf.mxu0
        %v5628 = vadd.f32 %v5299, %v5627
        %v5629 = vpop.f32.mrf.mxu0
        %v5630 = vadd.f32 %v5301, %v5629
        %5631 = vmatmul.bf16.gmra.mxu0 %v3884
        %v5632 = vpop.f32.mrf.mxu0
        %v5633 = vadd.f32 %v5304, %v5632
        %v5634 = vpop.f32.mrf.mxu0
        %v5635 = vadd.f32 %v5306, %v5634
        %5636 = vmatmul.bf16.gmra.mxu0 %v3888
        %v5637 = vpop.f32.mrf.mxu0
        %v5638 = vadd.f32 %v5309, %v5637
        %v5639 = vpop.f32.mrf.mxu0
        %v5640 = vadd.f32 %v5311, %v5639
        %5641 = vmatmul.bf16.gmra.mxu0 %v3892
        %v5642 = vpop.f32.mrf.mxu0
        %v5643 = vadd.f32 %v5314, %v5642
        %v5644 = vpop.f32.mrf.mxu0
        %v5645 = vadd.f32 %v5316, %v5644
        %5646 = vmatmul.bf16.gmra.mxu0 %v3896
        %v5647 = vpop.f32.mrf.mxu0
        %v5648 = vadd.f32 %v5319, %v5647
        %v5649 = vpop.f32.mrf.mxu0
        %v5650 = vadd.f32 %v5321, %v5649
        %5651 = vmatmul.bf16.gmra.mxu0 %v3900
        %v5652 = vpop.f32.mrf.mxu0
        %v5653 = vadd.f32 %v5324, %v5652
        %v5654 = vpop.f32.mrf.mxu0
        %v5655 = vadd.f32 %v5326, %v5654
        %5656 = vmatmul.bf16.gmra.mxu0 %v3904
        %v5657 = vpop.f32.mrf.mxu0
        %v5658 = vadd.f32 %v5329, %v5657
        %v5659 = vpop.f32.mrf.mxu0
        %v5660 = vadd.f32 %v5331, %v5659
        %5661 = vmatmul.bf16.gmra.mxu0 %v3908
        %v5662 = vpop.f32.mrf.mxu0
        %v5663 = vadd.f32 %v5334, %v5662
        %v5664 = vpop.f32.mrf.mxu0
        %v5665 = vadd.f32 %v5336, %v5664
        %5666 = vmatmul.bf16.gmra.mxu0 %v3912
        %v5667 = vpop.f32.mrf.mxu0
        %v5668 = vadd.f32 %v5339, %v5667
        %v5669 = vpop.f32.mrf.mxu0
        %v5670 = vadd.f32 %v5341, %v5669
        %5671 = vmatmul.bf16.gmra.mxu0 %v3916
        %v5672 = vpop.f32.mrf.mxu0
        %v5673 = vadd.f32 %v5344, %v5672
        %v5674 = vpop.f32.mrf.mxu0
        %v5675 = vadd.f32 %v5346, %v5674
        %5676 = vmatmul.bf16.gmra.mxu0 %v3920
        %v5677 = vpop.f32.mrf.mxu0
        %v5678 = vadd.f32 %v5349, %v5677
        %v5679 = vpop.f32.mrf.mxu0
        %v5680 = vadd.f32 %v5351, %v5679
        %5681 = vmatmul.bf16.gmra.mxu0 %v3924
        %v5682 = vpop.f32.mrf.mxu0
        %v5683 = vadd.f32 %v5354, %v5682
        %v5684 = vpop.f32.mrf.mxu0
        %v5685 = vadd.f32 %v5356, %v5684
        %5686 = vmatmul.bf16.gmra.mxu0 %v3928
        %v5687 = vpop.f32.mrf.mxu0
        %v5688 = vadd.f32 %v5359, %v5687
        %v5689 = vpop.f32.mrf.mxu0
        %v5690 = vadd.f32 %v5361, %v5689
        %5691 = vmatmul.bf16.gmra.mxu0 %v3932
        %v5692 = vpop.f32.mrf.mxu0
        %v5693 = vadd.f32 %v5364, %v5692
        %v5694 = vpop.f32.mrf.mxu0
        %v5695 = vadd.f32 %v5366, %v5694
        %5696 = vdwg.mxu0
        %v5697 = vld [vmem:[#allocation2] sm:$0xff]
        %v5698 = vadd.f32 %v5378, %v5380
        %v5699 = vadd.f32 %v5698, %v5383
        %v5700 = vadd.f32 %v5699, %v5385
        %v5701 = vadd.f32 %v5700, %v5388
        %v5702 = vadd.f32 %v5701, %v5390
        %v5703 = vadd.f32 %v5702, %v5393
        %v5704 = vadd.f32 %v5703, %v5395
        %v5705 = vadd.f32 %v5704, %v5398
        %v5706 = vadd.f32 %v5705, %v5400
        %v5707 = vadd.f32 %v5706, %v5403
        %v5708 = vadd.f32 %v5707, %v5405
        %v5709 = vadd.f32 %v5708, %v5408
        %v5710 = vadd.f32 %v5709, %v5410
        %v5711 = vadd.f32 %v5710, %v5413
        %v5712 = vadd.f32 %v5711, %v5415
        %v5713 = vrot.slane %v5712, 4
        %v5714 = vadd.f32 %v5712, %v5713
        %v5715 = vrot.slane %v5714, 2
        %v5716 = vadd.f32 %v5714, %v5715
        %v5717 = vrot.slane %v5716, 1
        %v5718 = vadd.f32 %v5716, %v5717
        %v5719 = vadd.f32 %v5418, %v5420
        %v5720 = vadd.f32 %v5719, %v5423
        %v5721 = vadd.f32 %v5720, %v5425
        %v5722 = vadd.f32 %v5721, %v5428
        %v5723 = vadd.f32 %v5722, %v5430
        %v5724 = vadd.f32 %v5723, %v5433
        %v5725 = vadd.f32 %v5724, %v5435
        %v5726 = vadd.f32 %v5725, %v5438
        %v5727 = vadd.f32 %v5726, %v5440
        %v5728 = vadd.f32 %v5727, %v5443
        %v5729 = vadd.f32 %v5728, %v5445
        %v5730 = vadd.f32 %v5729, %v5448
        %v5731 = vadd.f32 %v5730, %v5450
        %v5732 = vadd.f32 %v5731, %v5453
        %v5733 = vadd.f32 %v5732, %v5455
        %v5734 = vrot.slane %v5733, 4
        %v5735 = vadd.f32 %v5733, %v5734
        %v5736 = vrot.slane %v5735, 2
        %v5737 = vadd.f32 %v5735, %v5736
        %v5738 = vrot.slane %v5737, 1
        %v5739 = vadd.f32 %v5737, %v5738
        %v5740 = vadd.f32 %v5458, %v5460
        %v5741 = vadd.f32 %v5740, %v5463
        %v5742 = vadd.f32 %v5741, %v5465
        %v5743 = vadd.f32 %v5742, %v5468
        %v5744 = vadd.f32 %v5743, %v5470
        %v5745 = vadd.f32 %v5744, %v5473
        %v5746 = vadd.f32 %v5745, %v5475
        %v5747 = vadd.f32 %v5746, %v5478
        %v5748 = vadd.f32 %v5747, %v5480
        %v5749 = vadd.f32 %v5748, %v5483
        %v5750 = vadd.f32 %v5749, %v5485
        %v5751 = vadd.f32 %v5750, %v5488
        %v5752 = vadd.f32 %v5751, %v5490
        %v5753 = vadd.f32 %v5752, %v5493
        %v5754 = vadd.f32 %v5753, %v5495
        %v5755 = vrot.slane %v5754, 4
        %v5756 = vadd.f32 %v5754, %v5755
        %v5757 = vrot.slane %v5756, 2
        %v5758 = vadd.f32 %v5756, %v5757
        %v5759 = vrot.slane %v5758, 1
        %v5760 = vadd.f32 %v5758, %v5759
        %v5761 = vadd.f32 %v5498, %v5500
        %v5762 = vadd.f32 %v5761, %v5503
        %v5763 = vadd.f32 %v5762, %v5505
        %v5764 = vadd.f32 %v5763, %v5508
        %v5765 = vadd.f32 %v5764, %v5510
        %v5766 = vadd.f32 %v5765, %v5513
        %v5767 = vadd.f32 %v5766, %v5515
        %v5768 = vadd.f32 %v5767, %v5518
        %v5769 = vadd.f32 %v5768, %v5520
        %v5770 = vadd.f32 %v5769, %v5523
        %v5771 = vadd.f32 %v5770, %v5525
        %v5772 = vadd.f32 %v5771, %v5528
        %v5773 = vadd.f32 %v5772, %v5530
        %v5774 = vadd.f32 %v5773, %v5533
        %v5775 = vadd.f32 %v5774, %v5535
        %v5776 = vrot.slane %v5775, 4
        %v5777 = vadd.f32 %v5775, %v5776
        %v5778 = vrot.slane %v5777, 2
        %v5779 = vadd.f32 %v5777, %v5778
        %v5780 = vrot.slane %v5779, 1
        %v5781 = vadd.f32 %v5779, %v5780
        %v5782 = vadd.f32 %v5538, %v5540
        %v5783 = vadd.f32 %v5782, %v5543
        %v5784 = vadd.f32 %v5783, %v5545
        %v5785 = vadd.f32 %v5784, %v5548
        %v5786 = vadd.f32 %v5785, %v5550
        %v5787 = vadd.f32 %v5786, %v5553
        %v5788 = vadd.f32 %v5787, %v5555
        %v5789 = vadd.f32 %v5788, %v5558
        %v5790 = vadd.f32 %v5789, %v5560
        %v5791 = vadd.f32 %v5790, %v5563
        %v5792 = vadd.f32 %v5791, %v5565
        %v5793 = vadd.f32 %v5792, %v5568
        %v5794 = vadd.f32 %v5793, %v5570
        %v5795 = vadd.f32 %v5794, %v5573
        %v5796 = vadd.f32 %v5795, %v5575
        %v5797 = vrot.slane %v5796, 4
        %v5798 = vadd.f32 %v5796, %v5797
        %v5799 = vrot.slane %v5798, 2
        %v5800 = vadd.f32 %v5798, %v5799
        %v5801 = vrot.slane %v5800, 1
        %v5802 = vadd.f32 %v5800, %v5801
        %v5803 = vadd.f32 %v5578, %v5580
        %v5804 = vadd.f32 %v5803, %v5583
        %v5805 = vadd.f32 %v5804, %v5585
        %v5806 = vadd.f32 %v5805, %v5588
        %v5807 = vadd.f32 %v5806, %v5590
        %v5808 = vadd.f32 %v5807, %v5593
        %v5809 = vadd.f32 %v5808, %v5595
        %v5810 = vadd.f32 %v5809, %v5598
        %v5811 = vadd.f32 %v5810, %v5600
        %v5812 = vadd.f32 %v5811, %v5603
        %v5813 = vadd.f32 %v5812, %v5605
        %v5814 = vadd.f32 %v5813, %v5608
        %v5815 = vadd.f32 %v5814, %v5610
        %v5816 = vadd.f32 %v5815, %v5613
        %v5817 = vadd.f32 %v5816, %v5615
        %v5818 = vrot.slane %v5817, 4
        %v5819 = vadd.f32 %v5817, %v5818
        %v5820 = vrot.slane %v5819, 2
        %v5821 = vadd.f32 %v5819, %v5820
        %v5822 = vrot.slane %v5821, 1
        %v5823 = vadd.f32 %v5821, %v5822
        %v5824 = vadd.f32 %v5618, %v5620
        %v5825 = vadd.f32 %v5824, %v5623
        %v5826 = vadd.f32 %v5825, %v5625
        %v5827 = vadd.f32 %v5826, %v5628
        %v5828 = vadd.f32 %v5827, %v5630
        %v5829 = vadd.f32 %v5828, %v5633
        %v5830 = vadd.f32 %v5829, %v5635
        %v5831 = vadd.f32 %v5830, %v5638
        %v5832 = vadd.f32 %v5831, %v5640
        %v5833 = vadd.f32 %v5832, %v5643
        %v5834 = vadd.f32 %v5833, %v5645
        %v5835 = vadd.f32 %v5834, %v5648
        %v5836 = vadd.f32 %v5835, %v5650
        %v5837 = vadd.f32 %v5836, %v5653
        %v5838 = vadd.f32 %v5837, %v5655
        %v5839 = vrot.slane %v5838, 4
        %v5840 = vadd.f32 %v5838, %v5839
        %v5841 = vrot.slane %v5840, 2
        %v5842 = vadd.f32 %v5840, %v5841
        %v5843 = vrot.slane %v5842, 1
        %v5844 = vadd.f32 %v5842, %v5843
        %v5845 = vadd.f32 %v5658, %v5660
        %v5846 = vadd.f32 %v5845, %v5663
        %v5847 = vadd.f32 %v5846, %v5665
        %v5848 = vadd.f32 %v5847, %v5668
        %v5849 = vadd.f32 %v5848, %v5670
        %v5850 = vadd.f32 %v5849, %v5673
        %v5851 = vadd.f32 %v5850, %v5675
        %v5852 = vadd.f32 %v5851, %v5678
        %v5853 = vadd.f32 %v5852, %v5680
        %v5854 = vadd.f32 %v5853, %v5683
        %v5855 = vadd.f32 %v5854, %v5685
        %v5856 = vadd.f32 %v5855, %v5688
        %v5857 = vadd.f32 %v5856, %v5690
        %v5858 = vadd.f32 %v5857, %v5693
        %v5859 = vadd.f32 %v5858, %v5695
        %v5860 = vrot.slane %v5859, 4
        %v5861 = vadd.f32 %v5859, %v5860
        %v5862 = vrot.slane %v5861, 2
        %v5863 = vadd.f32 %v5861, %v5862
        %v5864 = vrot.slane %v5863, 1
        %v5865 = vadd.f32 %v5863, %v5864
        %vm5874 = vcmask 1041409
        %v5875 = vsel %vm5874, %v5739, %v5718
        %vm5876 = vcmask 1042434
        %v5877 = vsel %vm5876, %v5760, %v5875
        %vm5878 = vcmask 1043459
        %v5879 = vsel %vm5878, %v5781, %v5877
        %vm5880 = vcmask 1044484
        %v5881 = vsel %vm5880, %v5802, %v5879
        %vm5882 = vcmask 1045509
        %v5883 = vsel %vm5882, %v5823, %v5881
        %vm5884 = vcmask 1046534
        %v5885 = vsel %vm5884, %v5844, %v5883
        %vm5886 = vcmask 1047559
        %v5887 = vsel %vm5886, %v5865, %v5885
        %v5889 = vadd.f32 %v5697, %v5887
        %5890 = vst [vmem:[#allocation2] sm:$0xff] %v5889
        %vm5891 = vcmp.ne.s32.totalorder %v271, 1
        %v5892 = vsel %vm5891, 1, 0
        %v5893 = vcvt.s32.f32 %v5892
        %v5894 = vld [vmem:[#allocation3] sm:$0xff]
        %5895 = vadd.xlane.f32.xlu0 %v5893
        %v5896 = vpop.xlane.xlu0 %5895
        %v5897 = vadd.f32 %v5894, %v5896
        %vm5898 = vcmask 7168
        %5899 = vst.msk [vmem:[#allocation3] sm:$0xff] %vm5898, %v5897
        %p5900 = scmp.eq.s32.totalorder %s27, 1
        // Predicated region
        $region53: #{tpu_custom_call.1} parent=35 // pred_check
          %p5901 = pneg %p5900
        $region54: #{tpu_custom_call.1} parent=35 // pred_check_branch
          %5903 = sbr.rel (%p5901) target = $region56
        $region55: #{tpu_custom_call.1} parent=35 // pred_region
          %v5904 = vld [vmem:[#allocation3] sm:$0xff]
          %v5905 = vmax.f32 %v5904, 1.0
          %v5906 = vld [vmem:[#allocation2] sm:$0xff]
          %5908 = vset.pattern.permute.xlu0 0
          %5909 = vperm.xlu0 %5908, %v5905
          %v5910 = vpop.permute.xlu0 %5909
          %v5912 = vrcp.pop %v5910
          %v5913 = vmul.f32 %v5910, %v5912
          %v5914 = vsub.f32 1.0, %v5913
          %v5915 = vmul.f32 %v5912, %v5914
          %v5916 = vadd.f32 %v5912, %v5915
          %vm5917 = vweird.f32 %v5910
          %vm5918 = vweird.f32 %v5912
          %vm5919 = vmor %vm5917, %vm5918
          %v5920 = vsel %vm5919, %v5912, %v5916
          %v5921 = vand.u32 2147483647, %v5910
          %vm5922 = vcmp.eq.f32.partialorder %v5921, 8.507059e+37
          %v5923 = vand.u32 %v5910, 2147483648
          %v5924 = vor.u32 1.1754944e-38, %v5923
          %v5925 = vsel %vm5922, %v5924, %v5920
          %v5926 = vmul.f32 %v5906, %v5925
          %v5927 = vld [vmem:[#allocation9] sm:$0xff]
          %v5928 = vld [vmem:[#allocation9 + $0x8] sm:$0xff]
          %v5929 = vld [vmem:[#allocation9 + $0x10] sm:$0xff]
          %v5930 = vld [vmem:[#allocation9 + $0x18] sm:$0xff]
          %v5931 = vld [vmem:[#allocation9 + $0x20] sm:$0xff]
          %v5932 = vld [vmem:[#allocation9 + $0x28] sm:$0xff]
          %v5933 = vld [vmem:[#allocation9 + $0x30] sm:$0xff]
          %v5934 = vld [vmem:[#allocation9 + $0x38] sm:$0xff]
          %v5935 = vld [vmem:[#allocation9 + $0x40] sm:$0xff]
          %v5936 = vld [vmem:[#allocation9 + $0x48] sm:$0xff]
          %v5937 = vld [vmem:[#allocation9 + $0x50] sm:$0xff]
          %v5938 = vld [vmem:[#allocation9 + $0x58] sm:$0xff]
          %v5939 = vld [vmem:[#allocation9 + $0x60] sm:$0xff]
          %v5940 = vld [vmem:[#allocation9 + $0x68] sm:$0xff]
          %v5941 = vld [vmem:[#allocation9 + $0x70] sm:$0xff]
          %v5942 = vld [vmem:[#allocation9 + $0x78] sm:$0xff]
          %v5943 = vld [vmem:[%s3] sm:$0x1]
          %v5945 = vperm.slane %v5943, 0
          %5947 = vmatpush.msra.mxu0 %v5942
          %5948 = vmatpush.msra.mxu0 %v5941
          %5949 = vmatpush.msra.mxu0 %v5940
          %5950 = vmatpush.msra.mxu0 %v5939
          %5951 = vmatpush.msra.mxu0 %v5938
          %5952 = vmatpush.msra.mxu0 %v5937
          %5953 = vmatpush.msra.mxu0 %v5936
          %5954 = vmatpush.msra.mxu0 %v5935
          %5955 = vmatpush.msra.mxu0 %v5934
          %5956 = vmatpush.msra.mxu0 %v5933
          %5957 = vmatpush.msra.mxu0 %v5932
          %5958 = vmatpush.msra.mxu0 %v5931
          %5959 = vmatpush.msra.mxu0 %v5930
          %5960 = vmatpush.msra.mxu0 %v5929
          %5961 = vmatpush.msra.mxu0 %v5928
          %5962 = vmatpush.msra.mxu0 %v5927
          %5963 = vmatmul.f32.gmra.mxu0 %v5926
          %v5964 = vpop.f32.mrf.mxu0
          %v5965 = vadd.f32 %v5945, %v5964
          %5966 = vdwg.mxu0
          %v5967 = vtanh.pop %v5965
          %5968 = vst [vmem:[%s263] sm:$0xff] %v5967
        $region56: #{tpu_custom_call.1} parent=35 // pred_fallthru
          _
        %s5969 = sand.u32 %s133, 1
        %s5970 = scalar_lea.sflag [#allocation6], %s5969
        %s5971 = sand.u32 %s133, 1
        %s5972 = smul.addr %s5971, 8
        %s5973 = scalar_lea.vmem [#allocation10], %s5972
        // Predicated region
        $region57: #{tpu_custom_call.1} parent=35 // pred_check
          %p5974 = pneg %p143
        $region58: #{tpu_custom_call.1} parent=35 // pred_check_branch
          %5976 = sbr.rel (%p5974) target = $region60
        $region59: #{tpu_custom_call.1} parent=35 // pred_region
          %5978 = vsyncadd %s5970, 0
          %s5979 = smul.addr %s26, 8
          %s5980 = scalar_lea.hbm %s4, %s5979
          %s5982 = sshll.u32 %s5973, 4
          %s5983 = int_to_ptr.vmem [resolvable:$true] %s5982
          %s5984 = sshll.u32 %s5980, 4
          %s5985 = int_to_ptr.hbm [resolvable:$true] %s5984
          %5987 = dma.vmem_to_hbm [thread:$0]  %s5983, 128, %s5985, %s5970
        $region60: #{tpu_custom_call.1} parent=35 // pred_fallthru
          _
      $region36: #{tpu_custom_call.1} parent=5 // pred_fallthru
        _
      %p5988 = scmp.le.s32.totalorder 2, %s17
      // Predicated region
      $region61: #{tpu_custom_call.1} parent=5 // pred_check
        %p5989 = pneg %p5988
      $region62: #{tpu_custom_call.1} parent=5 // pred_check_branch
        %5991 = sbr.rel (%p5989) target = $region64
      $region63: #{tpu_custom_call.1} parent=5 // pred_region
        %s5992 = ssub.s32 %s17, 2
        // Predicated region
        $region65: #{tpu_custom_call.1} parent=63 // pred_check
          %p5993 = pneg %p149
        $region66: #{tpu_custom_call.1} parent=63 // pred_check_branch
          %5995 = sbr.rel (%p5993) target = $region68
        $region67: #{tpu_custom_call.1} parent=63 // pred_region
          %s5996 = sand.u32 %s134, 1
          %s5997 = scalar_lea.sflag [#allocation6], %s5996
          %s5998 = sand.u32 %s134, 1
          %s5999 = smul.addr %s5998, 8
          %s6000 = scalar_lea.vmem [#allocation10], %s5999
          %6002 = dma.done %s5997, 128
        $region68: #{tpu_custom_call.1} parent=63 // pred_fallthru
          _
      $region64: #{tpu_custom_call.1} parent=5 // pred_fallthru
        _
    $region6: #{tpu_custom_call.1} parent=1 // loop_footer
      %s21 = sadd.s32 1, %s17
    $region7: #{tpu_custom_call.1} parent=1 // loop_footer_branch
      %16 = sbr.rel target = $region3
    $region8: #{tpu_custom_call.1} parent=1 // loop_exit
      _
    %6003 = vsyncpa [#allocation5], 1
    %s6004 = scalar_lea.sflag [#allocation5], 1
    %6005 = vsyncpa %s6004, 1
    %6006 = vsyncpa [#allocation8], 1
    %6007 = vsyncpa [#allocation6], 1
    %s6008 = scalar_lea.sflag [#allocation6], 1
    %6009 = vsyncpa %s6008, 1

</llo_original>
